<compile_context>
chip_gen: v7x
topology: tpu7x:2x2x1
jax: 0.10.0
libtpu: 0.0.40
codegen_flags: <defaults>
</compile_context>

<pallas_src>
import math

import jax
import jax.numpy as jnp
from jax.experimental import pallas as pl
from jax.experimental.pallas import tpu as pltpu

# ---- model hyper-parameters (from the PyTorch script) ----
EMBED_SIZE = 50
HIDDEN_SIZE = 100
NUM_HEADS = 2
NUM_LAYERS = 2
HEAD_DIM = EMBED_SIZE // NUM_HEADS          # 25
LN_EPS = 1e-5
VOCAB_SIZE = 96                             # synthetic vocab
MAX_LEN = 5000

# ---- TPU-friendly padded sizes (lane dims multiples of 128) ----
E_PAD = 128
H_PAD = 128
V_PAD = 128
HEAD_PAD = 64
assert NUM_HEADS * HEAD_PAD == E_PAD
assert NUM_HEADS * HEAD_DIM == EMBED_SIZE


# ============================================================== fused kernel
def _layer_norm_padded(x, gamma, beta):
    # Padded feature columns of x are exactly zero and gamma/beta are zero
    # there, so lane-dim sums cover exactly the EMBED_SIZE real features and
    # the padded output columns come out as 0 (gamma, beta are 0 there).
    inv_n = 1.0 / EMBED_SIZE
    mean = jnp.sum(x, axis=-1, keepdims=True) * inv_n
    var = jnp.sum(x * x, axis=-1, keepdims=True) * inv_n - mean * mean
    return (x - mean) * jax.lax.rsqrt(var + LN_EPS) * gamma + beta


def fused_transformer_kernel(x_ref, wqkv_ref, bqkv_ref, wo_ref, bo_ref,
                             ln1g_ref, ln1b_ref, w1_ref, b1_ref,
                             w2_ref, b2_ref, ln2g_ref, ln2b_ref,
                             fcw_ref, fcb_ref, o_ref):
    """Whole TransformerEncoder (post-norm, ReLU FFN) + final Linear for one
    batch element. Weights (packed/padded, scales pre-folded) live in VMEM."""
    x = x_ref[0].astype(jnp.float32)                                  # (S, E_PAD)

    for l in range(NUM_LAYERS):                                       # static unroll
        # -- fused QKV projection: one (S,128) x (128,384) matmul --
        # 1/sqrt(head_dim) is pre-folded into the Q columns of wqkv/bqkv.
        qkv = jnp.dot(x, wqkv_ref[l],
                      preferred_element_type=jnp.float32) + bqkv_ref[l]
        q = qkv[:, :E_PAD]
        k = qkv[:, E_PAD:2 * E_PAD]
        v = qkv[:, 2 * E_PAD:]

        # -- 2 heads on 64-aligned slices; fold out-projection per head so no
        #    concat of narrow slices is needed --
        attn = None
        for h in range(NUM_HEADS):
            lo = h * HEAD_PAD
            qh = q[:, lo:lo + HEAD_PAD]
            kh = k[:, lo:lo + HEAD_PAD]
            vh = v[:, lo:lo + HEAD_PAD]
            s = jnp.einsum('qd,kd->qk', qh, kh,
                           preferred_element_type=jnp.float32)        # (S, S)
            s = s - jnp.max(s, axis=-1, keepdims=True)
            p = jnp.exp(s)
            p = p * pl.reciprocal(jnp.sum(p, axis=-1, keepdims=True), approx=True)
            ctx_h = jnp.dot(p, vh, preferred_element_type=jnp.float32)   # (S, 64)
            part = jnp.dot(ctx_h, wo_ref[l, lo:lo + HEAD_PAD, :],
                           preferred_element_type=jnp.float32)           # (S, E_PAD)
            attn = part if attn is None else attn + part
        attn = attn + bo_ref[l]

        # -- residual + LayerNorm1 --
        x = _layer_norm_padded(x + attn, ln1g_ref[l], ln1b_ref[l])

        # -- feed-forward: linear1 -> ReLU -> linear2 --
        h1 = jnp.dot(x, w1_ref[l], preferred_element_type=jnp.float32) + b1_ref[l]
        h1 = jnp.maximum(h1, 0.0)
        h2 = jnp.dot(h1, w2_ref[l], preferred_element_type=jnp.float32) + b2_ref[l]

        # -- residual + LayerNorm2 --
        x = _layer_norm_padded(x + h2, ln2g_ref[l], ln2b_ref[l])

    # -- final Linear(embed_size, vocab_size), lane-dense (128-wide) output --
    logits = jnp.dot(x, fcw_ref[...],
                     preferred_element_type=jnp.float32) + fcb_ref[...]
    o_ref[0] = logits.astype(o_ref.dtype)


# ============================================================== params / packing
def positional_encoding(max_len, embed_size):
    position = jnp.arange(max_len, dtype=jnp.float32)[:, None]
    div_term = jnp.exp(jnp.arange(0, embed_size, 2, dtype=jnp.float32)
                       * (-math.log(10000.0) / embed_size))
    ang = position * div_term
    enc = jnp.zeros((max_len, embed_size), jnp.float32)
    enc = enc.at[:, 0::2].set(jnp.sin(ang))
    enc = enc.at[:, 1::2].set(jnp.cos(ang))
    return enc[None]                                                   # (1, max_len, E)


def init_torch_params(key):
    """PyTorch-layout parameters (Linear weights are (out, in))."""
    def normal(k, shape, scale=0.02):
        return (scale * jax.random.normal(k, shape)).astype(jnp.float32)

    keys = iter(jax.random.split(key, 96))
    p = {
        'embedding': normal(next(keys), (VOCAB_SIZE, EMBED_SIZE)),
        'pe': positional_encoding(MAX_LEN, EMBED_SIZE),
        'fc_w': normal(next(keys), (VOCAB_SIZE, EMBED_SIZE)),
        'fc_b': normal(next(keys), (VOCAB_SIZE,)),
        'layers': [],
    }
    for _ in range(NUM_LAYERS):
        p['layers'].append({
            'wq': normal(next(keys), (EMBED_SIZE, EMBED_SIZE)),
            'wk': normal(next(keys), (EMBED_SIZE, EMBED_SIZE)),
            'wv': normal(next(keys), (EMBED_SIZE, EMBED_SIZE)),
            'bq': normal(next(keys), (EMBED_SIZE,)),
            'bk': normal(next(keys), (EMBED_SIZE,)),
            'bv': normal(next(keys), (EMBED_SIZE,)),
            'wo': normal(next(keys), (EMBED_SIZE, EMBED_SIZE)),
            'bo': normal(next(keys), (EMBED_SIZE,)),
            'ln1g': 1.0 + normal(next(keys), (EMBED_SIZE,)),
            'ln1b': normal(next(keys), (EMBED_SIZE,)),
            'w1': normal(next(keys), (HIDDEN_SIZE, EMBED_SIZE)),
            'b1': normal(next(keys), (HIDDEN_SIZE,)),
            'w2': normal(next(keys), (EMBED_SIZE, HIDDEN_SIZE)),
            'b2': normal(next(keys), (EMBED_SIZE,)),
            'ln2g': 1.0 + normal(next(keys), (EMBED_SIZE,)),
            'ln2b': normal(next(keys), (EMBED_SIZE,)),
        })
    return p


def _pad2(w, rows, cols):
    out = jnp.zeros((rows, cols), jnp.float32)
    return out.at[:w.shape[0], :w.shape[1]].set(w)


def _pack_linear(w, b, in_pad, out_pad):
    # torch Linear y = x @ W.T + b  ->  kernel y = x_pad @ Wp + bp
    return _pad2(w.T, in_pad, out_pad), _pad2(b[None, :], 1, out_pad)


def _pack_qkv_proj(w, b, scale=1.0):
    # output features rearranged so head h lives at columns [h*64, h*64+25);
    # optional pre-folded scale (used for Q: 1/sqrt(head_dim)).
    wt = w.T * scale
    bs = b * scale
    wp = jnp.zeros((E_PAD, E_PAD), jnp.float32)
    bp = jnp.zeros((1, E_PAD), jnp.float32)
    for h in range(NUM_HEADS):
        s = slice(h * HEAD_DIM, (h + 1) * HEAD_DIM)
        d = slice(h * HEAD_PAD, h * HEAD_PAD + HEAD_DIM)
        wp = wp.at[:EMBED_SIZE, d].set(wt[:, s])
        bp = bp.at[0, d].set(bs[s])
    return wp, bp


def _pack_out_proj(w, b):
    # input rows rearranged to the head-padded context layout
    wp = jnp.zeros((E_PAD, E_PAD), jnp.float32)
    for h in range(NUM_HEADS):
        s = slice(h * HEAD_DIM, (h + 1) * HEAD_DIM)
        d = slice(h * HEAD_PAD, h * HEAD_PAD + HEAD_DIM)
        wp = wp.at[d, :EMBED_SIZE].set(w[:, s].T)
    return wp, _pad2(b[None, :], 1, E_PAD)


def pack_params(tp):
    packed = {
        # sqrt(embed_size) scale folded into the embedding table (pack time)
        'emb': _pad2(tp['embedding'] * math.sqrt(EMBED_SIZE), VOCAB_SIZE, E_PAD),
        'pe': _pad2(tp['pe'][0], MAX_LEN, E_PAD),
    }
    packed['fc_w'], packed['fc_b'] = _pack_linear(tp['fc_w'], tp['fc_b'], E_PAD, V_PAD)

    q_scale = 1.0 / math.sqrt(HEAD_DIM)
    acc = {k: [] for k in ['wqkv', 'bqkv', 'wo', 'bo', 'ln1g', 'ln1b',
                           'w1', 'b1', 'w2', 'b2', 'ln2g', 'ln2b']}
    for lyr in tp['layers']:
        wq_p, bq_p = _pack_qkv_proj(lyr['wq'], lyr['bq'], scale=q_scale)
        wk_p, bk_p = _pack_qkv_proj(lyr['wk'], lyr['bk'])
        wv_p, bv_p = _pack_qkv_proj(lyr['wv'], lyr['bv'])
        acc['wqkv'].append(jnp.concatenate([wq_p, wk_p, wv_p], axis=1))
        acc['bqkv'].append(jnp.concatenate([bq_p, bk_p, bv_p], axis=1))
        wo_p, bo_p = _pack_out_proj(lyr['wo'], lyr['bo'])
        acc['wo'].append(wo_p)
        acc['bo'].append(bo_p)
        acc['ln1g'].append(_pad2(lyr['ln1g'][None, :], 1, E_PAD))
        acc['ln1b'].append(_pad2(lyr['ln1b'][None, :], 1, E_PAD))
        w1_p, b1_p = _pack_linear(lyr['w1'], lyr['b1'], E_PAD, H_PAD)
        acc['w1'].append(w1_p)
        acc['b1'].append(b1_p)
        w2_p, b2_p = _pack_linear(lyr['w2'], lyr['b2'], H_PAD, E_PAD)
        acc['w2'].append(w2_p)
        acc['b2'].append(b2_p)
        acc['ln2g'].append(_pad2(lyr['ln2g'][None, :], 1, E_PAD))
        acc['ln2b'].append(_pad2(lyr['ln2b'][None, :], 1, E_PAD))
    for k, v in acc.items():
        packed[k] = jnp.stack(v, axis=0)
    return packed


# ============================================================== forward
def _const_spec(shape):
    zeros = (0,) * len(shape)
    return pl.BlockSpec(shape, lambda b: zeros)


def transformer_forward(packed, src):
    """src: (S, B) int32 token ids (PyTorch seq-first). Returns (S, B, vocab)."""
    S, B = src.shape
    # Embedding gather (scale pre-folded into the table) + PE.  Faithful to
    # the module: under seq-first layout the PositionalEncoding slices by the
    # batch dim, so batch b receives encoding row b at every position.  The
    # gather + add fuse into one XLA producer for the kernel input.
    x = jnp.take(packed['emb'], src.T, axis=0)                            # (B, S, E_PAD)
    x = x + packed['pe'][:B][:, None, :]

    names = ['wqkv', 'bqkv', 'wo', 'bo', 'ln1g', 'ln1b',
             'w1', 'b1', 'w2', 'b2', 'ln2g', 'ln2b', 'fc_w', 'fc_b']
    weights = [packed[n] for n in names]

    out = pl.pallas_call(
        fused_transformer_kernel,
        out_shape=jax.ShapeDtypeStruct((B, S, V_PAD), jnp.float32),
        grid=(B,),
        in_specs=[pl.BlockSpec((1, S, E_PAD), lambda b: (b, 0, 0))]
                 + [_const_spec(w.shape) for w in weights],
        out_specs=pl.BlockSpec((1, S, V_PAD), lambda b: (b, 0, 0)),
        compiler_params=pltpu.CompilerParams(
            dimension_semantics=("parallel",)),     # batch across TCs on v7x
    )(x, *weights)

    return jnp.transpose(out[:, :, :VOCAB_SIZE], (1, 0, 2))              # (S, B, V)


# ============================================================== pure-JAX reference
def _ln_ref(x, g, b):
    mean = jnp.mean(x, axis=-1, keepdims=True)
    var = jnp.mean((x - mean) ** 2, axis=-1, keepdims=True)
    return (x - mean) * jax.lax.rsqrt(var + LN_EPS) * g + b


def reference_forward(tp, src):
    S, B = src.shape
    x = jnp.take(tp['embedding'], src, axis=0) * math.sqrt(EMBED_SIZE)    # (S, B, E)
    x = x + tp['pe'][:, :B, :]                                            # PE quirk
    x = jnp.transpose(x, (1, 0, 2))                                       # (B, S, E)
    for lyr in tp['layers']:
        q = x @ lyr['wq'].T + lyr['bq']
        k = x @ lyr['wk'].T + lyr['bk']
        v = x @ lyr['wv'].T + lyr['bv']
        heads = []
        for h in range(NUM_HEADS):
            sl = slice(h * HEAD_DIM, (h + 1) * HEAD_DIM)
            s = jnp.einsum('bqd,bkd->bqk', q[..., sl], k[..., sl]) / math.sqrt(HEAD_DIM)
            p = jax.nn.softmax(s, axis=-1)
            heads.append(jnp.einsum('bqk,bkd->bqd', p, v[..., sl]))
        ctx = jnp.concatenate(heads, axis=-1)
        attn = ctx @ lyr['wo'].T + lyr['bo']
        x = _ln_ref(x + attn, lyr['ln1g'], lyr['ln1b'])
        h1 = jnp.maximum(x @ lyr['w1'].T + lyr['b1'], 0.0)
        h2 = h1 @ lyr['w2'].T + lyr['b2']
        x = _ln_ref(x + h2, lyr['ln2g'], lyr['ln2b'])
    logits = x @ tp['fc_w'].T + tp['fc_b']
    return jnp.transpose(logits, (1, 0, 2))                               # (S, B, V)


# TODO(synk): jieba tokenization / Counter vocab construction is data prep, not
# kernel compute; a synthetic vocab of size VOCAB_SIZE is used instead.

if __name__ == "__main__":
    key = jax.random.PRNGKey(0)
    pkey, dkey = jax.random.split(key)
    torch_params = init_torch_params(pkey)
    packed = pack_params(torch_params)

    SEQ, BATCH = 8, 2
    src = jax.random.randint(dkey, (SEQ, BATCH), 0, VOCAB_SIZE, dtype=jnp.int32)

    out = jax.block_until_ready(jax.jit(transformer_forward)(packed, src))
    assert out.shape == (SEQ, BATCH, VOCAB_SIZE), out.shape
    assert bool(jnp.all(jnp.isfinite(out)))

    ref = jax.block_until_ready(jax.jit(reference_forward)(torch_params, src))
    max_err = float(jnp.max(jnp.abs(out - ref)))
    assert max_err < 1e-2, f"max abs err vs reference: {max_err}"

    print("KERNEL_OK")
</pallas_src>

<mosaic_0001>
module attributes {stable_mosaic.version = 11 : i64} {
  func.func @fused_transformer_kernel(%arg0: i32, %arg1: memref<1x8x128xf32, #tpu.memory_space<vmem>>, %arg2: memref<2x128x384xf32, #tpu.memory_space<vmem>>, %arg3: memref<2x1x384xf32, #tpu.memory_space<vmem>>, %arg4: memref<2x128x128xf32, #tpu.memory_space<vmem>>, %arg5: memref<2x1x128xf32, #tpu.memory_space<vmem>>, %arg6: memref<2x1x128xf32, #tpu.memory_space<vmem>>, %arg7: memref<2x1x128xf32, #tpu.memory_space<vmem>>, %arg8: memref<2x128x128xf32, #tpu.memory_space<vmem>>, %arg9: memref<2x1x128xf32, #tpu.memory_space<vmem>>, %arg10: memref<2x128x128xf32, #tpu.memory_space<vmem>>, %arg11: memref<2x1x128xf32, #tpu.memory_space<vmem>>, %arg12: memref<2x1x128xf32, #tpu.memory_space<vmem>>, %arg13: memref<2x1x128xf32, #tpu.memory_space<vmem>>, %arg14: memref<128x128xf32, #tpu.memory_space<vmem>>, %arg15: memref<1x128xf32, #tpu.memory_space<vmem>>, %arg16: memref<1x8x128xf32, #tpu.memory_space<vmem>>) attributes {dimension_semantics = [#tpu.dimension_semantics<parallel>], iteration_bounds = array<i64: 2>, scalar_prefetch = 0 : i64, scratch_operands = 0 : i64, tpu.core_type = #tpu.core_type<tc>, window_params = [{transform_indices = @transform_0, window_bounds = array<i64: 1, 8, 128>}, {pipeline_mode = #tpu.pipeline_mode<synchronous>, transform_indices = @transform_1, window_bounds = array<i64: 2, 128, 384>}, {pipeline_mode = #tpu.pipeline_mode<synchronous>, transform_indices = @transform_2, window_bounds = array<i64: 2, 1, 384>}, {pipeline_mode = #tpu.pipeline_mode<synchronous>, transform_indices = @transform_3, window_bounds = array<i64: 2, 128, 128>}, {pipeline_mode = #tpu.pipeline_mode<synchronous>, transform_indices = @transform_4, window_bounds = array<i64: 2, 1, 128>}, {pipeline_mode = #tpu.pipeline_mode<synchronous>, transform_indices = @transform_5, window_bounds = array<i64: 2, 1, 128>}, {pipeline_mode = #tpu.pipeline_mode<synchronous>, transform_indices = @transform_6, window_bounds = array<i64: 2, 1, 128>}, {pipeline_mode = #tpu.pipeline_mode<synchronous>, transform_indices = @transform_7, window_bounds = array<i64: 2, 128, 128>}, {pipeline_mode = #tpu.pipeline_mode<synchronous>, transform_indices = @transform_8, window_bounds = array<i64: 2, 1, 128>}, {pipeline_mode = #tpu.pipeline_mode<synchronous>, transform_indices = @transform_9, window_bounds = array<i64: 2, 128, 128>}, {pipeline_mode = #tpu.pipeline_mode<synchronous>, transform_indices = @transform_10, window_bounds = array<i64: 2, 1, 128>}, {pipeline_mode = #tpu.pipeline_mode<synchronous>, transform_indices = @transform_11, window_bounds = array<i64: 2, 1, 128>}, {pipeline_mode = #tpu.pipeline_mode<synchronous>, transform_indices = @transform_12, window_bounds = array<i64: 2, 1, 128>}, {pipeline_mode = #tpu.pipeline_mode<synchronous>, transform_indices = @transform_13, window_bounds = array<i64: 128, 128>}, {pipeline_mode = #tpu.pipeline_mode<synchronous>, transform_indices = @transform_14, window_bounds = array<i64: 1, 128>}, {transform_indices = @transform_15, window_bounds = array<i64: 1, 8, 128>}]} {
    %c0 = arith.constant 0 : index
    %c0_0 = arith.constant 0 : index
    %c0_1 = arith.constant 0 : index
    %0 = vector.load %arg1[%c0, %c0_0, %c0_1] : memref<1x8x128xf32, #tpu.memory_space<vmem>>, vector<1x8x128xf32>
    %1 = vector.shape_cast %0 : vector<1x8x128xf32> to vector<8x128xf32>
    %c0_2 = arith.constant 0 : index
    %c0_3 = arith.constant 0 : index
    %c0_4 = arith.constant 0 : index
    %2 = vector.load %arg2[%c0_2, %c0_3, %c0_4] : memref<2x128x384xf32, #tpu.memory_space<vmem>>, vector<1x128x384xf32>
    %3 = vector.shape_cast %2 : vector<1x128x384xf32> to vector<128x384xf32>
    %cst = arith.constant dense<0.000000e+00> : vector<8x384xf32>
    %4 = tpu.matmul %1, %3, %cst {dimension_numbers = #tpu.dot_dimension_numbers<[1], [0], [0], [1], [0, 0, 1, 1], [], []>} : vector<8x128xf32>, vector<128x384xf32>, vector<8x384xf32> -> vector<8x384xf32>
    %c0_5 = arith.constant 0 : index
    %c0_6 = arith.constant 0 : index
    %c0_7 = arith.constant 0 : index
    %5 = vector.load %arg3[%c0_5, %c0_6, %c0_7] : memref<2x1x384xf32, #tpu.memory_space<vmem>>, vector<1x1x384xf32>
    %6 = vector.shape_cast %5 : vector<1x1x384xf32> to vector<1x384xf32>
    %7 = vector.broadcast %6 : vector<1x384xf32> to vector<8x384xf32>
    %8 = arith.addf %4, %7 : vector<8x384xf32>
    %9 = vector.extract_strided_slice %8 {offsets = [0, 0], sizes = [8, 128], strides = [1, 1]} : vector<8x384xf32> to vector<8x128xf32>
    %10 = vector.extract_strided_slice %8 {offsets = [0, 128], sizes = [8, 128], strides = [1, 1]} : vector<8x384xf32> to vector<8x128xf32>
    %11 = vector.extract_strided_slice %8 {offsets = [0, 256], sizes = [8, 128], strides = [1, 1]} : vector<8x384xf32> to vector<8x128xf32>
    %12 = vector.extract_strided_slice %9 {offsets = [0, 0], sizes = [8, 64], strides = [1, 1]} : vector<8x128xf32> to vector<8x64xf32>
    %13 = vector.extract_strided_slice %10 {offsets = [0, 0], sizes = [8, 64], strides = [1, 1]} : vector<8x128xf32> to vector<8x64xf32>
    %14 = vector.extract_strided_slice %11 {offsets = [0, 0], sizes = [8, 64], strides = [1, 1]} : vector<8x128xf32> to vector<8x64xf32>
    "tpu.trace_start"() <{level = 10 : i32, message = "qd,kd->qk"}> : () -> ()
    %cst_8 = arith.constant dense<0.000000e+00> : vector<8x8xf32>
    %15 = tpu.matmul %12, %13, %cst_8 {dimension_numbers = #tpu.dot_dimension_numbers<[1], [1], [0], [0], [0, 0, 1, 0], [], []>} : vector<8x64xf32>, vector<8x64xf32>, vector<8x8xf32> -> vector<8x8xf32>
    "tpu.trace_stop"() : () -> ()
    %cst_9 = arith.constant dense<0xFF800000> : vector<8xf32>
    %16 = vector.multi_reduction <maximumf>, %15, %cst_9 [1] : vector<8x8xf32> to vector<8xf32>
    %17 = vector.shape_cast %16 : vector<8xf32> to vector<8x1xf32>
    %18 = vector.broadcast %17 : vector<8x1xf32> to vector<8x8xf32>
    %19 = arith.subf %15, %18 : vector<8x8xf32>
    %20 = math.exp %19 : vector<8x8xf32>
    %cst_10 = arith.constant dense<0.000000e+00> : vector<8xf32>
    %21 = vector.multi_reduction <add>, %20, %cst_10 [1] : vector<8x8xf32> to vector<8xf32>
    %22 = vector.shape_cast %21 : vector<8xf32> to vector<8x1xf32>
    %23 = tpu.reciprocal %22 {approx = true} : vector<8x1xf32> -> vector<8x1xf32>
    %24 = vector.broadcast %23 : vector<8x1xf32> to vector<8x8xf32>
    %25 = arith.mulf %20, %24 : vector<8x8xf32>
    %cst_11 = arith.constant dense<0.000000e+00> : vector<8x64xf32>
    %26 = tpu.matmul %25, %14, %cst_11 {dimension_numbers = #tpu.dot_dimension_numbers<[1], [0], [0], [1], [0, 0, 1, 1], [], []>} : vector<8x8xf32>, vector<8x64xf32>, vector<8x64xf32> -> vector<8x64xf32>
    %c0_12 = arith.constant 0 : index
    %c0_13 = arith.constant 0 : index
    %c0_14 = arith.constant 0 : index
    %27 = vector.load %arg4[%c0_12, %c0_13, %c0_14] : memref<2x128x128xf32, #tpu.memory_space<vmem>>, vector<1x64x128xf32>
    %28 = vector.shape_cast %27 : vector<1x64x128xf32> to vector<64x128xf32>
    %cst_15 = arith.constant dense<0.000000e+00> : vector<8x128xf32>
    %29 = tpu.matmul %26, %28, %cst_15 {dimension_numbers = #tpu.dot_dimension_numbers<[1], [0], [0], [1], [0, 0, 1, 1], [], []>} : vector<8x64xf32>, vector<64x128xf32>, vector<8x128xf32> -> vector<8x128xf32>
    %30 = vector.extract_strided_slice %9 {offsets = [0, 64], sizes = [8, 64], strides = [1, 1]} : vector<8x128xf32> to vector<8x64xf32>
    %31 = vector.extract_strided_slice %10 {offsets = [0, 64], sizes = [8, 64], strides = [1, 1]} : vector<8x128xf32> to vector<8x64xf32>
    %32 = vector.extract_strided_slice %11 {offsets = [0, 64], sizes = [8, 64], strides = [1, 1]} : vector<8x128xf32> to vector<8x64xf32>
    "tpu.trace_start"() <{level = 10 : i32, message = "qd,kd->qk"}> : () -> ()
    %cst_16 = arith.constant dense<0.000000e+00> : vector<8x8xf32>
    %33 = tpu.matmul %30, %31, %cst_16 {dimension_numbers = #tpu.dot_dimension_numbers<[1], [1], [0], [0], [0, 0, 1, 0], [], []>} : vector<8x64xf32>, vector<8x64xf32>, vector<8x8xf32> -> vector<8x8xf32>
    "tpu.trace_stop"() : () -> ()
    %cst_17 = arith.constant dense<0xFF800000> : vector<8xf32>
    %34 = vector.multi_reduction <maximumf>, %33, %cst_17 [1] : vector<8x8xf32> to vector<8xf32>
    %35 = vector.shape_cast %34 : vector<8xf32> to vector<8x1xf32>
    %36 = vector.broadcast %35 : vector<8x1xf32> to vector<8x8xf32>
    %37 = arith.subf %33, %36 : vector<8x8xf32>
    %38 = math.exp %37 : vector<8x8xf32>
    %cst_18 = arith.constant dense<0.000000e+00> : vector<8xf32>
    %39 = vector.multi_reduction <add>, %38, %cst_18 [1] : vector<8x8xf32> to vector<8xf32>
    %40 = vector.shape_cast %39 : vector<8xf32> to vector<8x1xf32>
    %41 = tpu.reciprocal %40 {approx = true} : vector<8x1xf32> -> vector<8x1xf32>
    %42 = vector.broadcast %41 : vector<8x1xf32> to vector<8x8xf32>
    %43 = arith.mulf %38, %42 : vector<8x8xf32>
    %cst_19 = arith.constant dense<0.000000e+00> : vector<8x64xf32>
    %44 = tpu.matmul %43, %32, %cst_19 {dimension_numbers = #tpu.dot_dimension_numbers<[1], [0], [0], [1], [0, 0, 1, 1], [], []>} : vector<8x8xf32>, vector<8x64xf32>, vector<8x64xf32> -> vector<8x64xf32>
    %c0_20 = arith.constant 0 : index
    %c64 = arith.constant 64 : index
    %c0_21 = arith.constant 0 : index
    %45 = vector.load %arg4[%c0_20, %c64, %c0_21] : memref<2x128x128xf32, #tpu.memory_space<vmem>>, vector<1x64x128xf32>
    %46 = vector.shape_cast %45 : vector<1x64x128xf32> to vector<64x128xf32>
    %cst_22 = arith.constant dense<0.000000e+00> : vector<8x128xf32>
    %47 = tpu.matmul %44, %46, %cst_22 {dimension_numbers = #tpu.dot_dimension_numbers<[1], [0], [0], [1], [0, 0, 1, 1], [], []>} : vector<8x64xf32>, vector<64x128xf32>, vector<8x128xf32> -> vector<8x128xf32>
    %48 = arith.addf %29, %47 : vector<8x128xf32>
    %c0_23 = arith.constant 0 : index
    %c0_24 = arith.constant 0 : index
    %c0_25 = arith.constant 0 : index
    %49 = vector.load %arg5[%c0_23, %c0_24, %c0_25] : memref<2x1x128xf32, #tpu.memory_space<vmem>>, vector<1x1x128xf32>
    %50 = vector.shape_cast %49 : vector<1x1x128xf32> to vector<1x128xf32>
    %51 = vector.broadcast %50 : vector<1x128xf32> to vector<8x128xf32>
    %52 = arith.addf %48, %51 : vector<8x128xf32>
    %53 = arith.addf %1, %52 : vector<8x128xf32>
    %c0_26 = arith.constant 0 : index
    %c0_27 = arith.constant 0 : index
    %c0_28 = arith.constant 0 : index
    %54 = vector.load %arg6[%c0_26, %c0_27, %c0_28] : memref<2x1x128xf32, #tpu.memory_space<vmem>>, vector<1x1x128xf32>
    %55 = vector.shape_cast %54 : vector<1x1x128xf32> to vector<1x128xf32>
    %c0_29 = arith.constant 0 : index
    %c0_30 = arith.constant 0 : index
    %c0_31 = arith.constant 0 : index
    %56 = vector.load %arg7[%c0_29, %c0_30, %c0_31] : memref<2x1x128xf32, #tpu.memory_space<vmem>>, vector<1x1x128xf32>
    %57 = vector.shape_cast %56 : vector<1x1x128xf32> to vector<1x128xf32>
    %cst_32 = arith.constant dense<0.000000e+00> : vector<8xf32>
    %58 = vector.multi_reduction <add>, %53, %cst_32 [1] : vector<8x128xf32> to vector<8xf32>
    %59 = vector.shape_cast %58 : vector<8xf32> to vector<8x1xf32>
    %cst_33 = arith.constant 2.000000e-02 : f32
    %60 = vector.broadcast %cst_33 : f32 to vector<8x1xf32>
    %61 = arith.mulf %59, %60 : vector<8x1xf32>
    %62 = arith.mulf %53, %53 : vector<8x128xf32>
    %cst_34 = arith.constant dense<0.000000e+00> : vector<8xf32>
    %63 = vector.multi_reduction <add>, %62, %cst_34 [1] : vector<8x128xf32> to vector<8xf32>
    %64 = vector.shape_cast %63 : vector<8xf32> to vector<8x1xf32>
    %cst_35 = arith.constant 2.000000e-02 : f32
    %65 = vector.broadcast %cst_35 : f32 to vector<8x1xf32>
    %66 = arith.mulf %64, %65 : vector<8x1xf32>
    %67 = arith.mulf %61, %61 : vector<8x1xf32>
    %68 = arith.subf %66, %67 : vector<8x1xf32>
    %69 = vector.broadcast %61 : vector<8x1xf32> to vector<8x128xf32>
    %70 = arith.subf %53, %69 : vector<8x128xf32>
    %cst_36 = arith.constant 9.99999974E-6 : f32
    %71 = vector.broadcast %cst_36 : f32 to vector<8x1xf32>
    %72 = arith.addf %68, %71 : vector<8x1xf32>
    %73 = math.rsqrt %72 : vector<8x1xf32>
    %74 = vector.broadcast %73 : vector<8x1xf32> to vector<8x128xf32>
    %75 = arith.mulf %70, %74 : vector<8x128xf32>
    %76 = vector.broadcast %55 : vector<1x128xf32> to vector<8x128xf32>
    %77 = arith.mulf %75, %76 : vector<8x128xf32>
    %78 = vector.broadcast %57 : vector<1x128xf32> to vector<8x128xf32>
    %79 = arith.addf %77, %78 : vector<8x128xf32>
    %c0_37 = arith.constant 0 : index
    %c0_38 = arith.constant 0 : index
    %c0_39 = arith.constant 0 : index
    %80 = vector.load %arg8[%c0_37, %c0_38, %c0_39] : memref<2x128x128xf32, #tpu.memory_space<vmem>>, vector<1x128x128xf32>
    %81 = vector.shape_cast %80 : vector<1x128x128xf32> to vector<128x128xf32>
    %cst_40 = arith.constant dense<0.000000e+00> : vector<8x128xf32>
    %82 = tpu.matmul %79, %81, %cst_40 {dimension_numbers = #tpu.dot_dimension_numbers<[1], [0], [0], [1], [0, 0, 1, 1], [], []>} : vector<8x128xf32>, vector<128x128xf32>, vector<8x128xf32> -> vector<8x128xf32>
    %c0_41 = arith.constant 0 : index
    %c0_42 = arith.constant 0 : index
    %c0_43 = arith.constant 0 : index
    %83 = vector.load %arg9[%c0_41, %c0_42, %c0_43] : memref<2x1x128xf32, #tpu.memory_space<vmem>>, vector<1x1x128xf32>
    %84 = vector.shape_cast %83 : vector<1x1x128xf32> to vector<1x128xf32>
    %85 = vector.broadcast %84 : vector<1x128xf32> to vector<8x128xf32>
    %86 = arith.addf %82, %85 : vector<8x128xf32>
    %cst_44 = arith.constant 0.000000e+00 : f32
    %87 = vector.broadcast %cst_44 : f32 to vector<8x128xf32>
    %88 = arith.maximumf %86, %87 : vector<8x128xf32>
    %c0_45 = arith.constant 0 : index
    %c0_46 = arith.constant 0 : index
    %c0_47 = arith.constant 0 : index
    %89 = vector.load %arg10[%c0_45, %c0_46, %c0_47] : memref<2x128x128xf32, #tpu.memory_space<vmem>>, vector<1x128x128xf32>
    %90 = vector.shape_cast %89 : vector<1x128x128xf32> to vector<128x128xf32>
    %cst_48 = arith.constant dense<0.000000e+00> : vector<8x128xf32>
    %91 = tpu.matmul %88, %90, %cst_48 {dimension_numbers = #tpu.dot_dimension_numbers<[1], [0], [0], [1], [0, 0, 1, 1], [], []>} : vector<8x128xf32>, vector<128x128xf32>, vector<8x128xf32> -> vector<8x128xf32>
    %c0_49 = arith.constant 0 : index
    %c0_50 = arith.constant 0 : index
    %c0_51 = arith.constant 0 : index
    %92 = vector.load %arg11[%c0_49, %c0_50, %c0_51] : memref<2x1x128xf32, #tpu.memory_space<vmem>>, vector<1x1x128xf32>
    %93 = vector.shape_cast %92 : vector<1x1x128xf32> to vector<1x128xf32>
    %94 = vector.broadcast %93 : vector<1x128xf32> to vector<8x128xf32>
    %95 = arith.addf %91, %94 : vector<8x128xf32>
    %96 = arith.addf %79, %95 : vector<8x128xf32>
    %c0_52 = arith.constant 0 : index
    %c0_53 = arith.constant 0 : index
    %c0_54 = arith.constant 0 : index
    %97 = vector.load %arg12[%c0_52, %c0_53, %c0_54] : memref<2x1x128xf32, #tpu.memory_space<vmem>>, vector<1x1x128xf32>
    %98 = vector.shape_cast %97 : vector<1x1x128xf32> to vector<1x128xf32>
    %c0_55 = arith.constant 0 : index
    %c0_56 = arith.constant 0 : index
    %c0_57 = arith.constant 0 : index
    %99 = vector.load %arg13[%c0_55, %c0_56, %c0_57] : memref<2x1x128xf32, #tpu.memory_space<vmem>>, vector<1x1x128xf32>
    %100 = vector.shape_cast %99 : vector<1x1x128xf32> to vector<1x128xf32>
    %cst_58 = arith.constant dense<0.000000e+00> : vector<8xf32>
    %101 = vector.multi_reduction <add>, %96, %cst_58 [1] : vector<8x128xf32> to vector<8xf32>
    %102 = vector.shape_cast %101 : vector<8xf32> to vector<8x1xf32>
    %cst_59 = arith.constant 2.000000e-02 : f32
    %103 = vector.broadcast %cst_59 : f32 to vector<8x1xf32>
    %104 = arith.mulf %102, %103 : vector<8x1xf32>
    %105 = arith.mulf %96, %96 : vector<8x128xf32>
    %cst_60 = arith.constant dense<0.000000e+00> : vector<8xf32>
    %106 = vector.multi_reduction <add>, %105, %cst_60 [1] : vector<8x128xf32> to vector<8xf32>
    %107 = vector.shape_cast %106 : vector<8xf32> to vector<8x1xf32>
    %cst_61 = arith.constant 2.000000e-02 : f32
    %108 = vector.broadcast %cst_61 : f32 to vector<8x1xf32>
    %109 = arith.mulf %107, %108 : vector<8x1xf32>
    %110 = arith.mulf %104, %104 : vector<8x1xf32>
    %111 = arith.subf %109, %110 : vector<8x1xf32>
    %112 = vector.broadcast %104 : vector<8x1xf32> to vector<8x128xf32>
    %113 = arith.subf %96, %112 : vector<8x128xf32>
    %cst_62 = arith.constant 9.99999974E-6 : f32
    %114 = vector.broadcast %cst_62 : f32 to vector<8x1xf32>
    %115 = arith.addf %111, %114 : vector<8x1xf32>
    %116 = math.rsqrt %115 : vector<8x1xf32>
    %117 = vector.broadcast %116 : vector<8x1xf32> to vector<8x128xf32>
    %118 = arith.mulf %113, %117 : vector<8x128xf32>
    %119 = vector.broadcast %98 : vector<1x128xf32> to vector<8x128xf32>
    %120 = arith.mulf %118, %119 : vector<8x128xf32>
    %121 = vector.broadcast %100 : vector<1x128xf32> to vector<8x128xf32>
    %122 = arith.addf %120, %121 : vector<8x128xf32>
    %c1 = arith.constant 1 : index
    %c0_63 = arith.constant 0 : index
    %c0_64 = arith.constant 0 : index
    %123 = vector.load %arg2[%c1, %c0_63, %c0_64] : memref<2x128x384xf32, #tpu.memory_space<vmem>>, vector<1x128x384xf32>
    %124 = vector.shape_cast %123 : vector<1x128x384xf32> to vector<128x384xf32>
    %cst_65 = arith.constant dense<0.000000e+00> : vector<8x384xf32>
    %125 = tpu.matmul %122, %124, %cst_65 {dimension_numbers = #tpu.dot_dimension_numbers<[1], [0], [0], [1], [0, 0, 1, 1], [], []>} : vector<8x128xf32>, vector<128x384xf32>, vector<8x384xf32> -> vector<8x384xf32>
    %c1_66 = arith.constant 1 : index
    %c0_67 = arith.constant 0 : index
    %c0_68 = arith.constant 0 : index
    %126 = vector.load %arg3[%c1_66, %c0_67, %c0_68] : memref<2x1x384xf32, #tpu.memory_space<vmem>>, vector<1x1x384xf32>
    %127 = vector.shape_cast %126 : vector<1x1x384xf32> to vector<1x384xf32>
    %128 = vector.broadcast %127 : vector<1x384xf32> to vector<8x384xf32>
    %129 = arith.addf %125, %128 : vector<8x384xf32>
    %130 = vector.extract_strided_slice %129 {offsets = [0, 0], sizes = [8, 128], strides = [1, 1]} : vector<8x384xf32> to vector<8x128xf32>
    %131 = vector.extract_strided_slice %129 {offsets = [0, 128], sizes = [8, 128], strides = [1, 1]} : vector<8x384xf32> to vector<8x128xf32>
    %132 = vector.extract_strided_slice %129 {offsets = [0, 256], sizes = [8, 128], strides = [1, 1]} : vector<8x384xf32> to vector<8x128xf32>
    %133 = vector.extract_strided_slice %130 {offsets = [0, 0], sizes = [8, 64], strides = [1, 1]} : vector<8x128xf32> to vector<8x64xf32>
    %134 = vector.extract_strided_slice %131 {offsets = [0, 0], sizes = [8, 64], strides = [1, 1]} : vector<8x128xf32> to vector<8x64xf32>
    %135 = vector.extract_strided_slice %132 {offsets = [0, 0], sizes = [8, 64], strides = [1, 1]} : vector<8x128xf32> to vector<8x64xf32>
    "tpu.trace_start"() <{level = 10 : i32, message = "qd,kd->qk"}> : () -> ()
    %cst_69 = arith.constant dense<0.000000e+00> : vector<8x8xf32>
    %136 = tpu.matmul %133, %134, %cst_69 {dimension_numbers = #tpu.dot_dimension_numbers<[1], [1], [0], [0], [0, 0, 1, 0], [], []>} : vector<8x64xf32>, vector<8x64xf32>, vector<8x8xf32> -> vector<8x8xf32>
    "tpu.trace_stop"() : () -> ()
    %cst_70 = arith.constant dense<0xFF800000> : vector<8xf32>
    %137 = vector.multi_reduction <maximumf>, %136, %cst_70 [1] : vector<8x8xf32> to vector<8xf32>
    %138 = vector.shape_cast %137 : vector<8xf32> to vector<8x1xf32>
    %139 = vector.broadcast %138 : vector<8x1xf32> to vector<8x8xf32>
    %140 = arith.subf %136, %139 : vector<8x8xf32>
    %141 = math.exp %140 : vector<8x8xf32>
    %cst_71 = arith.constant dense<0.000000e+00> : vector<8xf32>
    %142 = vector.multi_reduction <add>, %141, %cst_71 [1] : vector<8x8xf32> to vector<8xf32>
    %143 = vector.shape_cast %142 : vector<8xf32> to vector<8x1xf32>
    %144 = tpu.reciprocal %143 {approx = true} : vector<8x1xf32> -> vector<8x1xf32>
    %145 = vector.broadcast %144 : vector<8x1xf32> to vector<8x8xf32>
    %146 = arith.mulf %141, %145 : vector<8x8xf32>
    %cst_72 = arith.constant dense<0.000000e+00> : vector<8x64xf32>
    %147 = tpu.matmul %146, %135, %cst_72 {dimension_numbers = #tpu.dot_dimension_numbers<[1], [0], [0], [1], [0, 0, 1, 1], [], []>} : vector<8x8xf32>, vector<8x64xf32>, vector<8x64xf32> -> vector<8x64xf32>
    %c1_73 = arith.constant 1 : index
    %c0_74 = arith.constant 0 : index
    %c0_75 = arith.constant 0 : index
    %148 = vector.load %arg4[%c1_73, %c0_74, %c0_75] : memref<2x128x128xf32, #tpu.memory_space<vmem>>, vector<1x64x128xf32>
    %149 = vector.shape_cast %148 : vector<1x64x128xf32> to vector<64x128xf32>
    %cst_76 = arith.constant dense<0.000000e+00> : vector<8x128xf32>
    %150 = tpu.matmul %147, %149, %cst_76 {dimension_numbers = #tpu.dot_dimension_numbers<[1], [0], [0], [1], [0, 0, 1, 1], [], []>} : vector<8x64xf32>, vector<64x128xf32>, vector<8x128xf32> -> vector<8x128xf32>
    %151 = vector.extract_strided_slice %130 {offsets = [0, 64], sizes = [8, 64], strides = [1, 1]} : vector<8x128xf32> to vector<8x64xf32>
    %152 = vector.extract_strided_slice %131 {offsets = [0, 64], sizes = [8, 64], strides = [1, 1]} : vector<8x128xf32> to vector<8x64xf32>
    %153 = vector.extract_strided_slice %132 {offsets = [0, 64], sizes = [8, 64], strides = [1, 1]} : vector<8x128xf32> to vector<8x64xf32>
    "tpu.trace_start"() <{level = 10 : i32, message = "qd,kd->qk"}> : () -> ()
    %cst_77 = arith.constant dense<0.000000e+00> : vector<8x8xf32>
    %154 = tpu.matmul %151, %152, %cst_77 {dimension_numbers = #tpu.dot_dimension_numbers<[1], [1], [0], [0], [0, 0, 1, 0], [], []>} : vector<8x64xf32>, vector<8x64xf32>, vector<8x8xf32> -> vector<8x8xf32>
    "tpu.trace_stop"() : () -> ()
    %cst_78 = arith.constant dense<0xFF800000> : vector<8xf32>
    %155 = vector.multi_reduction <maximumf>, %154, %cst_78 [1] : vector<8x8xf32> to vector<8xf32>
    %156 = vector.shape_cast %155 : vector<8xf32> to vector<8x1xf32>
    %157 = vector.broadcast %156 : vector<8x1xf32> to vector<8x8xf32>
    %158 = arith.subf %154, %157 : vector<8x8xf32>
    %159 = math.exp %158 : vector<8x8xf32>
    %cst_79 = arith.constant dense<0.000000e+00> : vector<8xf32>
    %160 = vector.multi_reduction <add>, %159, %cst_79 [1] : vector<8x8xf32> to vector<8xf32>
    %161 = vector.shape_cast %160 : vector<8xf32> to vector<8x1xf32>
    %162 = tpu.reciprocal %161 {approx = true} : vector<8x1xf32> -> vector<8x1xf32>
    %163 = vector.broadcast %162 : vector<8x1xf32> to vector<8x8xf32>
    %164 = arith.mulf %159, %163 : vector<8x8xf32>
    %cst_80 = arith.constant dense<0.000000e+00> : vector<8x64xf32>
    %165 = tpu.matmul %164, %153, %cst_80 {dimension_numbers = #tpu.dot_dimension_numbers<[1], [0], [0], [1], [0, 0, 1, 1], [], []>} : vector<8x8xf32>, vector<8x64xf32>, vector<8x64xf32> -> vector<8x64xf32>
    %c1_81 = arith.constant 1 : index
    %c64_82 = arith.constant 64 : index
    %c0_83 = arith.constant 0 : index
    %166 = vector.load %arg4[%c1_81, %c64_82, %c0_83] : memref<2x128x128xf32, #tpu.memory_space<vmem>>, vector<1x64x128xf32>
    %167 = vector.shape_cast %166 : vector<1x64x128xf32> to vector<64x128xf32>
    %cst_84 = arith.constant dense<0.000000e+00> : vector<8x128xf32>
    %168 = tpu.matmul %165, %167, %cst_84 {dimension_numbers = #tpu.dot_dimension_numbers<[1], [0], [0], [1], [0, 0, 1, 1], [], []>} : vector<8x64xf32>, vector<64x128xf32>, vector<8x128xf32> -> vector<8x128xf32>
    %169 = arith.addf %150, %168 : vector<8x128xf32>
    %c1_85 = arith.constant 1 : index
    %c0_86 = arith.constant 0 : index
    %c0_87 = arith.constant 0 : index
    %170 = vector.load %arg5[%c1_85, %c0_86, %c0_87] : memref<2x1x128xf32, #tpu.memory_space<vmem>>, vector<1x1x128xf32>
    %171 = vector.shape_cast %170 : vector<1x1x128xf32> to vector<1x128xf32>
    %172 = vector.broadcast %171 : vector<1x128xf32> to vector<8x128xf32>
    %173 = arith.addf %169, %172 : vector<8x128xf32>
    %174 = arith.addf %122, %173 : vector<8x128xf32>
    %c1_88 = arith.constant 1 : index
    %c0_89 = arith.constant 0 : index
    %c0_90 = arith.constant 0 : index
    %175 = vector.load %arg6[%c1_88, %c0_89, %c0_90] : memref<2x1x128xf32, #tpu.memory_space<vmem>>, vector<1x1x128xf32>
    %176 = vector.shape_cast %175 : vector<1x1x128xf32> to vector<1x128xf32>
    %c1_91 = arith.constant 1 : index
    %c0_92 = arith.constant 0 : index
    %c0_93 = arith.constant 0 : index
    %177 = vector.load %arg7[%c1_91, %c0_92, %c0_93] : memref<2x1x128xf32, #tpu.memory_space<vmem>>, vector<1x1x128xf32>
    %178 = vector.shape_cast %177 : vector<1x1x128xf32> to vector<1x128xf32>
    %cst_94 = arith.constant dense<0.000000e+00> : vector<8xf32>
    %179 = vector.multi_reduction <add>, %174, %cst_94 [1] : vector<8x128xf32> to vector<8xf32>
    %180 = vector.shape_cast %179 : vector<8xf32> to vector<8x1xf32>
    %cst_95 = arith.constant 2.000000e-02 : f32
    %181 = vector.broadcast %cst_95 : f32 to vector<8x1xf32>
    %182 = arith.mulf %180, %181 : vector<8x1xf32>
    %183 = arith.mulf %174, %174 : vector<8x128xf32>
    %cst_96 = arith.constant dense<0.000000e+00> : vector<8xf32>
    %184 = vector.multi_reduction <add>, %183, %cst_96 [1] : vector<8x128xf32> to vector<8xf32>
    %185 = vector.shape_cast %184 : vector<8xf32> to vector<8x1xf32>
    %cst_97 = arith.constant 2.000000e-02 : f32
    %186 = vector.broadcast %cst_97 : f32 to vector<8x1xf32>
    %187 = arith.mulf %185, %186 : vector<8x1xf32>
    %188 = arith.mulf %182, %182 : vector<8x1xf32>
    %189 = arith.subf %187, %188 : vector<8x1xf32>
    %190 = vector.broadcast %182 : vector<8x1xf32> to vector<8x128xf32>
    %191 = arith.subf %174, %190 : vector<8x128xf32>
    %cst_98 = arith.constant 9.99999974E-6 : f32
    %192 = vector.broadcast %cst_98 : f32 to vector<8x1xf32>
    %193 = arith.addf %189, %192 : vector<8x1xf32>
    %194 = math.rsqrt %193 : vector<8x1xf32>
    %195 = vector.broadcast %194 : vector<8x1xf32> to vector<8x128xf32>
    %196 = arith.mulf %191, %195 : vector<8x128xf32>
    %197 = vector.broadcast %176 : vector<1x128xf32> to vector<8x128xf32>
    %198 = arith.mulf %196, %197 : vector<8x128xf32>
    %199 = vector.broadcast %178 : vector<1x128xf32> to vector<8x128xf32>
    %200 = arith.addf %198, %199 : vector<8x128xf32>
    %c1_99 = arith.constant 1 : index
    %c0_100 = arith.constant 0 : index
    %c0_101 = arith.constant 0 : index
    %201 = vector.load %arg8[%c1_99, %c0_100, %c0_101] : memref<2x128x128xf32, #tpu.memory_space<vmem>>, vector<1x128x128xf32>
    %202 = vector.shape_cast %201 : vector<1x128x128xf32> to vector<128x128xf32>
    %cst_102 = arith.constant dense<0.000000e+00> : vector<8x128xf32>
    %203 = tpu.matmul %200, %202, %cst_102 {dimension_numbers = #tpu.dot_dimension_numbers<[1], [0], [0], [1], [0, 0, 1, 1], [], []>} : vector<8x128xf32>, vector<128x128xf32>, vector<8x128xf32> -> vector<8x128xf32>
    %c1_103 = arith.constant 1 : index
    %c0_104 = arith.constant 0 : index
    %c0_105 = arith.constant 0 : index
    %204 = vector.load %arg9[%c1_103, %c0_104, %c0_105] : memref<2x1x128xf32, #tpu.memory_space<vmem>>, vector<1x1x128xf32>
    %205 = vector.shape_cast %204 : vector<1x1x128xf32> to vector<1x128xf32>
    %206 = vector.broadcast %205 : vector<1x128xf32> to vector<8x128xf32>
    %207 = arith.addf %203, %206 : vector<8x128xf32>
    %cst_106 = arith.constant 0.000000e+00 : f32
    %208 = vector.broadcast %cst_106 : f32 to vector<8x128xf32>
    %209 = arith.maximumf %207, %208 : vector<8x128xf32>
    %c1_107 = arith.constant 1 : index
    %c0_108 = arith.constant 0 : index
    %c0_109 = arith.constant 0 : index
    %210 = vector.load %arg10[%c1_107, %c0_108, %c0_109] : memref<2x128x128xf32, #tpu.memory_space<vmem>>, vector<1x128x128xf32>
    %211 = vector.shape_cast %210 : vector<1x128x128xf32> to vector<128x128xf32>
    %cst_110 = arith.constant dense<0.000000e+00> : vector<8x128xf32>
    %212 = tpu.matmul %209, %211, %cst_110 {dimension_numbers = #tpu.dot_dimension_numbers<[1], [0], [0], [1], [0, 0, 1, 1], [], []>} : vector<8x128xf32>, vector<128x128xf32>, vector<8x128xf32> -> vector<8x128xf32>
    %c1_111 = arith.constant 1 : index
    %c0_112 = arith.constant 0 : index
    %c0_113 = arith.constant 0 : index
    %213 = vector.load %arg11[%c1_111, %c0_112, %c0_113] : memref<2x1x128xf32, #tpu.memory_space<vmem>>, vector<1x1x128xf32>
    %214 = vector.shape_cast %213 : vector<1x1x128xf32> to vector<1x128xf32>
    %215 = vector.broadcast %214 : vector<1x128xf32> to vector<8x128xf32>
    %216 = arith.addf %212, %215 : vector<8x128xf32>
    %217 = arith.addf %200, %216 : vector<8x128xf32>
    %c1_114 = arith.constant 1 : index
    %c0_115 = arith.constant 0 : index
    %c0_116 = arith.constant 0 : index
    %218 = vector.load %arg12[%c1_114, %c0_115, %c0_116] : memref<2x1x128xf32, #tpu.memory_space<vmem>>, vector<1x1x128xf32>
    %219 = vector.shape_cast %218 : vector<1x1x128xf32> to vector<1x128xf32>
    %c1_117 = arith.constant 1 : index
    %c0_118 = arith.constant 0 : index
    %c0_119 = arith.constant 0 : index
    %220 = vector.load %arg13[%c1_117, %c0_118, %c0_119] : memref<2x1x128xf32, #tpu.memory_space<vmem>>, vector<1x1x128xf32>
    %221 = vector.shape_cast %220 : vector<1x1x128xf32> to vector<1x128xf32>
    %cst_120 = arith.constant dense<0.000000e+00> : vector<8xf32>
    %222 = vector.multi_reduction <add>, %217, %cst_120 [1] : vector<8x128xf32> to vector<8xf32>
    %223 = vector.shape_cast %222 : vector<8xf32> to vector<8x1xf32>
    %cst_121 = arith.constant 2.000000e-02 : f32
    %224 = vector.broadcast %cst_121 : f32 to vector<8x1xf32>
    %225 = arith.mulf %223, %224 : vector<8x1xf32>
    %226 = arith.mulf %217, %217 : vector<8x128xf32>
    %cst_122 = arith.constant dense<0.000000e+00> : vector<8xf32>
    %227 = vector.multi_reduction <add>, %226, %cst_122 [1] : vector<8x128xf32> to vector<8xf32>
    %228 = vector.shape_cast %227 : vector<8xf32> to vector<8x1xf32>
    %cst_123 = arith.constant 2.000000e-02 : f32
    %229 = vector.broadcast %cst_123 : f32 to vector<8x1xf32>
    %230 = arith.mulf %228, %229 : vector<8x1xf32>
    %231 = arith.mulf %225, %225 : vector<8x1xf32>
    %232 = arith.subf %230, %231 : vector<8x1xf32>
    %233 = vector.broadcast %225 : vector<8x1xf32> to vector<8x128xf32>
    %234 = arith.subf %217, %233 : vector<8x128xf32>
    %cst_124 = arith.constant 9.99999974E-6 : f32
    %235 = vector.broadcast %cst_124 : f32 to vector<8x1xf32>
    %236 = arith.addf %232, %235 : vector<8x1xf32>
    %237 = math.rsqrt %236 : vector<8x1xf32>
    %238 = vector.broadcast %237 : vector<8x1xf32> to vector<8x128xf32>
    %239 = arith.mulf %234, %238 : vector<8x128xf32>
    %240 = vector.broadcast %219 : vector<1x128xf32> to vector<8x128xf32>
    %241 = arith.mulf %239, %240 : vector<8x128xf32>
    %242 = vector.broadcast %221 : vector<1x128xf32> to vector<8x128xf32>
    %243 = arith.addf %241, %242 : vector<8x128xf32>
    %c0_125 = arith.constant 0 : index
    %c0_126 = arith.constant 0 : index
    %244 = vector.load %arg14[%c0_125, %c0_126] : memref<128x128xf32, #tpu.memory_space<vmem>>, vector<128x128xf32>
    %cst_127 = arith.constant dense<0.000000e+00> : vector<8x128xf32>
    %245 = tpu.matmul %243, %244, %cst_127 {dimension_numbers = #tpu.dot_dimension_numbers<[1], [0], [0], [1], [0, 0, 1, 1], [], []>} : vector<8x128xf32>, vector<128x128xf32>, vector<8x128xf32> -> vector<8x128xf32>
    %c0_128 = arith.constant 0 : index
    %c0_129 = arith.constant 0 : index
    %246 = vector.load %arg15[%c0_128, %c0_129] : memref<1x128xf32, #tpu.memory_space<vmem>>, vector<1x128xf32>
    %247 = vector.broadcast %246 : vector<1x128xf32> to vector<8x128xf32>
    %248 = arith.addf %245, %247 : vector<8x128xf32>
    %c0_130 = arith.constant 0 : index
    %c0_131 = arith.constant 0 : index
    %c0_132 = arith.constant 0 : index
    %249 = vector.load %arg16[%c0_130, %c0_131, %c0_132] : memref<1x8x128xf32, #tpu.memory_space<vmem>>, vector<1x8x128xf32>
    %250 = vector.shape_cast %249 : vector<1x8x128xf32> to vector<8x128xf32>
    %251 = vector.shape_cast %248 : vector<8x128xf32> to vector<1x8x128xf32>
    tpu.vector_store %arg16[%c0_130, %c0_131, %c0_132], %251 {strides = array<i32>} : memref<1x8x128xf32, #tpu.memory_space<vmem>>, vector<1x8x128xf32>,
    return
  }
  func.func @transform_0(%arg0: i32) -> (i32, i32, i32) {
    %c0_i32 = arith.constant 0 : i32
    %c0_i32_0 = arith.constant 0 : i32
    %c0_i32_1 = arith.constant 0 : i32
    return %arg0, %c0_i32, %c0_i32_0 : i32, i32, i32
  }
  func.func @transform_1(%arg0: i32) -> (i32, i32, i32) {
    %c0_i32 = arith.constant 0 : i32
    %c0_i32_0 = arith.constant 0 : i32
    %c0_i32_1 = arith.constant 0 : i32
    %c0_i32_2 = arith.constant 0 : i32
    return %c0_i32, %c0_i32_0, %c0_i32_1 : i32, i32, i32
  }
  func.func @transform_2(%arg0: i32) -> (i32, i32, i32) {
    %c0_i32 = arith.constant 0 : i32
    %c0_i32_0 = arith.constant 0 : i32
    %c0_i32_1 = arith.constant 0 : i32
    %c0_i32_2 = arith.constant 0 : i32
    return %c0_i32, %c0_i32_0, %c0_i32_1 : i32, i32, i32
  }
  func.func @transform_3(%arg0: i32) -> (i32, i32, i32) {
    %c0_i32 = arith.constant 0 : i32
    %c0_i32_0 = arith.constant 0 : i32
    %c0_i32_1 = arith.constant 0 : i32
    %c0_i32_2 = arith.constant 0 : i32
    return %c0_i32, %c0_i32_0, %c0_i32_1 : i32, i32, i32
  }
  func.func @transform_4(%arg0: i32) -> (i32, i32, i32) {
    %c0_i32 = arith.constant 0 : i32
    %c0_i32_0 = arith.constant 0 : i32
    %c0_i32_1 = arith.constant 0 : i32
    %c0_i32_2 = arith.constant 0 : i32
    return %c0_i32, %c0_i32_0, %c0_i32_1 : i32, i32, i32
  }
  func.func @transform_5(%arg0: i32) -> (i32, i32, i32) {
    %c0_i32 = arith.constant 0 : i32
    %c0_i32_0 = arith.constant 0 : i32
    %c0_i32_1 = arith.constant 0 : i32
    %c0_i32_2 = arith.constant 0 : i32
    return %c0_i32, %c0_i32_0, %c0_i32_1 : i32, i32, i32
  }
  func.func @transform_6(%arg0: i32) -> (i32, i32, i32) {
    %c0_i32 = arith.constant 0 : i32
    %c0_i32_0 = arith.constant 0 : i32
    %c0_i32_1 = arith.constant 0 : i32
    %c0_i32_2 = arith.constant 0 : i32
    return %c0_i32, %c0_i32_0, %c0_i32_1 : i32, i32, i32
  }
  func.func @transform_7(%arg0: i32) -> (i32, i32, i32) {
    %c0_i32 = arith.constant 0 : i32
    %c0_i32_0 = arith.constant 0 : i32
    %c0_i32_1 = arith.constant 0 : i32
    %c0_i32_2 = arith.constant 0 : i32
    return %c0_i32, %c0_i32_0, %c0_i32_1 : i32, i32, i32
  }
  func.func @transform_8(%arg0: i32) -> (i32, i32, i32) {
    %c0_i32 = arith.constant 0 : i32
    %c0_i32_0 = arith.constant 0 : i32
    %c0_i32_1 = arith.constant 0 : i32
    %c0_i32_2 = arith.constant 0 : i32
    return %c0_i32, %c0_i32_0, %c0_i32_1 : i32, i32, i32
  }
  func.func @transform_9(%arg0: i32) -> (i32, i32, i32) {
    %c0_i32 = arith.constant 0 : i32
    %c0_i32_0 = arith.constant 0 : i32
    %c0_i32_1 = arith.constant 0 : i32
    %c0_i32_2 = arith.constant 0 : i32
    return %c0_i32, %c0_i32_0, %c0_i32_1 : i32, i32, i32
  }
  func.func @transform_10(%arg0: i32) -> (i32, i32, i32) {
    %c0_i32 = arith.constant 0 : i32
    %c0_i32_0 = arith.constant 0 : i32
    %c0_i32_1 = arith.constant 0 : i32
    %c0_i32_2 = arith.constant 0 : i32
    return %c0_i32, %c0_i32_0, %c0_i32_1 : i32, i32, i32
  }
  func.func @transform_11(%arg0: i32) -> (i32, i32, i32) {
    %c0_i32 = arith.constant 0 : i32
    %c0_i32_0 = arith.constant 0 : i32
    %c0_i32_1 = arith.constant 0 : i32
    %c0_i32_2 = arith.constant 0 : i32
    return %c0_i32, %c0_i32_0, %c0_i32_1 : i32, i32, i32
  }
  func.func @transform_12(%arg0: i32) -> (i32, i32, i32) {
    %c0_i32 = arith.constant 0 : i32
    %c0_i32_0 = arith.constant 0 : i32
    %c0_i32_1 = arith.constant 0 : i32
    %c0_i32_2 = arith.constant 0 : i32
    return %c0_i32, %c0_i32_0, %c0_i32_1 : i32, i32, i32
  }
  func.func @transform_13(%arg0: i32) -> (i32, i32) {
    %c0_i32 = arith.constant 0 : i32
    %c0_i32_0 = arith.constant 0 : i32
    %c0_i32_1 = arith.constant 0 : i32
    return %c0_i32, %c0_i32_0 : i32, i32
  }
  func.func @transform_14(%arg0: i32) -> (i32, i32) {
    %c0_i32 = arith.constant 0 : i32
    %c0_i32_0 = arith.constant 0 : i32
    %c0_i32_1 = arith.constant 0 : i32
    return %c0_i32, %c0_i32_0 : i32, i32
  }
  func.func @transform_15(%arg0: i32) -> (i32, i32, i32) {
    %c0_i32 = arith.constant 0 : i32
    %c0_i32_0 = arith.constant 0 : i32
    %c0_i32_1 = arith.constant 0 : i32
    return %arg0, %c0_i32, %c0_i32_0 : i32, i32, i32
  }
}

</mosaic_0001>

<llo_original>
// kernel: transformer_forward.1
$region0: #{transformer_forward.1}
  #allocation0 [shape = 'u32[]', space=smem, size = 0x4, offset = 0x4, fixed_abs, tag = 'smem constant byte address 0x4 - core index']
  #allocation1 [shape = 'u32[144,128]{1,0:T(1,128)}', space=vmem, size = 0x12000, scoped, tag = 'internal scratch']
  %s0 = inlined_call_operand.vmem [shape: f32[2,8,128], index: 0, kind: input, shape index: {}]
  %s1 = inlined_call_operand.hbm [shape: f32[2,128,384], index: 1, kind: input, shape index: {}]
  %s2 = inlined_call_operand.hbm [shape: f32[2,1,384], index: 2, kind: input, shape index: {}]
  %s3 = inlined_call_operand.hbm [shape: f32[2,128,128], index: 3, kind: input, shape index: {}]
  %s4 = inlined_call_operand.hbm [shape: f32[2,1,128], index: 4, kind: input, shape index: {}]
  %s5 = inlined_call_operand.hbm [shape: f32[2,1,128], index: 5, kind: input, shape index: {}]
  %s6 = inlined_call_operand.hbm [shape: f32[2,1,128], index: 6, kind: input, shape index: {}]
  %s7 = inlined_call_operand.hbm [shape: f32[2,128,128], index: 7, kind: input, shape index: {}]
  %s8 = inlined_call_operand.hbm [shape: f32[2,1,128], index: 8, kind: input, shape index: {}]
  %s9 = inlined_call_operand.hbm [shape: f32[2,128,128], index: 9, kind: input, shape index: {}]
  %s10 = inlined_call_operand.hbm [shape: f32[2,1,128], index: 10, kind: input, shape index: {}]
  %s11 = inlined_call_operand.hbm [shape: f32[2,1,128], index: 11, kind: input, shape index: {}]
  %s12 = inlined_call_operand.hbm [shape: f32[2,1,128], index: 12, kind: input, shape index: {}]
  %s13 = inlined_call_operand.hbm [shape: f32[128,128], index: 13, kind: input, shape index: {}]
  %s14 = inlined_call_operand.hbm [shape: f32[1,128], index: 14, kind: input, shape index: {}]
  %s15 = inlined_call_operand.vmem [shape: f32[2,8,128], index: 15, kind: output, shape index: {}]
  %s16 = sld [smem:[#allocation0]]
  $region149: #{transformer_forward.1} parent=0
    _
  %s18 = ssub.s32 1, %s16
  %s19 = scalar_select 0, %s18, %s16
  $region1: #{transformer_forward.1} parent=0
    #allocation2 [shape = 'u8[393216]{0}', space=vmem, size = 0x60000, scoped, tag = 'input window, operand 1, single buffered']
    #allocation3 [shape = 's32[2]{0}', space=sflag, size = 0x8, scoped, tag = 'scoped memory for transformer_forward.1']
    #allocation4 [shape = 'u8[3072]{0}', space=vmem, size = 0xc00, scoped, tag = 'input window, operand 2, single buffered']
    #allocation5 [shape = 's32[1]{0}', space=sflag, size = 0x4, scoped, tag = 'scoped memory for transformer_forward.1']
    #allocation6 [shape = 'u8[131072]{0}', space=vmem, size = 0x20000, scoped, tag = 'input window, operand 3, single buffered']
    #allocation7 [shape = 'u8[1024]{0}', space=vmem, size = 0x400, scoped, tag = 'input window, operand 4, single buffered']
    #allocation8 [shape = 's32[1]{0}', space=sflag, size = 0x4, scoped, tag = 'scoped memory for transformer_forward.1']
    #allocation9 [shape = 'u8[1024]{0}', space=vmem, size = 0x400, scoped, tag = 'input window, operand 5, single buffered']
    #allocation10 [shape = 'u8[1024]{0}', space=vmem, size = 0x400, scoped, tag = 'input window, operand 6, single buffered']
    #allocation11 [shape = 's32[1]{0}', space=sflag, size = 0x4, scoped, tag = 'scoped memory for transformer_forward.1']
    #allocation12 [shape = 'u8[131072]{0}', space=vmem, size = 0x20000, scoped, tag = 'input window, operand 7, single buffered']
    #allocation13 [shape = 'u8[1024]{0}', space=vmem, size = 0x400, scoped, tag = 'input window, operand 8, single buffered']
    #allocation14 [shape = 's32[1]{0}', space=sflag, size = 0x4, scoped, tag = 'scoped memory for transformer_forward.1']
    #allocation15 [shape = 'u8[131072]{0}', space=vmem, size = 0x20000, scoped, tag = 'input window, operand 9, single buffered']
    #allocation16 [shape = 'u8[1024]{0}', space=vmem, size = 0x400, scoped, tag = 'input window, operand 10, single buffered']
    #allocation17 [shape = 's32[1]{0}', space=sflag, size = 0x4, scoped, tag = 'scoped memory for transformer_forward.1']
    #allocation18 [shape = 'u8[1024]{0}', space=vmem, size = 0x400, scoped, tag = 'input window, operand 11, single buffered']
    #allocation19 [shape = 'u8[1024]{0}', space=vmem, size = 0x400, scoped, tag = 'input window, operand 12, single buffered']
    #allocation20 [shape = 's32[1]{0}', space=sflag, size = 0x4, scoped, tag = 'scoped memory for transformer_forward.1']
    #allocation21 [shape = 'u8[65536]{0}', space=vmem, size = 0x10000, scoped, tag = 'input window, operand 13, single buffered']
    #allocation22 [shape = 'u8[512]{0}', space=vmem, size = 0x400, scoped, tag = 'input window, operand 14, single buffered']
    #allocation23 [shape = 's32[1]{0}', space=sflag, size = 0x4, scoped, tag = 'scoped memory for transformer_forward.1']
    %20 = vsyncpa [#allocation3], 0
    %21 = vsyncpa [#allocation5], 0
    %22 = vsyncpa [#allocation8], 0
    %23 = vsyncpa [#allocation11], 0
    %24 = vsyncpa [#allocation14], 0
    %25 = vsyncpa [#allocation17], 0
    %26 = vsyncpa [#allocation20], 0
    %27 = vsyncpa [#allocation23], 0
    loop: start=0, step=1, limit=4
    $region2: #{transformer_forward.1} parent=1 // loop_pre_header
      _
    $region3: #{transformer_forward.1} parent=1 // loop_header
      %s29 = sphi 0, %s33
      %p30 = scmp.ge.s32.totalorder %s29, 4
      %s39 = sphi 0, %s41
      %s42 = sphi 0, %s39
      %s43 = sphi 0, %s42
      %s59 = sphi 0, %s43
      %s63 = sphi 0, %s63
      %s65 = sphi 0, %s63
      %s66 = sphi 0, %s65
      %s80 = sphi 0, %s66
      %s84 = sphi 0, %s84
      %s86 = sphi 0, %s84
      %s87 = sphi 0, %s86
      %s101 = sphi 0, %s87
      %s105 = sphi 0, %s105
      %s107 = sphi 0, %s105
      %s108 = sphi 0, %s107
      %s122 = sphi 0, %s108
      %s126 = sphi 0, %s126
      %s128 = sphi 0, %s126
      %s129 = sphi 0, %s128
      %s143 = sphi 0, %s129
      %s147 = sphi 0, %s147
      %s149 = sphi 0, %s147
      %s150 = sphi 0, %s149
      %s164 = sphi 0, %s150
      %s168 = sphi 0, %s168
      %s170 = sphi 0, %s168
      %s171 = sphi 0, %s170
      %s185 = sphi 0, %s171
      %s189 = sphi 0, %s189
      %s191 = sphi 0, %s189
      %s192 = sphi 0, %s191
      %s206 = sphi 0, %s192
      %s210 = sphi 0, %s210
      %s212 = sphi 0, %s210
      %s213 = sphi 0, %s212
      %s227 = sphi 0, %s213
      %s231 = sphi 0, %s231
      %s233 = sphi 0, %s231
      %s234 = sphi 0, %s233
      %s248 = sphi 0, %s234
      %s252 = sphi 0, %s252
      %s254 = sphi 0, %s252
      %s255 = sphi 0, %s254
      %s269 = sphi 0, %s255
      %s273 = sphi 0, %s273
      %s275 = sphi 0, %s273
      %s276 = sphi 0, %s275
      %s290 = sphi 0, %s276
      %s294 = sphi 0, %s294
      %s296 = sphi 0, %s294
      %s297 = sphi 0, %s296
      %s311 = sphi 0, %s297
      %s315 = sphi 0, %s315
      %s317 = sphi 0, %s315
      %s318 = sphi 0, %s317
      %s332 = sphi 0, %s318
      %s336 = sphi 0, %s336
      %s338 = sphi 0, %s336
      %s339 = sphi 0, %s338
      %s353 = sphi 0, %s339
      %s359 = sphi 0, %s361
      %s362 = sphi 0, %s359
      %s363 = sphi 0, %s362
      %s379 = sphi 0, %s363
    $region4: #{transformer_forward.1} parent=1 // loop_header_branch
      %32 = sbr.rel (%p30) target = $region8
    $region5: #{transformer_forward.1} parent=1 // loop_body
      %s34 = ssub.s32 %s29, 1
      %s35 = ssub.s32 %s29, 2
      %s36 = sadd.s32 %s29, 1
      %s37 = ssub.s32 %s29, %s36
      %p38 = scmp.eq.s32.totalorder %s37, 0
      %s40 = sadd.s32 %s39, 1
      %s41 = scalar_select %p38, %s39, %s40
      %p44 = pneg %p38
      %p45 = scmp.eq.s32.totalorder %s29, 1
      %p46 = por %p44, %p45
      %p47 = scmp.ne.s32.totalorder %s39, %s42
      %p48 = scmp.eq.s32.totalorder %s29, 0
      %p49 = por %p47, %p48
      %p50 = scmp.ne.s32.totalorder %s39, %s42
      %p51 = scmp.eq.s32.totalorder %s34, 1
      %p52 = por %p50, %p51
      %p53 = scmp.ne.s32.totalorder %s42, %s43
      %p54 = scmp.eq.s32.totalorder %s34, 0
      %p55 = por %p53, %p54
      %p56 = scmp.ne.s32.totalorder %s42, %s43
      %p57 = scmp.eq.s32.totalorder %s35, 1
      %p58 = por %p56, %p57
      %p60 = scmp.ne.s32.totalorder %s43, %s59
      %p61 = scmp.eq.s32.totalorder %s35, 0
      %p62 = por %p60, %p61
      %s64 = sadd.s32 %s63, 1
      %p67 = scmp.eq.s32.totalorder %s29, 1
      %p68 = scmp.ne.s32.totalorder %s63, %s65
      %p69 = scmp.eq.s32.totalorder %s29, 0
      %p70 = por %p68, %p69
      %p71 = scmp.ne.s32.totalorder %s63, %s65
      %p72 = scmp.eq.s32.totalorder %s34, 1
      %p73 = por %p71, %p72
      %p74 = scmp.ne.s32.totalorder %s65, %s66
      %p75 = scmp.eq.s32.totalorder %s34, 0
      %p76 = por %p74, %p75
      %p77 = scmp.ne.s32.totalorder %s65, %s66
      %p78 = scmp.eq.s32.totalorder %s35, 1
      %p79 = por %p77, %p78
      %p81 = scmp.ne.s32.totalorder %s66, %s80
      %p82 = scmp.eq.s32.totalorder %s35, 0
      %p83 = por %p81, %p82
      %s85 = sadd.s32 %s84, 1
      %p88 = scmp.eq.s32.totalorder %s29, 1
      %p89 = scmp.ne.s32.totalorder %s84, %s86
      %p90 = scmp.eq.s32.totalorder %s29, 0
      %p91 = por %p89, %p90
      %p92 = scmp.ne.s32.totalorder %s84, %s86
      %p93 = scmp.eq.s32.totalorder %s34, 1
      %p94 = por %p92, %p93
      %p95 = scmp.ne.s32.totalorder %s86, %s87
      %p96 = scmp.eq.s32.totalorder %s34, 0
      %p97 = por %p95, %p96
      %p98 = scmp.ne.s32.totalorder %s86, %s87
      %p99 = scmp.eq.s32.totalorder %s35, 1
      %p100 = por %p98, %p99
      %p102 = scmp.ne.s32.totalorder %s87, %s101
      %p103 = scmp.eq.s32.totalorder %s35, 0
      %p104 = por %p102, %p103
      %s106 = sadd.s32 %s105, 1
      %p109 = scmp.eq.s32.totalorder %s29, 1
      %p110 = scmp.ne.s32.totalorder %s105, %s107
      %p111 = scmp.eq.s32.totalorder %s29, 0
      %p112 = por %p110, %p111
      %p113 = scmp.ne.s32.totalorder %s105, %s107
      %p114 = scmp.eq.s32.totalorder %s34, 1
      %p115 = por %p113, %p114
      %p116 = scmp.ne.s32.totalorder %s107, %s108
      %p117 = scmp.eq.s32.totalorder %s34, 0
      %p118 = por %p116, %p117
      %p119 = scmp.ne.s32.totalorder %s107, %s108
      %p120 = scmp.eq.s32.totalorder %s35, 1
      %p121 = por %p119, %p120
      %p123 = scmp.ne.s32.totalorder %s108, %s122
      %p124 = scmp.eq.s32.totalorder %s35, 0
      %p125 = por %p123, %p124
      %s127 = sadd.s32 %s126, 1
      %p130 = scmp.eq.s32.totalorder %s29, 1
      %p131 = scmp.ne.s32.totalorder %s126, %s128
      %p132 = scmp.eq.s32.totalorder %s29, 0
      %p133 = por %p131, %p132
      %p134 = scmp.ne.s32.totalorder %s126, %s128
      %p135 = scmp.eq.s32.totalorder %s34, 1
      %p136 = por %p134, %p135
      %p137 = scmp.ne.s32.totalorder %s128, %s129
      %p138 = scmp.eq.s32.totalorder %s34, 0
      %p139 = por %p137, %p138
      %p140 = scmp.ne.s32.totalorder %s128, %s129
      %p141 = scmp.eq.s32.totalorder %s35, 1
      %p142 = por %p140, %p141
      %p144 = scmp.ne.s32.totalorder %s129, %s143
      %p145 = scmp.eq.s32.totalorder %s35, 0
      %p146 = por %p144, %p145
      %s148 = sadd.s32 %s147, 1
      %p151 = scmp.eq.s32.totalorder %s29, 1
      %p152 = scmp.ne.s32.totalorder %s147, %s149
      %p153 = scmp.eq.s32.totalorder %s29, 0
      %p154 = por %p152, %p153
      %p155 = scmp.ne.s32.totalorder %s147, %s149
      %p156 = scmp.eq.s32.totalorder %s34, 1
      %p157 = por %p155, %p156
      %p158 = scmp.ne.s32.totalorder %s149, %s150
      %p159 = scmp.eq.s32.totalorder %s34, 0
      %p160 = por %p158, %p159
      %p161 = scmp.ne.s32.totalorder %s149, %s150
      %p162 = scmp.eq.s32.totalorder %s35, 1
      %p163 = por %p161, %p162
      %p165 = scmp.ne.s32.totalorder %s150, %s164
      %p166 = scmp.eq.s32.totalorder %s35, 0
      %p167 = por %p165, %p166
      %s169 = sadd.s32 %s168, 1
      %p172 = scmp.eq.s32.totalorder %s29, 1
      %p173 = scmp.ne.s32.totalorder %s168, %s170
      %p174 = scmp.eq.s32.totalorder %s29, 0
      %p175 = por %p173, %p174
      %p176 = scmp.ne.s32.totalorder %s168, %s170
      %p177 = scmp.eq.s32.totalorder %s34, 1
      %p178 = por %p176, %p177
      %p179 = scmp.ne.s32.totalorder %s170, %s171
      %p180 = scmp.eq.s32.totalorder %s34, 0
      %p181 = por %p179, %p180
      %p182 = scmp.ne.s32.totalorder %s170, %s171
      %p183 = scmp.eq.s32.totalorder %s35, 1
      %p184 = por %p182, %p183
      %p186 = scmp.ne.s32.totalorder %s171, %s185
      %p187 = scmp.eq.s32.totalorder %s35, 0
      %p188 = por %p186, %p187
      %s190 = sadd.s32 %s189, 1
      %p193 = scmp.eq.s32.totalorder %s29, 1
      %p194 = scmp.ne.s32.totalorder %s189, %s191
      %p195 = scmp.eq.s32.totalorder %s29, 0
      %p196 = por %p194, %p195
      %p197 = scmp.ne.s32.totalorder %s189, %s191
      %p198 = scmp.eq.s32.totalorder %s34, 1
      %p199 = por %p197, %p198
      %p200 = scmp.ne.s32.totalorder %s191, %s192
      %p201 = scmp.eq.s32.totalorder %s34, 0
      %p202 = por %p200, %p201
      %p203 = scmp.ne.s32.totalorder %s191, %s192
      %p204 = scmp.eq.s32.totalorder %s35, 1
      %p205 = por %p203, %p204
      %p207 = scmp.ne.s32.totalorder %s192, %s206
      %p208 = scmp.eq.s32.totalorder %s35, 0
      %p209 = por %p207, %p208
      %s211 = sadd.s32 %s210, 1
      %p214 = scmp.eq.s32.totalorder %s29, 1
      %p215 = scmp.ne.s32.totalorder %s210, %s212
      %p216 = scmp.eq.s32.totalorder %s29, 0
      %p217 = por %p215, %p216
      %p218 = scmp.ne.s32.totalorder %s210, %s212
      %p219 = scmp.eq.s32.totalorder %s34, 1
      %p220 = por %p218, %p219
      %p221 = scmp.ne.s32.totalorder %s212, %s213
      %p222 = scmp.eq.s32.totalorder %s34, 0
      %p223 = por %p221, %p222
      %p224 = scmp.ne.s32.totalorder %s212, %s213
      %p225 = scmp.eq.s32.totalorder %s35, 1
      %p226 = por %p224, %p225
      %p228 = scmp.ne.s32.totalorder %s213, %s227
      %p229 = scmp.eq.s32.totalorder %s35, 0
      %p230 = por %p228, %p229
      %s232 = sadd.s32 %s231, 1
      %p235 = scmp.eq.s32.totalorder %s29, 1
      %p236 = scmp.ne.s32.totalorder %s231, %s233
      %p237 = scmp.eq.s32.totalorder %s29, 0
      %p238 = por %p236, %p237
      %p239 = scmp.ne.s32.totalorder %s231, %s233
      %p240 = scmp.eq.s32.totalorder %s34, 1
      %p241 = por %p239, %p240
      %p242 = scmp.ne.s32.totalorder %s233, %s234
      %p243 = scmp.eq.s32.totalorder %s34, 0
      %p244 = por %p242, %p243
      %p245 = scmp.ne.s32.totalorder %s233, %s234
      %p246 = scmp.eq.s32.totalorder %s35, 1
      %p247 = por %p245, %p246
      %p249 = scmp.ne.s32.totalorder %s234, %s248
      %p250 = scmp.eq.s32.totalorder %s35, 0
      %p251 = por %p249, %p250
      %s253 = sadd.s32 %s252, 1
      %p256 = scmp.eq.s32.totalorder %s29, 1
      %p257 = scmp.ne.s32.totalorder %s252, %s254
      %p258 = scmp.eq.s32.totalorder %s29, 0
      %p259 = por %p257, %p258
      %p260 = scmp.ne.s32.totalorder %s252, %s254
      %p261 = scmp.eq.s32.totalorder %s34, 1
      %p262 = por %p260, %p261
      %p263 = scmp.ne.s32.totalorder %s254, %s255
      %p264 = scmp.eq.s32.totalorder %s34, 0
      %p265 = por %p263, %p264
      %p266 = scmp.ne.s32.totalorder %s254, %s255
      %p267 = scmp.eq.s32.totalorder %s35, 1
      %p268 = por %p266, %p267
      %p270 = scmp.ne.s32.totalorder %s255, %s269
      %p271 = scmp.eq.s32.totalorder %s35, 0
      %p272 = por %p270, %p271
      %s274 = sadd.s32 %s273, 1
      %p277 = scmp.eq.s32.totalorder %s29, 1
      %p278 = scmp.ne.s32.totalorder %s273, %s275
      %p279 = scmp.eq.s32.totalorder %s29, 0
      %p280 = por %p278, %p279
      %p281 = scmp.ne.s32.totalorder %s273, %s275
      %p282 = scmp.eq.s32.totalorder %s34, 1
      %p283 = por %p281, %p282
      %p284 = scmp.ne.s32.totalorder %s275, %s276
      %p285 = scmp.eq.s32.totalorder %s34, 0
      %p286 = por %p284, %p285
      %p287 = scmp.ne.s32.totalorder %s275, %s276
      %p288 = scmp.eq.s32.totalorder %s35, 1
      %p289 = por %p287, %p288
      %p291 = scmp.ne.s32.totalorder %s276, %s290
      %p292 = scmp.eq.s32.totalorder %s35, 0
      %p293 = por %p291, %p292
      %s295 = sadd.s32 %s294, 1
      %p298 = scmp.eq.s32.totalorder %s29, 1
      %p299 = scmp.ne.s32.totalorder %s294, %s296
      %p300 = scmp.eq.s32.totalorder %s29, 0
      %p301 = por %p299, %p300
      %p302 = scmp.ne.s32.totalorder %s294, %s296
      %p303 = scmp.eq.s32.totalorder %s34, 1
      %p304 = por %p302, %p303
      %p305 = scmp.ne.s32.totalorder %s296, %s297
      %p306 = scmp.eq.s32.totalorder %s34, 0
      %p307 = por %p305, %p306
      %p308 = scmp.ne.s32.totalorder %s296, %s297
      %p309 = scmp.eq.s32.totalorder %s35, 1
      %p310 = por %p308, %p309
      %p312 = scmp.ne.s32.totalorder %s297, %s311
      %p313 = scmp.eq.s32.totalorder %s35, 0
      %p314 = por %p312, %p313
      %s316 = sadd.s32 %s315, 1
      %p319 = scmp.eq.s32.totalorder %s29, 1
      %p320 = scmp.ne.s32.totalorder %s315, %s317
      %p321 = scmp.eq.s32.totalorder %s29, 0
      %p322 = por %p320, %p321
      %p323 = scmp.ne.s32.totalorder %s315, %s317
      %p324 = scmp.eq.s32.totalorder %s34, 1
      %p325 = por %p323, %p324
      %p326 = scmp.ne.s32.totalorder %s317, %s318
      %p327 = scmp.eq.s32.totalorder %s34, 0
      %p328 = por %p326, %p327
      %p329 = scmp.ne.s32.totalorder %s317, %s318
      %p330 = scmp.eq.s32.totalorder %s35, 1
      %p331 = por %p329, %p330
      %p333 = scmp.ne.s32.totalorder %s318, %s332
      %p334 = scmp.eq.s32.totalorder %s35, 0
      %p335 = por %p333, %p334
      %s337 = sadd.s32 %s336, 1
      %p340 = scmp.eq.s32.totalorder %s29, 1
      %p341 = scmp.ne.s32.totalorder %s336, %s338
      %p342 = scmp.eq.s32.totalorder %s29, 0
      %p343 = por %p341, %p342
      %p344 = scmp.ne.s32.totalorder %s336, %s338
      %p345 = scmp.eq.s32.totalorder %s34, 1
      %p346 = por %p344, %p345
      %p347 = scmp.ne.s32.totalorder %s338, %s339
      %p348 = scmp.eq.s32.totalorder %s34, 0
      %p349 = por %p347, %p348
      %p350 = scmp.ne.s32.totalorder %s338, %s339
      %p351 = scmp.eq.s32.totalorder %s35, 1
      %p352 = por %p350, %p351
      %p354 = scmp.ne.s32.totalorder %s339, %s353
      %p355 = scmp.eq.s32.totalorder %s35, 0
      %p356 = por %p354, %p355
      %s357 = ssub.s32 %s29, %s36
      %p358 = scmp.eq.s32.totalorder %s357, 0
      %s360 = sadd.s32 %s359, 1
      %s361 = scalar_select %p358, %s359, %s360
      %p364 = pneg %p358
      %p365 = scmp.eq.s32.totalorder %s29, 1
      %p366 = por %p364, %p365
      %p367 = scmp.ne.s32.totalorder %s359, %s362
      %p368 = scmp.eq.s32.totalorder %s29, 0
      %p369 = por %p367, %p368
      %p370 = scmp.ne.s32.totalorder %s359, %s362
      %p371 = scmp.eq.s32.totalorder %s34, 1
      %p372 = por %p370, %p371
      %p373 = scmp.ne.s32.totalorder %s362, %s363
      %p374 = scmp.eq.s32.totalorder %s34, 0
      %p375 = por %p373, %p374
      %p376 = scmp.ne.s32.totalorder %s362, %s363
      %p377 = scmp.eq.s32.totalorder %s35, 1
      %p378 = por %p376, %p377
      %p380 = scmp.ne.s32.totalorder %s363, %s379
      %p381 = scmp.eq.s32.totalorder %s35, 0
      %p382 = por %p380, %p381
      %p383 = scmp.le.s32.totalorder 1, %s29
      %p384 = scmp.lt.s32.totalorder %s29, 3
      %p385 = pnand %p383, %p384
      %p386 = pneg %p385
      // Predicated region
      $region9: #{transformer_forward.1} parent=5 // pred_check
        _
      $region10: #{transformer_forward.1} parent=5 // pred_check_branch
        %388 = sbr.rel (%p385) target = $region12
      $region11: #{transformer_forward.1} parent=5 // pred_region
        %s389 = ssub.s32 %s29, 1
        // Predicated region
        $region13: #{transformer_forward.1} parent=11 // pred_check
          %p390 = pneg %p76
        $region14: #{transformer_forward.1} parent=11 // pred_check_branch
          %392 = sbr.rel (%p390) target = $region16
        $region15: #{transformer_forward.1} parent=11 // pred_region
          %s394 = ssub.s32 12288, 12288
          %395 = vsyncadd [#allocation3], %s394
          %s396 = sshll.u32 [#allocation2], 4
          %s397 = int_to_ptr.vmem [resolvable:$true] %s396
          %402 = dma.hbm_to_vmem [thread:$0]  %s1, 12288, %s397, [#allocation3], 384, 384, 24
        $region16: #{transformer_forward.1} parent=11 // pred_fallthru
          _
        // Predicated region
        $region17: #{transformer_forward.1} parent=11 // pred_check
          %p403 = pneg %p97
        $region18: #{transformer_forward.1} parent=11 // pred_check_branch
          %405 = sbr.rel (%p403) target = $region20
        $region19: #{transformer_forward.1} parent=11 // pred_region
          %s407 = ssub.s32 96, 96
          %408 = vsyncadd [#allocation5], %s407
          %s409 = sshll.u32 [#allocation4], 4
          %s410 = int_to_ptr.vmem [resolvable:$true] %s409
          %415 = dma.hbm_to_vmem [thread:$0]  %s2, 96, %s410, [#allocation5], 48, 48, 3
        $region20: #{transformer_forward.1} parent=11 // pred_fallthru
          _
        // Predicated region
        $region21: #{transformer_forward.1} parent=11 // pred_check
          %p416 = pneg %p118
        $region22: #{transformer_forward.1} parent=11 // pred_check_branch
          %418 = sbr.rel (%p416) target = $region24
        $region23: #{transformer_forward.1} parent=11 // pred_region
          %s420 = ssub.s32 4096, 4096
          %421 = vsyncadd [#allocation5], %s420
          %s422 = sshll.u32 [#allocation6], 4
          %s423 = int_to_ptr.vmem [resolvable:$true] %s422
          %428 = dma.hbm_to_vmem [thread:$0]  %s3, 4096, %s423, [#allocation5], 128, 128, 8
        $region24: #{transformer_forward.1} parent=11 // pred_fallthru
          _
        // Predicated region
        $region25: #{transformer_forward.1} parent=11 // pred_check
          %p429 = pneg %p139
        $region26: #{transformer_forward.1} parent=11 // pred_check_branch
          %431 = sbr.rel (%p429) target = $region28
        $region27: #{transformer_forward.1} parent=11 // pred_region
          %s433 = ssub.s32 32, 32
          %434 = vsyncadd [#allocation8], %s433
          %s435 = sshll.u32 [#allocation7], 4
          %s436 = int_to_ptr.vmem [resolvable:$true] %s435
          %441 = dma.hbm_to_vmem [thread:$0]  %s4, 32, %s436, [#allocation8], 16, 16, 1
        $region28: #{transformer_forward.1} parent=11 // pred_fallthru
          _
        // Predicated region
        $region29: #{transformer_forward.1} parent=11 // pred_check
          %p442 = pneg %p160
        $region30: #{transformer_forward.1} parent=11 // pred_check_branch
          %444 = sbr.rel (%p442) target = $region32
        $region31: #{transformer_forward.1} parent=11 // pred_region
          %s446 = ssub.s32 32, 32
          %447 = vsyncadd [#allocation8], %s446
          %s448 = sshll.u32 [#allocation9], 4
          %s449 = int_to_ptr.vmem [resolvable:$true] %s448
          %454 = dma.hbm_to_vmem [thread:$0]  %s5, 32, %s449, [#allocation8], 16, 16, 1
        $region32: #{transformer_forward.1} parent=11 // pred_fallthru
          _
        // Predicated region
        $region33: #{transformer_forward.1} parent=11 // pred_check
          %p455 = pneg %p181
        $region34: #{transformer_forward.1} parent=11 // pred_check_branch
          %457 = sbr.rel (%p455) target = $region36
        $region35: #{transformer_forward.1} parent=11 // pred_region
          %s459 = ssub.s32 32, 32
          %460 = vsyncadd [#allocation11], %s459
          %s461 = sshll.u32 [#allocation10], 4
          %s462 = int_to_ptr.vmem [resolvable:$true] %s461
          %467 = dma.hbm_to_vmem [thread:$0]  %s6, 32, %s462, [#allocation11], 16, 16, 1
        $region36: #{transformer_forward.1} parent=11 // pred_fallthru
          _
        // Predicated region
        $region37: #{transformer_forward.1} parent=11 // pred_check
          %p468 = pneg %p202
        $region38: #{transformer_forward.1} parent=11 // pred_check_branch
          %470 = sbr.rel (%p468) target = $region40
        $region39: #{transformer_forward.1} parent=11 // pred_region
          %s472 = ssub.s32 4096, 4096
          %473 = vsyncadd [#allocation11], %s472
          %s474 = sshll.u32 [#allocation12], 4
          %s475 = int_to_ptr.vmem [resolvable:$true] %s474
          %480 = dma.hbm_to_vmem [thread:$0]  %s7, 4096, %s475, [#allocation11], 128, 128, 8
        $region40: #{transformer_forward.1} parent=11 // pred_fallthru
          _
        // Predicated region
        $region41: #{transformer_forward.1} parent=11 // pred_check
          %p481 = pneg %p223
        $region42: #{transformer_forward.1} parent=11 // pred_check_branch
          %483 = sbr.rel (%p481) target = $region44
        $region43: #{transformer_forward.1} parent=11 // pred_region
          %s485 = ssub.s32 32, 32
          %486 = vsyncadd [#allocation14], %s485
          %s487 = sshll.u32 [#allocation13], 4
          %s488 = int_to_ptr.vmem [resolvable:$true] %s487
          %493 = dma.hbm_to_vmem [thread:$0]  %s8, 32, %s488, [#allocation14], 16, 16, 1
        $region44: #{transformer_forward.1} parent=11 // pred_fallthru
          _
        // Predicated region
        $region45: #{transformer_forward.1} parent=11 // pred_check
          %p494 = pneg %p244
        $region46: #{transformer_forward.1} parent=11 // pred_check_branch
          %496 = sbr.rel (%p494) target = $region48
        $region47: #{transformer_forward.1} parent=11 // pred_region
          %s498 = ssub.s32 4096, 4096
          %499 = vsyncadd [#allocation14], %s498
          %s500 = sshll.u32 [#allocation15], 4
          %s501 = int_to_ptr.vmem [resolvable:$true] %s500
          %506 = dma.hbm_to_vmem [thread:$0]  %s9, 4096, %s501, [#allocation14], 128, 128, 8
        $region48: #{transformer_forward.1} parent=11 // pred_fallthru
          _
        // Predicated region
        $region49: #{transformer_forward.1} parent=11 // pred_check
          %p507 = pneg %p265
        $region50: #{transformer_forward.1} parent=11 // pred_check_branch
          %509 = sbr.rel (%p507) target = $region52
        $region51: #{transformer_forward.1} parent=11 // pred_region
          %s511 = ssub.s32 32, 32
          %512 = vsyncadd [#allocation17], %s511
          %s513 = sshll.u32 [#allocation16], 4
          %s514 = int_to_ptr.vmem [resolvable:$true] %s513
          %519 = dma.hbm_to_vmem [thread:$0]  %s10, 32, %s514, [#allocation17], 16, 16, 1
        $region52: #{transformer_forward.1} parent=11 // pred_fallthru
          _
        // Predicated region
        $region53: #{transformer_forward.1} parent=11 // pred_check
          %p520 = pneg %p286
        $region54: #{transformer_forward.1} parent=11 // pred_check_branch
          %522 = sbr.rel (%p520) target = $region56
        $region55: #{transformer_forward.1} parent=11 // pred_region
          %s524 = ssub.s32 32, 32
          %525 = vsyncadd [#allocation17], %s524
          %s526 = sshll.u32 [#allocation18], 4
          %s527 = int_to_ptr.vmem [resolvable:$true] %s526
          %532 = dma.hbm_to_vmem [thread:$0]  %s11, 32, %s527, [#allocation17], 16, 16, 1
        $region56: #{transformer_forward.1} parent=11 // pred_fallthru
          _
        // Predicated region
        $region57: #{transformer_forward.1} parent=11 // pred_check
          %p533 = pneg %p307
        $region58: #{transformer_forward.1} parent=11 // pred_check_branch
          %535 = sbr.rel (%p533) target = $region60
        $region59: #{transformer_forward.1} parent=11 // pred_region
          %s537 = ssub.s32 32, 32
          %538 = vsyncadd [#allocation20], %s537
          %s539 = sshll.u32 [#allocation19], 4
          %s540 = int_to_ptr.vmem [resolvable:$true] %s539
          %545 = dma.hbm_to_vmem [thread:$0]  %s12, 32, %s540, [#allocation20], 16, 16, 1
        $region60: #{transformer_forward.1} parent=11 // pred_fallthru
          _
        // Predicated region
        $region61: #{transformer_forward.1} parent=11 // pred_check
          %p546 = pneg %p328
        $region62: #{transformer_forward.1} parent=11 // pred_check_branch
          %548 = sbr.rel (%p546) target = $region64
        $region63: #{transformer_forward.1} parent=11 // pred_region
          %s550 = ssub.s32 2048, 2048
          %551 = vsyncadd [#allocation20], %s550
          %s552 = sshll.u32 [#allocation21], 4
          %s553 = int_to_ptr.vmem [resolvable:$true] %s552
          %558 = dma.hbm_to_vmem [thread:$0]  %s13, 2048, %s553, [#allocation20], 128, 128, 8
        $region64: #{transformer_forward.1} parent=11 // pred_fallthru
          _
        // Predicated region
        $region65: #{transformer_forward.1} parent=11 // pred_check
          %p559 = pneg %p349
        $region66: #{transformer_forward.1} parent=11 // pred_check_branch
          %561 = sbr.rel (%p559) target = $region68
        $region67: #{transformer_forward.1} parent=11 // pred_region
          %s563 = ssub.s32 16, 16
          %564 = vsyncadd [#allocation23], %s563
          %s566 = sshll.u32 [#allocation22], 4
          %s567 = int_to_ptr.vmem [resolvable:$true] %s566
          %569 = dma.hbm_to_vmem [thread:$0]  %s14, 16, %s567, [#allocation23]
        $region68: #{transformer_forward.1} parent=11 // pred_fallthru
          _
      $region12: #{transformer_forward.1} parent=5 // pred_fallthru
        _
      %p570 = scmp.lt.s32.totalorder %s29, 2
      // Predicated region
      $region69: #{transformer_forward.1} parent=5 // pred_check
        %p571 = pneg %p570
      $region70: #{transformer_forward.1} parent=5 // pred_check_branch
        %573 = sbr.rel (%p571) target = $region72
      $region71: #{transformer_forward.1} parent=5 // pred_region
        // Predicated region
        $region73: #{transformer_forward.1} parent=71 // pred_check
          %p574 = pneg %p49
        $region74: #{transformer_forward.1} parent=71 // pred_check_branch
          %576 = sbr.rel (%p574) target = $region76
        $region75: #{transformer_forward.1} parent=71 // pred_region
          %p577 = scmp.lt.s32.totalorder %s29, 1
          %s578 = scalar_select %p577, %s29, 1
          %s579 = smul.addr %s578, 8
          %s580 = scalar_lea.vmem %s0, %s579
        $region76: #{transformer_forward.1} parent=71 // pred_fallthru
          _
      $region72: #{transformer_forward.1} parent=5 // pred_fallthru
        _
      %p581 = scmp.le.s32.totalorder 1, %s29
      %p582 = scmp.lt.s32.totalorder %s29, 3
      %p583 = pnand %p581, %p582
      %p584 = pneg %p583
      // Predicated region
      $region77: #{transformer_forward.1} parent=5 // pred_check
        _
      $region78: #{transformer_forward.1} parent=5 // pred_check_branch
        %586 = sbr.rel (%p583) target = $region80
      $region79: #{transformer_forward.1} parent=5 // pred_region
        %s587 = ssub.s32 %s29, 1
        // Predicated region
        $region81: #{transformer_forward.1} parent=79 // pred_check
          %p588 = pneg %p76
        $region82: #{transformer_forward.1} parent=79 // pred_check_branch
          %590 = sbr.rel (%p588) target = $region84
        $region83: #{transformer_forward.1} parent=79 // pred_region
          %591 = dma.done [#allocation3], 12288
        $region84: #{transformer_forward.1} parent=79 // pred_fallthru
          _
        // Predicated region
        $region85: #{transformer_forward.1} parent=79 // pred_check
          %p592 = pneg %p97
        $region86: #{transformer_forward.1} parent=79 // pred_check_branch
          %594 = sbr.rel (%p592) target = $region88
        $region87: #{transformer_forward.1} parent=79 // pred_region
          %595 = dma.done [#allocation5], 96
        $region88: #{transformer_forward.1} parent=79 // pred_fallthru
          _
        // Predicated region
        $region89: #{transformer_forward.1} parent=79 // pred_check
          %p596 = pneg %p118
        $region90: #{transformer_forward.1} parent=79 // pred_check_branch
          %598 = sbr.rel (%p596) target = $region92
        $region91: #{transformer_forward.1} parent=79 // pred_region
          %599 = dma.done [#allocation5], 4096
        $region92: #{transformer_forward.1} parent=79 // pred_fallthru
          _
        // Predicated region
        $region93: #{transformer_forward.1} parent=79 // pred_check
          %p600 = pneg %p139
        $region94: #{transformer_forward.1} parent=79 // pred_check_branch
          %602 = sbr.rel (%p600) target = $region96
        $region95: #{transformer_forward.1} parent=79 // pred_region
          %603 = dma.done [#allocation8], 32
        $region96: #{transformer_forward.1} parent=79 // pred_fallthru
          _
        // Predicated region
        $region97: #{transformer_forward.1} parent=79 // pred_check
          %p604 = pneg %p160
        $region98: #{transformer_forward.1} parent=79 // pred_check_branch
          %606 = sbr.rel (%p604) target = $region100
        $region99: #{transformer_forward.1} parent=79 // pred_region
          %607 = dma.done [#allocation8], 32
        $region100: #{transformer_forward.1} parent=79 // pred_fallthru
          _
        // Predicated region
        $region101: #{transformer_forward.1} parent=79 // pred_check
          %p608 = pneg %p181
        $region102: #{transformer_forward.1} parent=79 // pred_check_branch
          %610 = sbr.rel (%p608) target = $region104
        $region103: #{transformer_forward.1} parent=79 // pred_region
          %611 = dma.done [#allocation11], 32
        $region104: #{transformer_forward.1} parent=79 // pred_fallthru
          _
        // Predicated region
        $region105: #{transformer_forward.1} parent=79 // pred_check
          %p612 = pneg %p202
        $region106: #{transformer_forward.1} parent=79 // pred_check_branch
          %614 = sbr.rel (%p612) target = $region108
        $region107: #{transformer_forward.1} parent=79 // pred_region
          %615 = dma.done [#allocation11], 4096
        $region108: #{transformer_forward.1} parent=79 // pred_fallthru
          _
        // Predicated region
        $region109: #{transformer_forward.1} parent=79 // pred_check
          %p616 = pneg %p223
        $region110: #{transformer_forward.1} parent=79 // pred_check_branch
          %618 = sbr.rel (%p616) target = $region112
        $region111: #{transformer_forward.1} parent=79 // pred_region
          %619 = dma.done [#allocation14], 32
        $region112: #{transformer_forward.1} parent=79 // pred_fallthru
          _
        // Predicated region
        $region113: #{transformer_forward.1} parent=79 // pred_check
          %p620 = pneg %p244
        $region114: #{transformer_forward.1} parent=79 // pred_check_branch
          %622 = sbr.rel (%p620) target = $region116
        $region115: #{transformer_forward.1} parent=79 // pred_region
          %623 = dma.done [#allocation14], 4096
        $region116: #{transformer_forward.1} parent=79 // pred_fallthru
          _
        // Predicated region
        $region117: #{transformer_forward.1} parent=79 // pred_check
          %p624 = pneg %p265
        $region118: #{transformer_forward.1} parent=79 // pred_check_branch
          %626 = sbr.rel (%p624) target = $region120
        $region119: #{transformer_forward.1} parent=79 // pred_region
          %627 = dma.done [#allocation17], 32
        $region120: #{transformer_forward.1} parent=79 // pred_fallthru
          _
        // Predicated region
        $region121: #{transformer_forward.1} parent=79 // pred_check
          %p628 = pneg %p286
        $region122: #{transformer_forward.1} parent=79 // pred_check_branch
          %630 = sbr.rel (%p628) target = $region124
        $region123: #{transformer_forward.1} parent=79 // pred_region
          %631 = dma.done [#allocation17], 32
        $region124: #{transformer_forward.1} parent=79 // pred_fallthru
          _
        // Predicated region
        $region125: #{transformer_forward.1} parent=79 // pred_check
          %p632 = pneg %p307
        $region126: #{transformer_forward.1} parent=79 // pred_check_branch
          %634 = sbr.rel (%p632) target = $region128
        $region127: #{transformer_forward.1} parent=79 // pred_region
          %635 = dma.done [#allocation20], 32
        $region128: #{transformer_forward.1} parent=79 // pred_fallthru
          _
        // Predicated region
        $region129: #{transformer_forward.1} parent=79 // pred_check
          %p636 = pneg %p328
        $region130: #{transformer_forward.1} parent=79 // pred_check_branch
          %638 = sbr.rel (%p636) target = $region132
        $region131: #{transformer_forward.1} parent=79 // pred_region
          %639 = dma.done [#allocation20], 2048
        $region132: #{transformer_forward.1} parent=79 // pred_fallthru
          _
        // Predicated region
        $region133: #{transformer_forward.1} parent=79 // pred_check
          %p640 = pneg %p349
        $region134: #{transformer_forward.1} parent=79 // pred_check_branch
          %642 = sbr.rel (%p640) target = $region136
        $region135: #{transformer_forward.1} parent=79 // pred_region
          %643 = dma.done [#allocation23], 16
        $region136: #{transformer_forward.1} parent=79 // pred_fallthru
          _
        %p644 = scmp.lt.s32.totalorder %s34, 1
        %s645 = scalar_select %p644, %s34, 1
        %s646 = smul.addr %s645, 8
        %s647 = scalar_lea.vmem %s0, %s646
        %p648 = pneg %p55
        %p649 = pneg %p52
        %p650 = pneg %p76
        %p651 = pneg %p73
        %p652 = pneg %p97
        %p653 = pneg %p94
        %p654 = pneg %p118
        %p655 = pneg %p115
        %p656 = pneg %p139
        %p657 = pneg %p136
        %p658 = pneg %p160
        %p659 = pneg %p157
        %p660 = pneg %p181
        %p661 = pneg %p178
        %p662 = pneg %p202
        %p663 = pneg %p199
        %p664 = pneg %p223
        %p665 = pneg %p220
        %p666 = pneg %p244
        %p667 = pneg %p241
        %p668 = pneg %p265
        %p669 = pneg %p262
        %p670 = pneg %p286
        %p671 = pneg %p283
        %p672 = pneg %p307
        %p673 = pneg %p304
        %p674 = pneg %p328
        %p675 = pneg %p325
        %p676 = pneg %p349
        %p677 = pneg %p346
        %p678 = pneg %p375
        %p679 = pneg %p372
        %p680 = scmp.lt.s32.totalorder %s34, 1
        %s681 = scalar_select %p680, %s34, 1
        %s682 = smul.addr %s681, 8
        %s683 = scalar_lea.vmem %s15, %s682
        %p684 = scmp.lt.s32.totalorder %s34, 1
        %s685 = scalar_select %p684, %s34, 1
        %s686 = smul.addr %s685, 8
        %s687 = scalar_lea.vmem %s0, %s686
        %p688 = scmp.lt.s32.totalorder %s34, 1
        %s689 = scalar_select %p688, %s34, 1
        %s690 = smul.addr %s689, 8
        %s691 = scalar_lea.vmem %s15, %s690
        %v692 = vld [vmem:[%s687] sm:$0xff]
        %v693 = vld [vmem:[#allocation2] sm:$0xff]
        %v694 = vld [vmem:[#allocation2 + $0x8] sm:$0xff]
        %v695 = vld [vmem:[#allocation2 + $0x10] sm:$0xff]
        %v696 = vld [vmem:[#allocation2 + $0x18] sm:$0xff]
        %v697 = vld [vmem:[#allocation2 + $0x20] sm:$0xff]
        %v698 = vld [vmem:[#allocation2 + $0x28] sm:$0xff]
        %v699 = vld [vmem:[#allocation2 + $0x30] sm:$0xff]
        %v700 = vld [vmem:[#allocation2 + $0x38] sm:$0xff]
        %v701 = vld [vmem:[#allocation2 + $0x40] sm:$0xff]
        %v702 = vld [vmem:[#allocation2 + $0x48] sm:$0xff]
        %v703 = vld [vmem:[#allocation2 + $0x50] sm:$0xff]
        %v704 = vld [vmem:[#allocation2 + $0x58] sm:$0xff]
        %v705 = vld [vmem:[#allocation2 + $0x60] sm:$0xff]
        %v706 = vld [vmem:[#allocation2 + $0x68] sm:$0xff]
        %v707 = vld [vmem:[#allocation2 + $0x70] sm:$0xff]
        %v708 = vld [vmem:[#allocation2 + $0x78] sm:$0xff]
        %v709 = vld [vmem:[#allocation2 + $0x80] sm:$0xff]
        %v710 = vld [vmem:[#allocation2 + $0x88] sm:$0xff]
        %v711 = vld [vmem:[#allocation2 + $0x90] sm:$0xff]
        %v712 = vld [vmem:[#allocation2 + $0x98] sm:$0xff]
        %v713 = vld [vmem:[#allocation2 + $0xa0] sm:$0xff]
        %v714 = vld [vmem:[#allocation2 + $0xa8] sm:$0xff]
        %v715 = vld [vmem:[#allocation2 + $0xb0] sm:$0xff]
        %v716 = vld [vmem:[#allocation2 + $0xb8] sm:$0xff]
        %v717 = vld [vmem:[#allocation2 + $0xc0] sm:$0xff]
        %v718 = vld [vmem:[#allocation2 + $0xc8] sm:$0xff]
        %v719 = vld [vmem:[#allocation2 + $0xd0] sm:$0xff]
        %v720 = vld [vmem:[#allocation2 + $0xd8] sm:$0xff]
        %v721 = vld [vmem:[#allocation2 + $0xe0] sm:$0xff]
        %v722 = vld [vmem:[#allocation2 + $0xe8] sm:$0xff]
        %v723 = vld [vmem:[#allocation2 + $0xf0] sm:$0xff]
        %v724 = vld [vmem:[#allocation2 + $0xf8] sm:$0xff]
        %v725 = vld [vmem:[#allocation2 + $0x100] sm:$0xff]
        %v726 = vld [vmem:[#allocation2 + $0x108] sm:$0xff]
        %v727 = vld [vmem:[#allocation2 + $0x110] sm:$0xff]
        %v728 = vld [vmem:[#allocation2 + $0x118] sm:$0xff]
        %v729 = vld [vmem:[#allocation2 + $0x120] sm:$0xff]
        %v730 = vld [vmem:[#allocation2 + $0x128] sm:$0xff]
        %v731 = vld [vmem:[#allocation2 + $0x130] sm:$0xff]
        %v732 = vld [vmem:[#allocation2 + $0x138] sm:$0xff]
        %v733 = vld [vmem:[#allocation2 + $0x140] sm:$0xff]
        %v734 = vld [vmem:[#allocation2 + $0x148] sm:$0xff]
        %v735 = vld [vmem:[#allocation2 + $0x150] sm:$0xff]
        %v736 = vld [vmem:[#allocation2 + $0x158] sm:$0xff]
        %v737 = vld [vmem:[#allocation2 + $0x160] sm:$0xff]
        %v738 = vld [vmem:[#allocation2 + $0x168] sm:$0xff]
        %v739 = vld [vmem:[#allocation2 + $0x170] sm:$0xff]
        %v740 = vld [vmem:[#allocation2 + $0x178] sm:$0xff]
        %v741 = vld [vmem:[#allocation4] sm:$0x7]
        %v743 = vlaneseq
        %v744 = vshrl.u32 %v743, 7
        %v745 = vsub.s32 0, %v744
        %v746 = vrot.slane %v741, %v745
        %v747 = vlaneseq
        %v748 = vshrl.u32 %v747, 7
        %v749 = vsub.s32 1, %v748
        %v750 = vrot.slane %v741, %v749
        %v751 = vlaneseq
        %v752 = vshrl.u32 %v751, 7
        %v753 = vsub.s32 2, %v752
        %v754 = vrot.slane %v741, %v753
        %758 = vmatprep.subr.mxu0 %v694
        %759 = vmatpush1.msra.mxu0 %v693
        %760 = vmatprep.subr.mxu0 %v697
        %761 = vmatpush1.msra.mxu0 %v696
        %762 = vmatprep.subr.mxu0 %v700
        %763 = vmatpush1.msra.mxu0 %v699
        %764 = vmatprep.subr.mxu0 %v703
        %765 = vmatpush1.msra.mxu0 %v702
        %766 = vmatprep.subr.mxu0 %v706
        %767 = vmatpush1.msra.mxu0 %v705
        %768 = vmatprep.subr.mxu0 %v709
        %769 = vmatpush1.msra.mxu0 %v708
        %770 = vmatprep.subr.mxu0 %v712
        %771 = vmatpush1.msra.mxu0 %v711
        %772 = vmatprep.subr.mxu0 %v715
        %773 = vmatpush1.msra.mxu0 %v714
        %774 = vmatprep.subr.mxu0 %v718
        %775 = vmatpush1.msra.mxu0 %v717
        %776 = vmatprep.subr.mxu0 %v721
        %777 = vmatpush1.msra.mxu0 %v720
        %778 = vmatprep.subr.mxu0 %v724
        %779 = vmatpush1.msra.mxu0 %v723
        %780 = vmatprep.subr.mxu0 %v727
        %781 = vmatpush1.msra.mxu0 %v726
        %782 = vmatprep.subr.mxu0 %v730
        %783 = vmatpush1.msra.mxu0 %v729
        %784 = vmatprep.subr.mxu0 %v733
        %785 = vmatpush1.msra.mxu0 %v732
        %786 = vmatprep.subr.mxu0 %v736
        %787 = vmatpush1.msra.mxu0 %v735
        %788 = vmatprep.subr.mxu0 %v739
        %789 = vmatpush1.msra.mxu0 %v738
        %790 = vmatprep.subr.mxu0 0.0
        %791 = vmatpush1.msra.mxu0 0.0
        %792 = vmatprep.subr.mxu0 0.0
        %793 = vmatpush1.msra.mxu0 0.0
        %794 = vmatprep.subr.mxu0 0.0
        %795 = vmatpush1.msra.mxu0 0.0
        %796 = vmatprep.subr.mxu0 0.0
        %797 = vmatpush1.msra.mxu0 0.0
        %798 = vmatprep.subr.mxu0 0.0
        %799 = vmatpush1.msra.mxu0 0.0
        %800 = vmatprep.subr.mxu0 0.0
        %801 = vmatpush1.msra.mxu0 0.0
        %802 = vmatprep.subr.mxu0 0.0
        %803 = vmatpush1.msra.mxu0 0.0
        %804 = vmatprep.subr.mxu0 0.0
        %805 = vmatpush1.msra.mxu0 0.0
        %806 = vmatprep.subr.mxu0 0.0
        %807 = vmatpush1.msra.mxu0 0.0
        %808 = vmatprep.subr.mxu0 0.0
        %809 = vmatpush1.msra.mxu0 0.0
        %810 = vmatprep.subr.mxu0 0.0
        %811 = vmatpush1.msra.mxu0 0.0
        %812 = vmatprep.subr.mxu0 0.0
        %813 = vmatpush1.msra.mxu0 0.0
        %814 = vmatprep.subr.mxu0 0.0
        %815 = vmatpush1.msra.mxu0 0.0
        %816 = vmatprep.subr.mxu0 0.0
        %817 = vmatpush1.msra.mxu0 0.0
        %818 = vmatprep.subr.mxu0 0.0
        %819 = vmatpush1.msra.mxu0 0.0
        %820 = vmatprep.subr.mxu0 0.0
        %821 = vmatpush1.msra.mxu0 0.0
        %822 = vmatprep.mubr.f32.mxu0 0.0
        %823 = vmatmul.mubr.f32.gmra.mrb[0].mxu0 %v692
        %v824 = vpop.f32.mrb[0].mxu0
        %v825 = vadd.f32 %v746, %v824
        %v826 = vpop.f32.mrb[0].mxu0
        %v827 = vadd.f32 %v750, %v826
        %828 = vdwg.mxu0
        %829 = vmatprep.subr.mxu0 0.0
        %830 = vmatpush1.msra.mxu0 %v695
        %831 = vmatprep.subr.mxu0 0.0
        %832 = vmatpush1.msra.mxu0 %v698
        %833 = vmatprep.subr.mxu0 0.0
        %834 = vmatpush1.msra.mxu0 %v701
        %835 = vmatprep.subr.mxu0 0.0
        %836 = vmatpush1.msra.mxu0 %v704
        %837 = vmatprep.subr.mxu0 0.0
        %838 = vmatpush1.msra.mxu0 %v707
        %839 = vmatprep.subr.mxu0 0.0
        %840 = vmatpush1.msra.mxu0 %v710
        %841 = vmatprep.subr.mxu0 0.0
        %842 = vmatpush1.msra.mxu0 %v713
        %843 = vmatprep.subr.mxu0 0.0
        %844 = vmatpush1.msra.mxu0 %v716
        %845 = vmatprep.subr.mxu0 0.0
        %846 = vmatpush1.msra.mxu0 %v719
        %847 = vmatprep.subr.mxu0 0.0
        %848 = vmatpush1.msra.mxu0 %v722
        %849 = vmatprep.subr.mxu0 0.0
        %850 = vmatpush1.msra.mxu0 %v725
        %851 = vmatprep.subr.mxu0 0.0
        %852 = vmatpush1.msra.mxu0 %v728
        %853 = vmatprep.subr.mxu0 0.0
        %854 = vmatpush1.msra.mxu0 %v731
        %855 = vmatprep.subr.mxu0 0.0
        %856 = vmatpush1.msra.mxu0 %v734
        %857 = vmatprep.subr.mxu0 0.0
        %858 = vmatpush1.msra.mxu0 %v737
        %859 = vmatprep.subr.mxu0 0.0
        %860 = vmatpush1.msra.mxu0 %v740
        %861 = vmatprep.subr.mxu0 0.0
        %862 = vmatpush1.msra.mxu0 0.0
        %863 = vmatprep.subr.mxu0 0.0
        %864 = vmatpush1.msra.mxu0 0.0
        %865 = vmatprep.subr.mxu0 0.0
        %866 = vmatpush1.msra.mxu0 0.0
        %867 = vmatprep.subr.mxu0 0.0
        %868 = vmatpush1.msra.mxu0 0.0
        %869 = vmatprep.subr.mxu0 0.0
        %870 = vmatpush1.msra.mxu0 0.0
        %871 = vmatprep.subr.mxu0 0.0
        %872 = vmatpush1.msra.mxu0 0.0
        %873 = vmatprep.subr.mxu0 0.0
        %874 = vmatpush1.msra.mxu0 0.0
        %875 = vmatprep.subr.mxu0 0.0
        %876 = vmatpush1.msra.mxu0 0.0
        %877 = vmatprep.subr.mxu0 0.0
        %878 = vmatpush1.msra.mxu0 0.0
        %879 = vmatprep.subr.mxu0 0.0
        %880 = vmatpush1.msra.mxu0 0.0
        %881 = vmatprep.subr.mxu0 0.0
        %882 = vmatpush1.msra.mxu0 0.0
        %883 = vmatprep.subr.mxu0 0.0
        %884 = vmatpush1.msra.mxu0 0.0
        %885 = vmatprep.subr.mxu0 0.0
        %886 = vmatpush1.msra.mxu0 0.0
        %887 = vmatprep.subr.mxu0 0.0
        %888 = vmatpush1.msra.mxu0 0.0
        %889 = vmatprep.subr.mxu0 0.0
        %890 = vmatpush1.msra.mxu0 0.0
        %891 = vmatprep.subr.mxu0 0.0
        %892 = vmatpush1.msra.mxu0 0.0
        %893 = vmatprep.mubr.f32.mxu0 0.0
        %894 = vmatmul.mubr.f32.gmra.mrb[0].mxu0 %v692
        %v895 = vpop.f32.mrb[0].mxu0
        %v896 = vadd.f32 %v754, %v895
        %v897 = vpop.f32.mrb[0].mxu0
        %898 = vdwg.mxu0
        %vm899 = vcmask 523264
        %v901 = vsel %vm899, %v825, 0
        %v904 = vsel %vm899, %v827, 0
        %906 = vmatprep.subr.mxu0 0.0
        %907 = vmatpush1.xpose.msra.mxu0 %v904
        %908 = vmatprep.subr.mxu0 0.0
        %909 = vmatpush1.xpose.msra.mxu0 0.0
        %910 = vmatprep.subr.mxu0 0.0
        %911 = vmatpush1.xpose.msra.mxu0 0.0
        %912 = vmatprep.subr.mxu0 0.0
        %913 = vmatpush1.xpose.msra.mxu0 0.0
        %914 = vmatprep.subr.mxu0 0.0
        %915 = vmatpush1.xpose.msra.mxu0 0.0
        %916 = vmatprep.subr.mxu0 0.0
        %917 = vmatpush1.xpose.msra.mxu0 0.0
        %918 = vmatprep.subr.mxu0 0.0
        %919 = vmatpush1.xpose.msra.mxu0 0.0
        %920 = vmatprep.subr.mxu0 0.0
        %921 = vmatpush1.xpose.msra.mxu0 0.0
        %922 = vmatprep.subr.mxu0 0.0
        %923 = vmatpush1.xpose.msra.mxu0 0.0
        %924 = vmatprep.subr.mxu0 0.0
        %925 = vmatpush1.xpose.msra.mxu0 0.0
        %926 = vmatprep.subr.mxu0 0.0
        %927 = vmatpush1.xpose.msra.mxu0 0.0
        %928 = vmatprep.subr.mxu0 0.0
        %929 = vmatpush1.xpose.msra.mxu0 0.0
        %930 = vmatprep.subr.mxu0 0.0
        %931 = vmatpush1.xpose.msra.mxu0 0.0
        %932 = vmatprep.subr.mxu0 0.0
        %933 = vmatpush1.xpose.msra.mxu0 0.0
        %934 = vmatprep.subr.mxu0 0.0
        %935 = vmatpush1.xpose.msra.mxu0 0.0
        %936 = vmatprep.subr.mxu0 0.0
        %937 = vmatpush1.xpose.msra.mxu0 0.0
        %938 = vmatprep.subr.mxu0 0.0
        %939 = vmatpush1.xpose.msra.mxu0 0.0
        %940 = vmatprep.subr.mxu0 0.0
        %941 = vmatpush1.xpose.msra.mxu0 0.0
        %942 = vmatprep.subr.mxu0 0.0
        %943 = vmatpush1.xpose.msra.mxu0 0.0
        %944 = vmatprep.subr.mxu0 0.0
        %945 = vmatpush1.xpose.msra.mxu0 0.0
        %946 = vmatprep.subr.mxu0 0.0
        %947 = vmatpush1.xpose.msra.mxu0 0.0
        %948 = vmatprep.subr.mxu0 0.0
        %949 = vmatpush1.xpose.msra.mxu0 0.0
        %950 = vmatprep.subr.mxu0 0.0
        %951 = vmatpush1.xpose.msra.mxu0 0.0
        %952 = vmatprep.subr.mxu0 0.0
        %953 = vmatpush1.xpose.msra.mxu0 0.0
        %954 = vmatprep.subr.mxu0 0.0
        %955 = vmatpush1.xpose.msra.mxu0 0.0
        %956 = vmatprep.subr.mxu0 0.0
        %957 = vmatpush1.xpose.msra.mxu0 0.0
        %958 = vmatprep.subr.mxu0 0.0
        %959 = vmatpush1.xpose.msra.mxu0 0.0
        %960 = vmatprep.subr.mxu0 0.0
        %961 = vmatpush1.xpose.msra.mxu0 0.0
        %962 = vmatprep.subr.mxu0 0.0
        %963 = vmatpush1.xpose.msra.mxu0 0.0
        %964 = vmatprep.subr.mxu0 0.0
        %965 = vmatpush1.xpose.msra.mxu0 0.0
        %966 = vmatprep.subr.mxu0 0.0
        %967 = vmatpush1.xpose.msra.mxu0 0.0
        %968 = vmatprep.subr.mxu0 0.0
        %969 = vmatpush1.xpose.msra.mxu0 0.0
        %970 = vmatprep.mubr.f32.mxu0 0.0
        %971 = vmatmul.mubr.f32.gmra.mrb[0].mxu0 %v901
        %v972 = vpop.f32.mrb[0].mxu0
        %v973 = vadd.f32 0.0, %v972
        %v974 = vpop.f32.mrb[0].mxu0
        %975 = vdwg.mxu0
        %vm976 = vcmask 64512
        %v977 = vsel %vm976, %v973, -inf
        %978 = vmax.xlane.f32.xlu0 %v977
        %v979 = vpop.xlane.xlu0 %978
        %v980 = vsub.f32 %v973, %v979
        %v981 = vmul.f32 %v980, 1.442695
        %v982 = vpow.pop %v981
        %v983 = vsel %vm976, %v982, 0.0
        %984 = vadd.xlane.f32.xlu0 %v983
        %v985 = vpop.xlane.xlu0 %984
        %v986 = vrcp.pop %v985
        %v987 = vmul.f32 %v982, %v986
        %v989 = vsel %vm976, %v987, 0
        %991 = vmatprep.subr.mxu0 0.0
        %992 = vmatpush1.msra.mxu0 %v896
        %993 = vmatprep.subr.mxu0 0.0
        %994 = vmatpush1.msra.mxu0 0.0
        %995 = vmatprep.subr.mxu0 0.0
        %996 = vmatpush1.msra.mxu0 0.0
        %997 = vmatprep.subr.mxu0 0.0
        %998 = vmatpush1.msra.mxu0 0.0
        %999 = vmatprep.subr.mxu0 0.0
        %1000 = vmatpush1.msra.mxu0 0.0
        %1001 = vmatprep.subr.mxu0 0.0
        %1002 = vmatpush1.msra.mxu0 0.0
        %1003 = vmatprep.subr.mxu0 0.0
        %1004 = vmatpush1.msra.mxu0 0.0
        %1005 = vmatprep.subr.mxu0 0.0
        %1006 = vmatpush1.msra.mxu0 0.0
        %1007 = vmatprep.subr.mxu0 0.0
        %1008 = vmatpush1.msra.mxu0 0.0
        %1009 = vmatprep.subr.mxu0 0.0
        %1010 = vmatpush1.msra.mxu0 0.0
        %1011 = vmatprep.subr.mxu0 0.0
        %1012 = vmatpush1.msra.mxu0 0.0
        %1013 = vmatprep.subr.mxu0 0.0
        %1014 = vmatpush1.msra.mxu0 0.0
        %1015 = vmatprep.subr.mxu0 0.0
        %1016 = vmatpush1.msra.mxu0 0.0
        %1017 = vmatprep.subr.mxu0 0.0
        %1018 = vmatpush1.msra.mxu0 0.0
        %1019 = vmatprep.subr.mxu0 0.0
        %1020 = vmatpush1.msra.mxu0 0.0
        %1021 = vmatprep.subr.mxu0 0.0
        %1022 = vmatpush1.msra.mxu0 0.0
        %1023 = vmatprep.subr.mxu0 0.0
        %1024 = vmatpush1.msra.mxu0 0.0
        %1025 = vmatprep.subr.mxu0 0.0
        %1026 = vmatpush1.msra.mxu0 0.0
        %1027 = vmatprep.subr.mxu0 0.0
        %1028 = vmatpush1.msra.mxu0 0.0
        %1029 = vmatprep.subr.mxu0 0.0
        %1030 = vmatpush1.msra.mxu0 0.0
        %1031 = vmatprep.subr.mxu0 0.0
        %1032 = vmatpush1.msra.mxu0 0.0
        %1033 = vmatprep.subr.mxu0 0.0
        %1034 = vmatpush1.msra.mxu0 0.0
        %1035 = vmatprep.subr.mxu0 0.0
        %1036 = vmatpush1.msra.mxu0 0.0
        %1037 = vmatprep.subr.mxu0 0.0
        %1038 = vmatpush1.msra.mxu0 0.0
        %1039 = vmatprep.subr.mxu0 0.0
        %1040 = vmatpush1.msra.mxu0 0.0
        %1041 = vmatprep.subr.mxu0 0.0
        %1042 = vmatpush1.msra.mxu0 0.0
        %1043 = vmatprep.subr.mxu0 0.0
        %1044 = vmatpush1.msra.mxu0 0.0
        %1045 = vmatprep.subr.mxu0 0.0
        %1046 = vmatpush1.msra.mxu0 0.0
        %1047 = vmatprep.subr.mxu0 0.0
        %1048 = vmatpush1.msra.mxu0 0.0
        %1049 = vmatprep.subr.mxu0 0.0
        %1050 = vmatpush1.msra.mxu0 0.0
        %1051 = vmatprep.subr.mxu0 0.0
        %1052 = vmatpush1.msra.mxu0 0.0
        %1053 = vmatprep.subr.mxu0 0.0
        %1054 = vmatpush1.msra.mxu0 0.0
        %1055 = vmatprep.mubr.f32.mxu0 0.0
        %1056 = vmatmul.mubr.f32.gmra.mrb[0].mxu0 %v989
        %v1057 = vpop.f32.mrb[0].mxu0
        %v1058 = vadd.f32 0.0, %v1057
        %v1059 = vpop.f32.mrb[0].mxu0
        %1060 = vdwg.mxu0
        %v1061 = vld [vmem:[#allocation6] sm:$0xff]
        %v1062 = vld [vmem:[#allocation6 + $0x8] sm:$0xff]
        %v1063 = vld [vmem:[#allocation6 + $0x10] sm:$0xff]
        %v1064 = vld [vmem:[#allocation6 + $0x18] sm:$0xff]
        %v1065 = vld [vmem:[#allocation6 + $0x20] sm:$0xff]
        %v1066 = vld [vmem:[#allocation6 + $0x28] sm:$0xff]
        %v1067 = vld [vmem:[#allocation6 + $0x30] sm:$0xff]
        %v1068 = vld [vmem:[#allocation6 + $0x38] sm:$0xff]
        %1069 = vrot.lane.b32.xlu0 %v825, 64
        %v1070 = vpop.permute.xlu0 %1069
        %1071 = vrot.lane.b32.xlu0 %v827, 64
        %v1072 = vpop.permute.xlu0 %1071
        %v1073 = vsel %vm899, %v1070, 0
        %v1075 = vsel %vm899, %v1072, 0
        %1077 = vmatprep.subr.mxu0 0.0
        %1078 = vmatpush1.xpose.msra.mxu0 %v1075
        %1079 = vmatprep.subr.mxu0 0.0
        %1080 = vmatpush1.xpose.msra.mxu0 0.0
        %1081 = vmatprep.subr.mxu0 0.0
        %1082 = vmatpush1.xpose.msra.mxu0 0.0
        %1083 = vmatprep.subr.mxu0 0.0
        %1084 = vmatpush1.xpose.msra.mxu0 0.0
        %1085 = vmatprep.subr.mxu0 0.0
        %1086 = vmatpush1.xpose.msra.mxu0 0.0
        %1087 = vmatprep.subr.mxu0 0.0
        %1088 = vmatpush1.xpose.msra.mxu0 0.0
        %1089 = vmatprep.subr.mxu0 0.0
        %1090 = vmatpush1.xpose.msra.mxu0 0.0
        %1091 = vmatprep.subr.mxu0 0.0
        %1092 = vmatpush1.xpose.msra.mxu0 0.0
        %1093 = vmatprep.subr.mxu0 0.0
        %1094 = vmatpush1.xpose.msra.mxu0 0.0
        %1095 = vmatprep.subr.mxu0 0.0
        %1096 = vmatpush1.xpose.msra.mxu0 0.0
        %1097 = vmatprep.subr.mxu0 0.0
        %1098 = vmatpush1.xpose.msra.mxu0 0.0
        %1099 = vmatprep.subr.mxu0 0.0
        %1100 = vmatpush1.xpose.msra.mxu0 0.0
        %1101 = vmatprep.subr.mxu0 0.0
        %1102 = vmatpush1.xpose.msra.mxu0 0.0
        %1103 = vmatprep.subr.mxu0 0.0
        %1104 = vmatpush1.xpose.msra.mxu0 0.0
        %1105 = vmatprep.subr.mxu0 0.0
        %1106 = vmatpush1.xpose.msra.mxu0 0.0
        %1107 = vmatprep.subr.mxu0 0.0
        %1108 = vmatpush1.xpose.msra.mxu0 0.0
        %1109 = vmatprep.subr.mxu0 0.0
        %1110 = vmatpush1.xpose.msra.mxu0 0.0
        %1111 = vmatprep.subr.mxu0 0.0
        %1112 = vmatpush1.xpose.msra.mxu0 0.0
        %1113 = vmatprep.subr.mxu0 0.0
        %1114 = vmatpush1.xpose.msra.mxu0 0.0
        %1115 = vmatprep.subr.mxu0 0.0
        %1116 = vmatpush1.xpose.msra.mxu0 0.0
        %1117 = vmatprep.subr.mxu0 0.0
        %1118 = vmatpush1.xpose.msra.mxu0 0.0
        %1119 = vmatprep.subr.mxu0 0.0
        %1120 = vmatpush1.xpose.msra.mxu0 0.0
        %1121 = vmatprep.subr.mxu0 0.0
        %1122 = vmatpush1.xpose.msra.mxu0 0.0
        %1123 = vmatprep.subr.mxu0 0.0
        %1124 = vmatpush1.xpose.msra.mxu0 0.0
        %1125 = vmatprep.subr.mxu0 0.0
        %1126 = vmatpush1.xpose.msra.mxu0 0.0
        %1127 = vmatprep.subr.mxu0 0.0
        %1128 = vmatpush1.xpose.msra.mxu0 0.0
        %1129 = vmatprep.subr.mxu0 0.0
        %1130 = vmatpush1.xpose.msra.mxu0 0.0
        %1131 = vmatprep.subr.mxu0 0.0
        %1132 = vmatpush1.xpose.msra.mxu0 0.0
        %1133 = vmatprep.subr.mxu0 0.0
        %1134 = vmatpush1.xpose.msra.mxu0 0.0
        %1135 = vmatprep.subr.mxu0 0.0
        %1136 = vmatpush1.xpose.msra.mxu0 0.0
        %1137 = vmatprep.subr.mxu0 0.0
        %1138 = vmatpush1.xpose.msra.mxu0 0.0
        %1139 = vmatprep.subr.mxu0 0.0
        %1140 = vmatpush1.xpose.msra.mxu0 0.0
        %1141 = vmatprep.mubr.f32.mxu0 0.0
        %1142 = vmatmul.mubr.f32.gmra.mrb[0].mxu0 %v1073
        %v1143 = vpop.f32.mrb[0].mxu0
        %v1144 = vadd.f32 0.0, %v1143
        %v1145 = vpop.f32.mrb[0].mxu0
        %1146 = vdwg.mxu0
        %v1147 = vsel %vm976, %v1144, -inf
        %1148 = vmax.xlane.f32.xlu0 %v1147
        %v1149 = vpop.xlane.xlu0 %1148
        %v1150 = vsub.f32 %v1144, %v1149
        %v1151 = vmul.f32 %v1150, 1.442695
        %v1152 = vpow.pop %v1151
        %v1153 = vsel %vm976, %v1152, 0.0
        %1154 = vadd.xlane.f32.xlu0 %v1153
        %v1155 = vpop.xlane.xlu0 %1154
        %v1156 = vrcp.pop %v1155
        %v1157 = vmul.f32 %v1152, %v1156
        %1159 = vrot.lane.b32.xlu0 %v896, 64
        %v1160 = vpop.permute.xlu0 %1159
        %v1163 = vsel %vm976, %v1157, 0
        %1165 = vmatprep.subr.mxu0 0.0
        %1166 = vmatpush1.msra.mxu0 %v1160
        %1167 = vmatprep.subr.mxu0 0.0
        %1168 = vmatpush1.msra.mxu0 0.0
        %1169 = vmatprep.subr.mxu0 0.0
        %1170 = vmatpush1.msra.mxu0 0.0
        %1171 = vmatprep.subr.mxu0 0.0
        %1172 = vmatpush1.msra.mxu0 0.0
        %1173 = vmatprep.subr.mxu0 0.0
        %1174 = vmatpush1.msra.mxu0 0.0
        %1175 = vmatprep.subr.mxu0 0.0
        %1176 = vmatpush1.msra.mxu0 0.0
        %1177 = vmatprep.subr.mxu0 0.0
        %1178 = vmatpush1.msra.mxu0 0.0
        %1179 = vmatprep.subr.mxu0 0.0
        %1180 = vmatpush1.msra.mxu0 0.0
        %1181 = vmatprep.subr.mxu0 0.0
        %1182 = vmatpush1.msra.mxu0 0.0
        %1183 = vmatprep.subr.mxu0 0.0
        %1184 = vmatpush1.msra.mxu0 0.0
        %1185 = vmatprep.subr.mxu0 0.0
        %1186 = vmatpush1.msra.mxu0 0.0
        %1187 = vmatprep.subr.mxu0 0.0
        %1188 = vmatpush1.msra.mxu0 0.0
        %1189 = vmatprep.subr.mxu0 0.0
        %1190 = vmatpush1.msra.mxu0 0.0
        %1191 = vmatprep.subr.mxu0 0.0
        %1192 = vmatpush1.msra.mxu0 0.0
        %1193 = vmatprep.subr.mxu0 0.0
        %1194 = vmatpush1.msra.mxu0 0.0
        %1195 = vmatprep.subr.mxu0 0.0
        %1196 = vmatpush1.msra.mxu0 0.0
        %1197 = vmatprep.subr.mxu0 0.0
        %1198 = vmatpush1.msra.mxu0 0.0
        %1199 = vmatprep.subr.mxu0 0.0
        %1200 = vmatpush1.msra.mxu0 0.0
        %1201 = vmatprep.subr.mxu0 0.0
        %1202 = vmatpush1.msra.mxu0 0.0
        %1203 = vmatprep.subr.mxu0 0.0
        %1204 = vmatpush1.msra.mxu0 0.0
        %1205 = vmatprep.subr.mxu0 0.0
        %1206 = vmatpush1.msra.mxu0 0.0
        %1207 = vmatprep.subr.mxu0 0.0
        %1208 = vmatpush1.msra.mxu0 0.0
        %1209 = vmatprep.subr.mxu0 0.0
        %1210 = vmatpush1.msra.mxu0 0.0
        %1211 = vmatprep.subr.mxu0 0.0
        %1212 = vmatpush1.msra.mxu0 0.0
        %1213 = vmatprep.subr.mxu0 0.0
        %1214 = vmatpush1.msra.mxu0 0.0
        %1215 = vmatprep.subr.mxu0 0.0
        %1216 = vmatpush1.msra.mxu0 0.0
        %1217 = vmatprep.subr.mxu0 0.0
        %1218 = vmatpush1.msra.mxu0 0.0
        %1219 = vmatprep.subr.mxu0 0.0
        %1220 = vmatpush1.msra.mxu0 0.0
        %1221 = vmatprep.subr.mxu0 0.0
        %1222 = vmatpush1.msra.mxu0 0.0
        %1223 = vmatprep.subr.mxu0 0.0
        %1224 = vmatpush1.msra.mxu0 0.0
        %1225 = vmatprep.subr.mxu0 0.0
        %1226 = vmatpush1.msra.mxu0 0.0
        %1227 = vmatprep.subr.mxu0 0.0
        %1228 = vmatpush1.msra.mxu0 0.0
        %1229 = vmatprep.mubr.f32.mxu0 0.0
        %1230 = vmatmul.mubr.f32.gmra.mrb[0].mxu0 %v1163
        %v1231 = vpop.f32.mrb[0].mxu0
        %v1232 = vadd.f32 0.0, %v1231
        %v1233 = vpop.f32.mrb[0].mxu0
        %1234 = vdwg.mxu0
        %v1235 = vld [vmem:[#allocation6 + $0x40] sm:$0xff]
        %v1236 = vld [vmem:[#allocation6 + $0x48] sm:$0xff]
        %v1237 = vld [vmem:[#allocation6 + $0x50] sm:$0xff]
        %v1238 = vld [vmem:[#allocation6 + $0x58] sm:$0xff]
        %v1239 = vld [vmem:[#allocation6 + $0x60] sm:$0xff]
        %v1240 = vld [vmem:[#allocation6 + $0x68] sm:$0xff]
        %v1241 = vld [vmem:[#allocation6 + $0x70] sm:$0xff]
        %v1242 = vld [vmem:[#allocation6 + $0x78] sm:$0xff]
        %v1244 = vsel %vm899, %v1232, 0
        %1246 = vmatprep.subr.mxu0 0.0
        %1247 = vmatpush1.msra.mxu0 %v1235
        %1248 = vmatprep.subr.mxu0 0.0
        %1249 = vmatpush1.msra.mxu0 %v1236
        %1250 = vmatprep.subr.mxu0 0.0
        %1251 = vmatpush1.msra.mxu0 %v1237
        %1252 = vmatprep.subr.mxu0 0.0
        %1253 = vmatpush1.msra.mxu0 %v1238
        %1254 = vmatprep.subr.mxu0 0.0
        %1255 = vmatpush1.msra.mxu0 %v1239
        %1256 = vmatprep.subr.mxu0 0.0
        %1257 = vmatpush1.msra.mxu0 %v1240
        %1258 = vmatprep.subr.mxu0 0.0
        %1259 = vmatpush1.msra.mxu0 %v1241
        %1260 = vmatprep.subr.mxu0 0.0
        %1261 = vmatpush1.msra.mxu0 %v1242
        %1262 = vmatprep.subr.mxu0 0.0
        %1263 = vmatpush1.msra.mxu0 0.0
        %1264 = vmatprep.subr.mxu0 0.0
        %1265 = vmatpush1.msra.mxu0 0.0
        %1266 = vmatprep.subr.mxu0 0.0
        %1267 = vmatpush1.msra.mxu0 0.0
        %1268 = vmatprep.subr.mxu0 0.0
        %1269 = vmatpush1.msra.mxu0 0.0
        %1270 = vmatprep.subr.mxu0 0.0
        %1271 = vmatpush1.msra.mxu0 0.0
        %1272 = vmatprep.subr.mxu0 0.0
        %1273 = vmatpush1.msra.mxu0 0.0
        %1274 = vmatprep.subr.mxu0 0.0
        %1275 = vmatpush1.msra.mxu0 0.0
        %1276 = vmatprep.subr.mxu0 0.0
        %1277 = vmatpush1.msra.mxu0 0.0
        %1278 = vmatprep.subr.mxu0 0.0
        %1279 = vmatpush1.msra.mxu0 0.0
        %1280 = vmatprep.subr.mxu0 0.0
        %1281 = vmatpush1.msra.mxu0 0.0
        %1282 = vmatprep.subr.mxu0 0.0
        %1283 = vmatpush1.msra.mxu0 0.0
        %1284 = vmatprep.subr.mxu0 0.0
        %1285 = vmatpush1.msra.mxu0 0.0
        %1286 = vmatprep.subr.mxu0 0.0
        %1287 = vmatpush1.msra.mxu0 0.0
        %1288 = vmatprep.subr.mxu0 0.0
        %1289 = vmatpush1.msra.mxu0 0.0
        %1290 = vmatprep.subr.mxu0 0.0
        %1291 = vmatpush1.msra.mxu0 0.0
        %1292 = vmatprep.subr.mxu0 0.0
        %1293 = vmatpush1.msra.mxu0 0.0
        %1294 = vmatprep.subr.mxu0 0.0
        %1295 = vmatpush1.msra.mxu0 0.0
        %1296 = vmatprep.subr.mxu0 0.0
        %1297 = vmatpush1.msra.mxu0 0.0
        %1298 = vmatprep.subr.mxu0 0.0
        %1299 = vmatpush1.msra.mxu0 0.0
        %1300 = vmatprep.subr.mxu0 0.0
        %1301 = vmatpush1.msra.mxu0 0.0
        %1302 = vmatprep.subr.mxu0 0.0
        %1303 = vmatpush1.msra.mxu0 0.0
        %1304 = vmatprep.subr.mxu0 0.0
        %1305 = vmatpush1.msra.mxu0 0.0
        %1306 = vmatprep.subr.mxu0 0.0
        %1307 = vmatpush1.msra.mxu0 0.0
        %1308 = vmatprep.subr.mxu0 0.0
        %1309 = vmatpush1.msra.mxu0 0.0
        %1310 = vmatprep.mubr.f32.mxu0 0.0
        %1311 = vmatmul.mubr.f32.gmra.mrb[0].mxu0 %v1244
        %v1312 = vpop.f32.mrb[0].mxu0
        %v1313 = vadd.f32 0.0, %v1312
        %v1314 = vpop.f32.mrb[0].mxu0
        %1315 = vdwg.mxu0
        %v1317 = vsel %vm899, %v1058, 0
        %1319 = vmatprep.subr.mxu0 0.0
        %1320 = vmatpush1.msra.mxu0 %v1061
        %1321 = vmatprep.subr.mxu0 0.0
        %1322 = vmatpush1.msra.mxu0 %v1062
        %1323 = vmatprep.subr.mxu0 0.0
        %1324 = vmatpush1.msra.mxu0 %v1063
        %1325 = vmatprep.subr.mxu0 0.0
        %1326 = vmatpush1.msra.mxu0 %v1064
        %1327 = vmatprep.subr.mxu0 0.0
        %1328 = vmatpush1.msra.mxu0 %v1065
        %1329 = vmatprep.subr.mxu0 0.0
        %1330 = vmatpush1.msra.mxu0 %v1066
        %1331 = vmatprep.subr.mxu0 0.0
        %1332 = vmatpush1.msra.mxu0 %v1067
        %1333 = vmatprep.subr.mxu0 0.0
        %1334 = vmatpush1.msra.mxu0 %v1068
        %1335 = vmatprep.subr.mxu0 0.0
        %1336 = vmatpush1.msra.mxu0 0.0
        %1337 = vmatprep.subr.mxu0 0.0
        %1338 = vmatpush1.msra.mxu0 0.0
        %1339 = vmatprep.subr.mxu0 0.0
        %1340 = vmatpush1.msra.mxu0 0.0
        %1341 = vmatprep.subr.mxu0 0.0
        %1342 = vmatpush1.msra.mxu0 0.0
        %1343 = vmatprep.subr.mxu0 0.0
        %1344 = vmatpush1.msra.mxu0 0.0
        %1345 = vmatprep.subr.mxu0 0.0
        %1346 = vmatpush1.msra.mxu0 0.0
        %1347 = vmatprep.subr.mxu0 0.0
        %1348 = vmatpush1.msra.mxu0 0.0
        %1349 = vmatprep.subr.mxu0 0.0
        %1350 = vmatpush1.msra.mxu0 0.0
        %1351 = vmatprep.subr.mxu0 0.0
        %1352 = vmatpush1.msra.mxu0 0.0
        %1353 = vmatprep.subr.mxu0 0.0
        %1354 = vmatpush1.msra.mxu0 0.0
        %1355 = vmatprep.subr.mxu0 0.0
        %1356 = vmatpush1.msra.mxu0 0.0
        %1357 = vmatprep.subr.mxu0 0.0
        %1358 = vmatpush1.msra.mxu0 0.0
        %1359 = vmatprep.subr.mxu0 0.0
        %1360 = vmatpush1.msra.mxu0 0.0
        %1361 = vmatprep.subr.mxu0 0.0
        %1362 = vmatpush1.msra.mxu0 0.0
        %1363 = vmatprep.subr.mxu0 0.0
        %1364 = vmatpush1.msra.mxu0 0.0
        %1365 = vmatprep.subr.mxu0 0.0
        %1366 = vmatpush1.msra.mxu0 0.0
        %1367 = vmatprep.subr.mxu0 0.0
        %1368 = vmatpush1.msra.mxu0 0.0
        %1369 = vmatprep.subr.mxu0 0.0
        %1370 = vmatpush1.msra.mxu0 0.0
        %1371 = vmatprep.subr.mxu0 0.0
        %1372 = vmatpush1.msra.mxu0 0.0
        %1373 = vmatprep.subr.mxu0 0.0
        %1374 = vmatpush1.msra.mxu0 0.0
        %1375 = vmatprep.subr.mxu0 0.0
        %1376 = vmatpush1.msra.mxu0 0.0
        %1377 = vmatprep.subr.mxu0 0.0
        %1378 = vmatpush1.msra.mxu0 0.0
        %1379 = vmatprep.subr.mxu0 0.0
        %1380 = vmatpush1.msra.mxu0 0.0
        %1381 = vmatprep.subr.mxu0 0.0
        %1382 = vmatpush1.msra.mxu0 0.0
        %1383 = vmatprep.mubr.f32.mxu0 0.0
        %1384 = vmatmul.mubr.f32.gmra.mrb[0].mxu0 %v1317
        %v1385 = vpop.f32.mrb[0].mxu0
        %v1386 = vadd.f32 %v1313, %v1385
        %v1387 = vpop.f32.mrb[0].mxu0
        %1388 = vdwg.mxu0
        %v1389 = vld [vmem:[#allocation7] sm:$0x1]
        %v1391 = vlaneseq
        %v1392 = vshrl.u32 %v1391, 7
        %v1393 = vsub.s32 0, %v1392
        %v1394 = vrot.slane %v1389, %v1393
        %v1396 = vadd.f32 %v1386, %v1394
        %v1397 = vadd.f32 %v692, %v1396
        %v1398 = vld [vmem:[#allocation9] sm:$0x1]
        %v1399 = vld [vmem:[#allocation10] sm:$0x1]
        %1400 = vadd.xlane.f32.xlu0 %v1397
        %v1401 = vpop.xlane.xlu0 %1400
        %v1402 = vmul.f32 %v1401, 0.02
        %v1403 = vmul.f32 %v1397, %v1397
        %1404 = vadd.xlane.f32.xlu0 %v1403
        %v1405 = vpop.xlane.xlu0 %1404
        %v1406 = vmul.f32 %v1405, 0.02
        %v1407 = vmul.f32 %v1402, %v1402
        %v1408 = vsub.f32 %v1406, %v1407
        %v1409 = vsub.f32 %v1397, %v1402
        %v1410 = vadd.f32 %v1408, 1e-05
        %v1411 = vrsqrt.pop %v1410
        %v1412 = vmul.f32 %v1409, %v1411
        %v1414 = vlaneseq
        %v1415 = vshrl.u32 %v1414, 7
        %v1416 = vsub.s32 0, %v1415
        %v1417 = vrot.slane %v1398, %v1416
        %v1419 = vmul.f32 %v1412, %v1417
        %v1421 = vlaneseq
        %v1422 = vshrl.u32 %v1421, 7
        %v1423 = vsub.s32 0, %v1422
        %v1424 = vrot.slane %v1399, %v1423
        %v1426 = vadd.f32 %v1419, %v1424
        %v1427 = vld [vmem:[#allocation12] sm:$0xff]
        %v1428 = vld [vmem:[#allocation12 + $0x8] sm:$0xff]
        %v1429 = vld [vmem:[#allocation12 + $0x10] sm:$0xff]
        %v1430 = vld [vmem:[#allocation12 + $0x18] sm:$0xff]
        %v1431 = vld [vmem:[#allocation12 + $0x20] sm:$0xff]
        %v1432 = vld [vmem:[#allocation12 + $0x28] sm:$0xff]
        %v1433 = vld [vmem:[#allocation12 + $0x30] sm:$0xff]
        %v1434 = vld [vmem:[#allocation12 + $0x38] sm:$0xff]
        %v1435 = vld [vmem:[#allocation12 + $0x40] sm:$0xff]
        %v1436 = vld [vmem:[#allocation12 + $0x48] sm:$0xff]
        %v1437 = vld [vmem:[#allocation12 + $0x50] sm:$0xff]
        %v1438 = vld [vmem:[#allocation12 + $0x58] sm:$0xff]
        %v1439 = vld [vmem:[#allocation12 + $0x60] sm:$0xff]
        %v1440 = vld [vmem:[#allocation12 + $0x68] sm:$0xff]
        %v1441 = vld [vmem:[#allocation12 + $0x70] sm:$0xff]
        %v1442 = vld [vmem:[#allocation12 + $0x78] sm:$0xff]
        %v1443 = vld [vmem:[#allocation13] sm:$0x1]
        %v1445 = vlaneseq
        %v1446 = vshrl.u32 %v1445, 7
        %v1447 = vsub.s32 0, %v1446
        %v1448 = vrot.slane %v1443, %v1447
        %1450 = vmatprep.subr.mxu0 0.0
        %1451 = vmatpush1.msra.mxu0 %v1427
        %1452 = vmatprep.subr.mxu0 0.0
        %1453 = vmatpush1.msra.mxu0 %v1428
        %1454 = vmatprep.subr.mxu0 0.0
        %1455 = vmatpush1.msra.mxu0 %v1429
        %1456 = vmatprep.subr.mxu0 0.0
        %1457 = vmatpush1.msra.mxu0 %v1430
        %1458 = vmatprep.subr.mxu0 0.0
        %1459 = vmatpush1.msra.mxu0 %v1431
        %1460 = vmatprep.subr.mxu0 0.0
        %1461 = vmatpush1.msra.mxu0 %v1432
        %1462 = vmatprep.subr.mxu0 0.0
        %1463 = vmatpush1.msra.mxu0 %v1433
        %1464 = vmatprep.subr.mxu0 0.0
        %1465 = vmatpush1.msra.mxu0 %v1434
        %1466 = vmatprep.subr.mxu0 0.0
        %1467 = vmatpush1.msra.mxu0 %v1435
        %1468 = vmatprep.subr.mxu0 0.0
        %1469 = vmatpush1.msra.mxu0 %v1436
        %1470 = vmatprep.subr.mxu0 0.0
        %1471 = vmatpush1.msra.mxu0 %v1437
        %1472 = vmatprep.subr.mxu0 0.0
        %1473 = vmatpush1.msra.mxu0 %v1438
        %1474 = vmatprep.subr.mxu0 0.0
        %1475 = vmatpush1.msra.mxu0 %v1439
        %1476 = vmatprep.subr.mxu0 0.0
        %1477 = vmatpush1.msra.mxu0 %v1440
        %1478 = vmatprep.subr.mxu0 0.0
        %1479 = vmatpush1.msra.mxu0 %v1441
        %1480 = vmatprep.subr.mxu0 0.0
        %1481 = vmatpush1.msra.mxu0 %v1442
        %1482 = vmatprep.subr.mxu0 0.0
        %1483 = vmatpush1.msra.mxu0 0.0
        %1484 = vmatprep.subr.mxu0 0.0
        %1485 = vmatpush1.msra.mxu0 0.0
        %1486 = vmatprep.subr.mxu0 0.0
        %1487 = vmatpush1.msra.mxu0 0.0
        %1488 = vmatprep.subr.mxu0 0.0
        %1489 = vmatpush1.msra.mxu0 0.0
        %1490 = vmatprep.subr.mxu0 0.0
        %1491 = vmatpush1.msra.mxu0 0.0
        %1492 = vmatprep.subr.mxu0 0.0
        %1493 = vmatpush1.msra.mxu0 0.0
        %1494 = vmatprep.subr.mxu0 0.0
        %1495 = vmatpush1.msra.mxu0 0.0
        %1496 = vmatprep.subr.mxu0 0.0
        %1497 = vmatpush1.msra.mxu0 0.0
        %1498 = vmatprep.subr.mxu0 0.0
        %1499 = vmatpush1.msra.mxu0 0.0
        %1500 = vmatprep.subr.mxu0 0.0
        %1501 = vmatpush1.msra.mxu0 0.0
        %1502 = vmatprep.subr.mxu0 0.0
        %1503 = vmatpush1.msra.mxu0 0.0
        %1504 = vmatprep.subr.mxu0 0.0
        %1505 = vmatpush1.msra.mxu0 0.0
        %1506 = vmatprep.subr.mxu0 0.0
        %1507 = vmatpush1.msra.mxu0 0.0
        %1508 = vmatprep.subr.mxu0 0.0
        %1509 = vmatpush1.msra.mxu0 0.0
        %1510 = vmatprep.subr.mxu0 0.0
        %1511 = vmatpush1.msra.mxu0 0.0
        %1512 = vmatprep.subr.mxu0 0.0
        %1513 = vmatpush1.msra.mxu0 0.0
        %1514 = vmatprep.mubr.f32.mxu0 0.0
        %1515 = vmatmul.mubr.f32.gmra.mrb[0].mxu0 %v1426
        %v1516 = vpop.f32.mrb[0].mxu0
        %v1517 = vadd.f32 %v1448, %v1516
        %v1518 = vpop.f32.mrb[0].mxu0
        %1519 = vdwg.mxu0
        %v1520 = vmax.f32 %v1517, 0.0
        %v1521 = vld [vmem:[#allocation15] sm:$0xff]
        %v1522 = vld [vmem:[#allocation15 + $0x8] sm:$0xff]
        %v1523 = vld [vmem:[#allocation15 + $0x10] sm:$0xff]
        %v1524 = vld [vmem:[#allocation15 + $0x18] sm:$0xff]
        %v1525 = vld [vmem:[#allocation15 + $0x20] sm:$0xff]
        %v1526 = vld [vmem:[#allocation15 + $0x28] sm:$0xff]
        %v1527 = vld [vmem:[#allocation15 + $0x30] sm:$0xff]
        %v1528 = vld [vmem:[#allocation15 + $0x38] sm:$0xff]
        %v1529 = vld [vmem:[#allocation15 + $0x40] sm:$0xff]
        %v1530 = vld [vmem:[#allocation15 + $0x48] sm:$0xff]
        %v1531 = vld [vmem:[#allocation15 + $0x50] sm:$0xff]
        %v1532 = vld [vmem:[#allocation15 + $0x58] sm:$0xff]
        %v1533 = vld [vmem:[#allocation15 + $0x60] sm:$0xff]
        %v1534 = vld [vmem:[#allocation15 + $0x68] sm:$0xff]
        %v1535 = vld [vmem:[#allocation15 + $0x70] sm:$0xff]
        %v1536 = vld [vmem:[#allocation15 + $0x78] sm:$0xff]
        %v1537 = vld [vmem:[#allocation16] sm:$0x1]
        %v1539 = vlaneseq
        %v1540 = vshrl.u32 %v1539, 7
        %v1541 = vsub.s32 0, %v1540
        %v1542 = vrot.slane %v1537, %v1541
        %1544 = vmatprep.subr.mxu0 0.0
        %1545 = vmatpush1.msra.mxu0 %v1521
        %1546 = vmatprep.subr.mxu0 0.0
        %1547 = vmatpush1.msra.mxu0 %v1522
        %1548 = vmatprep.subr.mxu0 0.0
        %1549 = vmatpush1.msra.mxu0 %v1523
        %1550 = vmatprep.subr.mxu0 0.0
        %1551 = vmatpush1.msra.mxu0 %v1524
        %1552 = vmatprep.subr.mxu0 0.0
        %1553 = vmatpush1.msra.mxu0 %v1525
        %1554 = vmatprep.subr.mxu0 0.0
        %1555 = vmatpush1.msra.mxu0 %v1526
        %1556 = vmatprep.subr.mxu0 0.0
        %1557 = vmatpush1.msra.mxu0 %v1527
        %1558 = vmatprep.subr.mxu0 0.0
        %1559 = vmatpush1.msra.mxu0 %v1528
        %1560 = vmatprep.subr.mxu0 0.0
        %1561 = vmatpush1.msra.mxu0 %v1529
        %1562 = vmatprep.subr.mxu0 0.0
        %1563 = vmatpush1.msra.mxu0 %v1530
        %1564 = vmatprep.subr.mxu0 0.0
        %1565 = vmatpush1.msra.mxu0 %v1531
        %1566 = vmatprep.subr.mxu0 0.0
        %1567 = vmatpush1.msra.mxu0 %v1532
        %1568 = vmatprep.subr.mxu0 0.0
        %1569 = vmatpush1.msra.mxu0 %v1533
        %1570 = vmatprep.subr.mxu0 0.0
        %1571 = vmatpush1.msra.mxu0 %v1534
        %1572 = vmatprep.subr.mxu0 0.0
        %1573 = vmatpush1.msra.mxu0 %v1535
        %1574 = vmatprep.subr.mxu0 0.0
        %1575 = vmatpush1.msra.mxu0 %v1536
        %1576 = vmatprep.subr.mxu0 0.0
        %1577 = vmatpush1.msra.mxu0 0.0
        %1578 = vmatprep.subr.mxu0 0.0
        %1579 = vmatpush1.msra.mxu0 0.0
        %1580 = vmatprep.subr.mxu0 0.0
        %1581 = vmatpush1.msra.mxu0 0.0
        %1582 = vmatprep.subr.mxu0 0.0
        %1583 = vmatpush1.msra.mxu0 0.0
        %1584 = vmatprep.subr.mxu0 0.0
        %1585 = vmatpush1.msra.mxu0 0.0
        %1586 = vmatprep.subr.mxu0 0.0
        %1587 = vmatpush1.msra.mxu0 0.0
        %1588 = vmatprep.subr.mxu0 0.0
        %1589 = vmatpush1.msra.mxu0 0.0
        %1590 = vmatprep.subr.mxu0 0.0
        %1591 = vmatpush1.msra.mxu0 0.0
        %1592 = vmatprep.subr.mxu0 0.0
        %1593 = vmatpush1.msra.mxu0 0.0
        %1594 = vmatprep.subr.mxu0 0.0
        %1595 = vmatpush1.msra.mxu0 0.0
        %1596 = vmatprep.subr.mxu0 0.0
        %1597 = vmatpush1.msra.mxu0 0.0
        %1598 = vmatprep.subr.mxu0 0.0
        %1599 = vmatpush1.msra.mxu0 0.0
        %1600 = vmatprep.subr.mxu0 0.0
        %1601 = vmatpush1.msra.mxu0 0.0
        %1602 = vmatprep.subr.mxu0 0.0
        %1603 = vmatpush1.msra.mxu0 0.0
        %1604 = vmatprep.subr.mxu0 0.0
        %1605 = vmatpush1.msra.mxu0 0.0
        %1606 = vmatprep.subr.mxu0 0.0
        %1607 = vmatpush1.msra.mxu0 0.0
        %1608 = vmatprep.mubr.f32.mxu0 0.0
        %1609 = vmatmul.mubr.f32.gmra.mrb[0].mxu0 %v1520
        %v1610 = vpop.f32.mrb[0].mxu0
        %v1611 = vadd.f32 %v1542, %v1610
        %v1612 = vpop.f32.mrb[0].mxu0
        %1613 = vdwg.mxu0
        %v1614 = vadd.f32 %v1426, %v1611
        %v1615 = vld [vmem:[#allocation18] sm:$0x1]
        %v1616 = vld [vmem:[#allocation19] sm:$0x1]
        %1617 = vadd.xlane.f32.xlu0 %v1614
        %v1618 = vpop.xlane.xlu0 %1617
        %v1619 = vmul.f32 %v1618, 0.02
        %v1620 = vmul.f32 %v1614, %v1614
        %1621 = vadd.xlane.f32.xlu0 %v1620
        %v1622 = vpop.xlane.xlu0 %1621
        %v1623 = vmul.f32 %v1622, 0.02
        %v1624 = vmul.f32 %v1619, %v1619
        %v1625 = vsub.f32 %v1623, %v1624
        %v1626 = vsub.f32 %v1614, %v1619
        %v1627 = vadd.f32 %v1625, 1e-05
        %v1628 = vrsqrt.pop %v1627
        %v1629 = vmul.f32 %v1626, %v1628
        %v1631 = vlaneseq
        %v1632 = vshrl.u32 %v1631, 7
        %v1633 = vsub.s32 0, %v1632
        %v1634 = vrot.slane %v1615, %v1633
        %v1636 = vmul.f32 %v1629, %v1634
        %v1638 = vlaneseq
        %v1639 = vshrl.u32 %v1638, 7
        %v1640 = vsub.s32 0, %v1639
        %v1641 = vrot.slane %v1616, %v1640
        %v1643 = vadd.f32 %v1636, %v1641
        %s1644 = scalar_lea.vmem [#allocation2], 384
        %v1645 = vld [vmem:[%s1644] sm:$0xff]
        %v1646 = vld [vmem:[%s1644 + $0x8] sm:$0xff]
        %v1647 = vld [vmem:[%s1644 + $0x10] sm:$0xff]
        %v1648 = vld [vmem:[%s1644 + $0x18] sm:$0xff]
        %v1649 = vld [vmem:[%s1644 + $0x20] sm:$0xff]
        %v1650 = vld [vmem:[%s1644 + $0x28] sm:$0xff]
        %v1651 = vld [vmem:[%s1644 + $0x30] sm:$0xff]
        %v1652 = vld [vmem:[%s1644 + $0x38] sm:$0xff]
        %v1653 = vld [vmem:[%s1644 + $0x40] sm:$0xff]
        %v1654 = vld [vmem:[%s1644 + $0x48] sm:$0xff]
        %v1655 = vld [vmem:[%s1644 + $0x50] sm:$0xff]
        %v1656 = vld [vmem:[%s1644 + $0x58] sm:$0xff]
        %v1657 = vld [vmem:[%s1644 + $0x60] sm:$0xff]
        %v1658 = vld [vmem:[%s1644 + $0x68] sm:$0xff]
        %v1659 = vld [vmem:[%s1644 + $0x70] sm:$0xff]
        %v1660 = vld [vmem:[%s1644 + $0x78] sm:$0xff]
        %v1661 = vld [vmem:[%s1644 + $0x80] sm:$0xff]
        %v1662 = vld [vmem:[%s1644 + $0x88] sm:$0xff]
        %v1663 = vld [vmem:[%s1644 + $0x90] sm:$0xff]
        %v1664 = vld [vmem:[%s1644 + $0x98] sm:$0xff]
        %v1665 = vld [vmem:[%s1644 + $0xa0] sm:$0xff]
        %v1666 = vld [vmem:[%s1644 + $0xa8] sm:$0xff]
        %v1667 = vld [vmem:[%s1644 + $0xb0] sm:$0xff]
        %v1668 = vld [vmem:[%s1644 + $0xb8] sm:$0xff]
        %v1669 = vld [vmem:[%s1644 + $0xc0] sm:$0xff]
        %v1670 = vld [vmem:[%s1644 + $0xc8] sm:$0xff]
        %v1671 = vld [vmem:[%s1644 + $0xd0] sm:$0xff]
        %v1672 = vld [vmem:[%s1644 + $0xd8] sm:$0xff]
        %v1673 = vld [vmem:[%s1644 + $0xe0] sm:$0xff]
        %v1674 = vld [vmem:[%s1644 + $0xe8] sm:$0xff]
        %v1675 = vld [vmem:[%s1644 + $0xf0] sm:$0xff]
        %v1676 = vld [vmem:[%s1644 + $0xf8] sm:$0xff]
        %v1677 = vld [vmem:[%s1644 + $0x100] sm:$0xff]
        %v1678 = vld [vmem:[%s1644 + $0x108] sm:$0xff]
        %v1679 = vld [vmem:[%s1644 + $0x110] sm:$0xff]
        %v1680 = vld [vmem:[%s1644 + $0x118] sm:$0xff]
        %v1681 = vld [vmem:[%s1644 + $0x120] sm:$0xff]
        %v1682 = vld [vmem:[%s1644 + $0x128] sm:$0xff]
        %v1683 = vld [vmem:[%s1644 + $0x130] sm:$0xff]
        %v1684 = vld [vmem:[%s1644 + $0x138] sm:$0xff]
        %v1685 = vld [vmem:[%s1644 + $0x140] sm:$0xff]
        %v1686 = vld [vmem:[%s1644 + $0x148] sm:$0xff]
        %v1687 = vld [vmem:[%s1644 + $0x150] sm:$0xff]
        %v1688 = vld [vmem:[%s1644 + $0x158] sm:$0xff]
        %v1689 = vld [vmem:[%s1644 + $0x160] sm:$0xff]
        %v1690 = vld [vmem:[%s1644 + $0x168] sm:$0xff]
        %v1691 = vld [vmem:[%s1644 + $0x170] sm:$0xff]
        %v1692 = vld [vmem:[%s1644 + $0x178] sm:$0xff]
        %s1693 = scalar_lea.vmem [#allocation4], 3
        %v1694 = vld [vmem:[%s1693] sm:$0x7]
        %v1696 = vlaneseq
        %v1697 = vshrl.u32 %v1696, 7
        %v1698 = vsub.s32 0, %v1697
        %v1699 = vrot.slane %v1694, %v1698
        %v1700 = vlaneseq
        %v1701 = vshrl.u32 %v1700, 7
        %v1702 = vsub.s32 1, %v1701
        %v1703 = vrot.slane %v1694, %v1702
        %v1704 = vlaneseq
        %v1705 = vshrl.u32 %v1704, 7
        %v1706 = vsub.s32 2, %v1705
        %v1707 = vrot.slane %v1694, %v1706
        %1711 = vmatprep.subr.mxu0 %v1646
        %1712 = vmatpush1.msra.mxu0 %v1645
        %1713 = vmatprep.subr.mxu0 %v1649
        %1714 = vmatpush1.msra.mxu0 %v1648
        %1715 = vmatprep.subr.mxu0 %v1652
        %1716 = vmatpush1.msra.mxu0 %v1651
        %1717 = vmatprep.subr.mxu0 %v1655
        %1718 = vmatpush1.msra.mxu0 %v1654
        %1719 = vmatprep.subr.mxu0 %v1658
        %1720 = vmatpush1.msra.mxu0 %v1657
        %1721 = vmatprep.subr.mxu0 %v1661
        %1722 = vmatpush1.msra.mxu0 %v1660
        %1723 = vmatprep.subr.mxu0 %v1664
        %1724 = vmatpush1.msra.mxu0 %v1663
        %1725 = vmatprep.subr.mxu0 %v1667
        %1726 = vmatpush1.msra.mxu0 %v1666
        %1727 = vmatprep.subr.mxu0 %v1670
        %1728 = vmatpush1.msra.mxu0 %v1669
        %1729 = vmatprep.subr.mxu0 %v1673
        %1730 = vmatpush1.msra.mxu0 %v1672
        %1731 = vmatprep.subr.mxu0 %v1676
        %1732 = vmatpush1.msra.mxu0 %v1675
        %1733 = vmatprep.subr.mxu0 %v1679
        %1734 = vmatpush1.msra.mxu0 %v1678
        %1735 = vmatprep.subr.mxu0 %v1682
        %1736 = vmatpush1.msra.mxu0 %v1681
        %1737 = vmatprep.subr.mxu0 %v1685
        %1738 = vmatpush1.msra.mxu0 %v1684
        %1739 = vmatprep.subr.mxu0 %v1688
        %1740 = vmatpush1.msra.mxu0 %v1687
        %1741 = vmatprep.subr.mxu0 %v1691
        %1742 = vmatpush1.msra.mxu0 %v1690
        %1743 = vmatprep.subr.mxu0 0.0
        %1744 = vmatpush1.msra.mxu0 0.0
        %1745 = vmatprep.subr.mxu0 0.0
        %1746 = vmatpush1.msra.mxu0 0.0
        %1747 = vmatprep.subr.mxu0 0.0
        %1748 = vmatpush1.msra.mxu0 0.0
        %1749 = vmatprep.subr.mxu0 0.0
        %1750 = vmatpush1.msra.mxu0 0.0
        %1751 = vmatprep.subr.mxu0 0.0
        %1752 = vmatpush1.msra.mxu0 0.0
        %1753 = vmatprep.subr.mxu0 0.0
        %1754 = vmatpush1.msra.mxu0 0.0
        %1755 = vmatprep.subr.mxu0 0.0
        %1756 = vmatpush1.msra.mxu0 0.0
        %1757 = vmatprep.subr.mxu0 0.0
        %1758 = vmatpush1.msra.mxu0 0.0
        %1759 = vmatprep.subr.mxu0 0.0
        %1760 = vmatpush1.msra.mxu0 0.0
        %1761 = vmatprep.subr.mxu0 0.0
        %1762 = vmatpush1.msra.mxu0 0.0
        %1763 = vmatprep.subr.mxu0 0.0
        %1764 = vmatpush1.msra.mxu0 0.0
        %1765 = vmatprep.subr.mxu0 0.0
        %1766 = vmatpush1.msra.mxu0 0.0
        %1767 = vmatprep.subr.mxu0 0.0
        %1768 = vmatpush1.msra.mxu0 0.0
        %1769 = vmatprep.subr.mxu0 0.0
        %1770 = vmatpush1.msra.mxu0 0.0
        %1771 = vmatprep.subr.mxu0 0.0
        %1772 = vmatpush1.msra.mxu0 0.0
        %1773 = vmatprep.subr.mxu0 0.0
        %1774 = vmatpush1.msra.mxu0 0.0
        %1775 = vmatprep.mubr.f32.mxu0 0.0
        %1776 = vmatmul.mubr.f32.gmra.mrb[0].mxu0 %v1643
        %v1777 = vpop.f32.mrb[0].mxu0
        %v1778 = vadd.f32 %v1699, %v1777
        %v1779 = vpop.f32.mrb[0].mxu0
        %v1780 = vadd.f32 %v1703, %v1779
        %1781 = vdwg.mxu0
        %1782 = vmatprep.subr.mxu0 0.0
        %1783 = vmatpush1.msra.mxu0 %v1647
        %1784 = vmatprep.subr.mxu0 0.0
        %1785 = vmatpush1.msra.mxu0 %v1650
        %1786 = vmatprep.subr.mxu0 0.0
        %1787 = vmatpush1.msra.mxu0 %v1653
        %1788 = vmatprep.subr.mxu0 0.0
        %1789 = vmatpush1.msra.mxu0 %v1656
        %1790 = vmatprep.subr.mxu0 0.0
        %1791 = vmatpush1.msra.mxu0 %v1659
        %1792 = vmatprep.subr.mxu0 0.0
        %1793 = vmatpush1.msra.mxu0 %v1662
        %1794 = vmatprep.subr.mxu0 0.0
        %1795 = vmatpush1.msra.mxu0 %v1665
        %1796 = vmatprep.subr.mxu0 0.0
        %1797 = vmatpush1.msra.mxu0 %v1668
        %1798 = vmatprep.subr.mxu0 0.0
        %1799 = vmatpush1.msra.mxu0 %v1671
        %1800 = vmatprep.subr.mxu0 0.0
        %1801 = vmatpush1.msra.mxu0 %v1674
        %1802 = vmatprep.subr.mxu0 0.0
        %1803 = vmatpush1.msra.mxu0 %v1677
        %1804 = vmatprep.subr.mxu0 0.0
        %1805 = vmatpush1.msra.mxu0 %v1680
        %1806 = vmatprep.subr.mxu0 0.0
        %1807 = vmatpush1.msra.mxu0 %v1683
        %1808 = vmatprep.subr.mxu0 0.0
        %1809 = vmatpush1.msra.mxu0 %v1686
        %1810 = vmatprep.subr.mxu0 0.0
        %1811 = vmatpush1.msra.mxu0 %v1689
        %1812 = vmatprep.subr.mxu0 0.0
        %1813 = vmatpush1.msra.mxu0 %v1692
        %1814 = vmatprep.subr.mxu0 0.0
        %1815 = vmatpush1.msra.mxu0 0.0
        %1816 = vmatprep.subr.mxu0 0.0
        %1817 = vmatpush1.msra.mxu0 0.0
        %1818 = vmatprep.subr.mxu0 0.0
        %1819 = vmatpush1.msra.mxu0 0.0
        %1820 = vmatprep.subr.mxu0 0.0
        %1821 = vmatpush1.msra.mxu0 0.0
        %1822 = vmatprep.subr.mxu0 0.0
        %1823 = vmatpush1.msra.mxu0 0.0
        %1824 = vmatprep.subr.mxu0 0.0
        %1825 = vmatpush1.msra.mxu0 0.0
        %1826 = vmatprep.subr.mxu0 0.0
        %1827 = vmatpush1.msra.mxu0 0.0
        %1828 = vmatprep.subr.mxu0 0.0
        %1829 = vmatpush1.msra.mxu0 0.0
        %1830 = vmatprep.subr.mxu0 0.0
        %1831 = vmatpush1.msra.mxu0 0.0
        %1832 = vmatprep.subr.mxu0 0.0
        %1833 = vmatpush1.msra.mxu0 0.0
        %1834 = vmatprep.subr.mxu0 0.0
        %1835 = vmatpush1.msra.mxu0 0.0
        %1836 = vmatprep.subr.mxu0 0.0
        %1837 = vmatpush1.msra.mxu0 0.0
        %1838 = vmatprep.subr.mxu0 0.0
        %1839 = vmatpush1.msra.mxu0 0.0
        %1840 = vmatprep.subr.mxu0 0.0
        %1841 = vmatpush1.msra.mxu0 0.0
        %1842 = vmatprep.subr.mxu0 0.0
        %1843 = vmatpush1.msra.mxu0 0.0
        %1844 = vmatprep.subr.mxu0 0.0
        %1845 = vmatpush1.msra.mxu0 0.0
        %1846 = vmatprep.mubr.f32.mxu0 0.0
        %1847 = vmatmul.mubr.f32.gmra.mrb[0].mxu0 %v1643
        %v1848 = vpop.f32.mrb[0].mxu0
        %v1849 = vadd.f32 %v1707, %v1848
        %v1850 = vpop.f32.mrb[0].mxu0
        %1851 = vdwg.mxu0
        %v1853 = vsel %vm899, %v1778, 0
        %v1856 = vsel %vm899, %v1780, 0
        %1858 = vmatprep.subr.mxu0 0.0
        %1859 = vmatpush1.xpose.msra.mxu0 %v1856
        %1860 = vmatprep.subr.mxu0 0.0
        %1861 = vmatpush1.xpose.msra.mxu0 0.0
        %1862 = vmatprep.subr.mxu0 0.0
        %1863 = vmatpush1.xpose.msra.mxu0 0.0
        %1864 = vmatprep.subr.mxu0 0.0
        %1865 = vmatpush1.xpose.msra.mxu0 0.0
        %1866 = vmatprep.subr.mxu0 0.0
        %1867 = vmatpush1.xpose.msra.mxu0 0.0
        %1868 = vmatprep.subr.mxu0 0.0
        %1869 = vmatpush1.xpose.msra.mxu0 0.0
        %1870 = vmatprep.subr.mxu0 0.0
        %1871 = vmatpush1.xpose.msra.mxu0 0.0
        %1872 = vmatprep.subr.mxu0 0.0
        %1873 = vmatpush1.xpose.msra.mxu0 0.0
        %1874 = vmatprep.subr.mxu0 0.0
        %1875 = vmatpush1.xpose.msra.mxu0 0.0
        %1876 = vmatprep.subr.mxu0 0.0
        %1877 = vmatpush1.xpose.msra.mxu0 0.0
        %1878 = vmatprep.subr.mxu0 0.0
        %1879 = vmatpush1.xpose.msra.mxu0 0.0
        %1880 = vmatprep.subr.mxu0 0.0
        %1881 = vmatpush1.xpose.msra.mxu0 0.0
        %1882 = vmatprep.subr.mxu0 0.0
        %1883 = vmatpush1.xpose.msra.mxu0 0.0
        %1884 = vmatprep.subr.mxu0 0.0
        %1885 = vmatpush1.xpose.msra.mxu0 0.0
        %1886 = vmatprep.subr.mxu0 0.0
        %1887 = vmatpush1.xpose.msra.mxu0 0.0
        %1888 = vmatprep.subr.mxu0 0.0
        %1889 = vmatpush1.xpose.msra.mxu0 0.0
        %1890 = vmatprep.subr.mxu0 0.0
        %1891 = vmatpush1.xpose.msra.mxu0 0.0
        %1892 = vmatprep.subr.mxu0 0.0
        %1893 = vmatpush1.xpose.msra.mxu0 0.0
        %1894 = vmatprep.subr.mxu0 0.0
        %1895 = vmatpush1.xpose.msra.mxu0 0.0
        %1896 = vmatprep.subr.mxu0 0.0
        %1897 = vmatpush1.xpose.msra.mxu0 0.0
        %1898 = vmatprep.subr.mxu0 0.0
        %1899 = vmatpush1.xpose.msra.mxu0 0.0
        %1900 = vmatprep.subr.mxu0 0.0
        %1901 = vmatpush1.xpose.msra.mxu0 0.0
        %1902 = vmatprep.subr.mxu0 0.0
        %1903 = vmatpush1.xpose.msra.mxu0 0.0
        %1904 = vmatprep.subr.mxu0 0.0
        %1905 = vmatpush1.xpose.msra.mxu0 0.0
        %1906 = vmatprep.subr.mxu0 0.0
        %1907 = vmatpush1.xpose.msra.mxu0 0.0
        %1908 = vmatprep.subr.mxu0 0.0
        %1909 = vmatpush1.xpose.msra.mxu0 0.0
        %1910 = vmatprep.subr.mxu0 0.0
        %1911 = vmatpush1.xpose.msra.mxu0 0.0
        %1912 = vmatprep.subr.mxu0 0.0
        %1913 = vmatpush1.xpose.msra.mxu0 0.0
        %1914 = vmatprep.subr.mxu0 0.0
        %1915 = vmatpush1.xpose.msra.mxu0 0.0
        %1916 = vmatprep.subr.mxu0 0.0
        %1917 = vmatpush1.xpose.msra.mxu0 0.0
        %1918 = vmatprep.subr.mxu0 0.0
        %1919 = vmatpush1.xpose.msra.mxu0 0.0
        %1920 = vmatprep.subr.mxu0 0.0
        %1921 = vmatpush1.xpose.msra.mxu0 0.0
        %1922 = vmatprep.mubr.f32.mxu0 0.0
        %1923 = vmatmul.mubr.f32.gmra.mrb[0].mxu0 %v1853
        %v1924 = vpop.f32.mrb[0].mxu0
        %v1925 = vadd.f32 0.0, %v1924
        %v1926 = vpop.f32.mrb[0].mxu0
        %1927 = vdwg.mxu0
        %v1928 = vsel %vm976, %v1925, -inf
        %1929 = vmax.xlane.f32.xlu0 %v1928
        %v1930 = vpop.xlane.xlu0 %1929
        %v1931 = vsub.f32 %v1925, %v1930
        %v1932 = vmul.f32 %v1931, 1.442695
        %v1933 = vpow.pop %v1932
        %v1934 = vsel %vm976, %v1933, 0.0
        %1935 = vadd.xlane.f32.xlu0 %v1934
        %v1936 = vpop.xlane.xlu0 %1935
        %v1937 = vrcp.pop %v1936
        %v1938 = vmul.f32 %v1933, %v1937
        %v1940 = vsel %vm976, %v1938, 0
        %1942 = vmatprep.subr.mxu0 0.0
        %1943 = vmatpush1.msra.mxu0 %v1849
        %1944 = vmatprep.subr.mxu0 0.0
        %1945 = vmatpush1.msra.mxu0 0.0
        %1946 = vmatprep.subr.mxu0 0.0
        %1947 = vmatpush1.msra.mxu0 0.0
        %1948 = vmatprep.subr.mxu0 0.0
        %1949 = vmatpush1.msra.mxu0 0.0
        %1950 = vmatprep.subr.mxu0 0.0
        %1951 = vmatpush1.msra.mxu0 0.0
        %1952 = vmatprep.subr.mxu0 0.0
        %1953 = vmatpush1.msra.mxu0 0.0
        %1954 = vmatprep.subr.mxu0 0.0
        %1955 = vmatpush1.msra.mxu0 0.0
        %1956 = vmatprep.subr.mxu0 0.0
        %1957 = vmatpush1.msra.mxu0 0.0
        %1958 = vmatprep.subr.mxu0 0.0
        %1959 = vmatpush1.msra.mxu0 0.0
        %1960 = vmatprep.subr.mxu0 0.0
        %1961 = vmatpush1.msra.mxu0 0.0
        %1962 = vmatprep.subr.mxu0 0.0
        %1963 = vmatpush1.msra.mxu0 0.0
        %1964 = vmatprep.subr.mxu0 0.0
        %1965 = vmatpush1.msra.mxu0 0.0
        %1966 = vmatprep.subr.mxu0 0.0
        %1967 = vmatpush1.msra.mxu0 0.0
        %1968 = vmatprep.subr.mxu0 0.0
        %1969 = vmatpush1.msra.mxu0 0.0
        %1970 = vmatprep.subr.mxu0 0.0
        %1971 = vmatpush1.msra.mxu0 0.0
        %1972 = vmatprep.subr.mxu0 0.0
        %1973 = vmatpush1.msra.mxu0 0.0
        %1974 = vmatprep.subr.mxu0 0.0
        %1975 = vmatpush1.msra.mxu0 0.0
        %1976 = vmatprep.subr.mxu0 0.0
        %1977 = vmatpush1.msra.mxu0 0.0
        %1978 = vmatprep.subr.mxu0 0.0
        %1979 = vmatpush1.msra.mxu0 0.0
        %1980 = vmatprep.subr.mxu0 0.0
        %1981 = vmatpush1.msra.mxu0 0.0
        %1982 = vmatprep.subr.mxu0 0.0
        %1983 = vmatpush1.msra.mxu0 0.0
        %1984 = vmatprep.subr.mxu0 0.0
        %1985 = vmatpush1.msra.mxu0 0.0
        %1986 = vmatprep.subr.mxu0 0.0
        %1987 = vmatpush1.msra.mxu0 0.0
        %1988 = vmatprep.subr.mxu0 0.0
        %1989 = vmatpush1.msra.mxu0 0.0
        %1990 = vmatprep.subr.mxu0 0.0
        %1991 = vmatpush1.msra.mxu0 0.0
        %1992 = vmatprep.subr.mxu0 0.0
        %1993 = vmatpush1.msra.mxu0 0.0
        %1994 = vmatprep.subr.mxu0 0.0
        %1995 = vmatpush1.msra.mxu0 0.0
        %1996 = vmatprep.subr.mxu0 0.0
        %1997 = vmatpush1.msra.mxu0 0.0
        %1998 = vmatprep.subr.mxu0 0.0
        %1999 = vmatpush1.msra.mxu0 0.0
        %2000 = vmatprep.subr.mxu0 0.0
        %2001 = vmatpush1.msra.mxu0 0.0
        %2002 = vmatprep.subr.mxu0 0.0
        %2003 = vmatpush1.msra.mxu0 0.0
        %2004 = vmatprep.subr.mxu0 0.0
        %2005 = vmatpush1.msra.mxu0 0.0
        %2006 = vmatprep.mubr.f32.mxu0 0.0
        %2007 = vmatmul.mubr.f32.gmra.mrb[0].mxu0 %v1940
        %v2008 = vpop.f32.mrb[0].mxu0
        %v2009 = vadd.f32 0.0, %v2008
        %v2010 = vpop.f32.mrb[0].mxu0
        %2011 = vdwg.mxu0
        %s2012 = scalar_lea.vmem [#allocation6], 128
        %v2013 = vld [vmem:[%s2012] sm:$0xff]
        %v2014 = vld [vmem:[%s2012 + $0x8] sm:$0xff]
        %v2015 = vld [vmem:[%s2012 + $0x10] sm:$0xff]
        %v2016 = vld [vmem:[%s2012 + $0x18] sm:$0xff]
        %v2017 = vld [vmem:[%s2012 + $0x20] sm:$0xff]
        %v2018 = vld [vmem:[%s2012 + $0x28] sm:$0xff]
        %v2019 = vld [vmem:[%s2012 + $0x30] sm:$0xff]
        %v2020 = vld [vmem:[%s2012 + $0x38] sm:$0xff]
        %2021 = vrot.lane.b32.xlu0 %v1778, 64
        %v2022 = vpop.permute.xlu0 %2021
        %2023 = vrot.lane.b32.xlu0 %v1780, 64
        %v2024 = vpop.permute.xlu0 %2023
        %v2025 = vsel %vm899, %v2022, 0
        %v2027 = vsel %vm899, %v2024, 0
        %2029 = vmatprep.subr.mxu0 0.0
        %2030 = vmatpush1.xpose.msra.mxu0 %v2027
        %2031 = vmatprep.subr.mxu0 0.0
        %2032 = vmatpush1.xpose.msra.mxu0 0.0
        %2033 = vmatprep.subr.mxu0 0.0
        %2034 = vmatpush1.xpose.msra.mxu0 0.0
        %2035 = vmatprep.subr.mxu0 0.0
        %2036 = vmatpush1.xpose.msra.mxu0 0.0
        %2037 = vmatprep.subr.mxu0 0.0
        %2038 = vmatpush1.xpose.msra.mxu0 0.0
        %2039 = vmatprep.subr.mxu0 0.0
        %2040 = vmatpush1.xpose.msra.mxu0 0.0
        %2041 = vmatprep.subr.mxu0 0.0
        %2042 = vmatpush1.xpose.msra.mxu0 0.0
        %2043 = vmatprep.subr.mxu0 0.0
        %2044 = vmatpush1.xpose.msra.mxu0 0.0
        %2045 = vmatprep.subr.mxu0 0.0
        %2046 = vmatpush1.xpose.msra.mxu0 0.0
        %2047 = vmatprep.subr.mxu0 0.0
        %2048 = vmatpush1.xpose.msra.mxu0 0.0
        %2049 = vmatprep.subr.mxu0 0.0
        %2050 = vmatpush1.xpose.msra.mxu0 0.0
        %2051 = vmatprep.subr.mxu0 0.0
        %2052 = vmatpush1.xpose.msra.mxu0 0.0
        %2053 = vmatprep.subr.mxu0 0.0
        %2054 = vmatpush1.xpose.msra.mxu0 0.0
        %2055 = vmatprep.subr.mxu0 0.0
        %2056 = vmatpush1.xpose.msra.mxu0 0.0
        %2057 = vmatprep.subr.mxu0 0.0
        %2058 = vmatpush1.xpose.msra.mxu0 0.0
        %2059 = vmatprep.subr.mxu0 0.0
        %2060 = vmatpush1.xpose.msra.mxu0 0.0
        %2061 = vmatprep.subr.mxu0 0.0
        %2062 = vmatpush1.xpose.msra.mxu0 0.0
        %2063 = vmatprep.subr.mxu0 0.0
        %2064 = vmatpush1.xpose.msra.mxu0 0.0
        %2065 = vmatprep.subr.mxu0 0.0
        %2066 = vmatpush1.xpose.msra.mxu0 0.0
        %2067 = vmatprep.subr.mxu0 0.0
        %2068 = vmatpush1.xpose.msra.mxu0 0.0
        %2069 = vmatprep.subr.mxu0 0.0
        %2070 = vmatpush1.xpose.msra.mxu0 0.0
        %2071 = vmatprep.subr.mxu0 0.0
        %2072 = vmatpush1.xpose.msra.mxu0 0.0
        %2073 = vmatprep.subr.mxu0 0.0
        %2074 = vmatpush1.xpose.msra.mxu0 0.0
        %2075 = vmatprep.subr.mxu0 0.0
        %2076 = vmatpush1.xpose.msra.mxu0 0.0
        %2077 = vmatprep.subr.mxu0 0.0
        %2078 = vmatpush1.xpose.msra.mxu0 0.0
        %2079 = vmatprep.subr.mxu0 0.0
        %2080 = vmatpush1.xpose.msra.mxu0 0.0
        %2081 = vmatprep.subr.mxu0 0.0
        %2082 = vmatpush1.xpose.msra.mxu0 0.0
        %2083 = vmatprep.subr.mxu0 0.0
        %2084 = vmatpush1.xpose.msra.mxu0 0.0
        %2085 = vmatprep.subr.mxu0 0.0
        %2086 = vmatpush1.xpose.msra.mxu0 0.0
        %2087 = vmatprep.subr.mxu0 0.0
        %2088 = vmatpush1.xpose.msra.mxu0 0.0
        %2089 = vmatprep.subr.mxu0 0.0
        %2090 = vmatpush1.xpose.msra.mxu0 0.0
        %2091 = vmatprep.subr.mxu0 0.0
        %2092 = vmatpush1.xpose.msra.mxu0 0.0
        %2093 = vmatprep.mubr.f32.mxu0 0.0
        %2094 = vmatmul.mubr.f32.gmra.mrb[0].mxu0 %v2025
        %v2095 = vpop.f32.mrb[0].mxu0
        %v2096 = vadd.f32 0.0, %v2095
        %v2097 = vpop.f32.mrb[0].mxu0
        %2098 = vdwg.mxu0
        %v2099 = vsel %vm976, %v2096, -inf
        %2100 = vmax.xlane.f32.xlu0 %v2099
        %v2101 = vpop.xlane.xlu0 %2100
        %v2102 = vsub.f32 %v2096, %v2101
        %v2103 = vmul.f32 %v2102, 1.442695
        %v2104 = vpow.pop %v2103
        %v2105 = vsel %vm976, %v2104, 0.0
        %2106 = vadd.xlane.f32.xlu0 %v2105
        %v2107 = vpop.xlane.xlu0 %2106
        %v2108 = vrcp.pop %v2107
        %v2109 = vmul.f32 %v2104, %v2108
        %2111 = vrot.lane.b32.xlu0 %v1849, 64
        %v2112 = vpop.permute.xlu0 %2111
        %v2115 = vsel %vm976, %v2109, 0
        %2117 = vmatprep.subr.mxu0 0.0
        %2118 = vmatpush1.msra.mxu0 %v2112
        %2119 = vmatprep.subr.mxu0 0.0
        %2120 = vmatpush1.msra.mxu0 0.0
        %2121 = vmatprep.subr.mxu0 0.0
        %2122 = vmatpush1.msra.mxu0 0.0
        %2123 = vmatprep.subr.mxu0 0.0
        %2124 = vmatpush1.msra.mxu0 0.0
        %2125 = vmatprep.subr.mxu0 0.0
        %2126 = vmatpush1.msra.mxu0 0.0
        %2127 = vmatprep.subr.mxu0 0.0
        %2128 = vmatpush1.msra.mxu0 0.0
        %2129 = vmatprep.subr.mxu0 0.0
        %2130 = vmatpush1.msra.mxu0 0.0
        %2131 = vmatprep.subr.mxu0 0.0
        %2132 = vmatpush1.msra.mxu0 0.0
        %2133 = vmatprep.subr.mxu0 0.0
        %2134 = vmatpush1.msra.mxu0 0.0
        %2135 = vmatprep.subr.mxu0 0.0
        %2136 = vmatpush1.msra.mxu0 0.0
        %2137 = vmatprep.subr.mxu0 0.0
        %2138 = vmatpush1.msra.mxu0 0.0
        %2139 = vmatprep.subr.mxu0 0.0
        %2140 = vmatpush1.msra.mxu0 0.0
        %2141 = vmatprep.subr.mxu0 0.0
        %2142 = vmatpush1.msra.mxu0 0.0
        %2143 = vmatprep.subr.mxu0 0.0
        %2144 = vmatpush1.msra.mxu0 0.0
        %2145 = vmatprep.subr.mxu0 0.0
        %2146 = vmatpush1.msra.mxu0 0.0
        %2147 = vmatprep.subr.mxu0 0.0
        %2148 = vmatpush1.msra.mxu0 0.0
        %2149 = vmatprep.subr.mxu0 0.0
        %2150 = vmatpush1.msra.mxu0 0.0
        %2151 = vmatprep.subr.mxu0 0.0
        %2152 = vmatpush1.msra.mxu0 0.0
        %2153 = vmatprep.subr.mxu0 0.0
        %2154 = vmatpush1.msra.mxu0 0.0
        %2155 = vmatprep.subr.mxu0 0.0
        %2156 = vmatpush1.msra.mxu0 0.0
        %2157 = vmatprep.subr.mxu0 0.0
        %2158 = vmatpush1.msra.mxu0 0.0
        %2159 = vmatprep.subr.mxu0 0.0
        %2160 = vmatpush1.msra.mxu0 0.0
        %2161 = vmatprep.subr.mxu0 0.0
        %2162 = vmatpush1.msra.mxu0 0.0
        %2163 = vmatprep.subr.mxu0 0.0
        %2164 = vmatpush1.msra.mxu0 0.0
        %2165 = vmatprep.subr.mxu0 0.0
        %2166 = vmatpush1.msra.mxu0 0.0
        %2167 = vmatprep.subr.mxu0 0.0
        %2168 = vmatpush1.msra.mxu0 0.0
        %2169 = vmatprep.subr.mxu0 0.0
        %2170 = vmatpush1.msra.mxu0 0.0
        %2171 = vmatprep.subr.mxu0 0.0
        %2172 = vmatpush1.msra.mxu0 0.0
        %2173 = vmatprep.subr.mxu0 0.0
        %2174 = vmatpush1.msra.mxu0 0.0
        %2175 = vmatprep.subr.mxu0 0.0
        %2176 = vmatpush1.msra.mxu0 0.0
        %2177 = vmatprep.subr.mxu0 0.0
        %2178 = vmatpush1.msra.mxu0 0.0
        %2179 = vmatprep.subr.mxu0 0.0
        %2180 = vmatpush1.msra.mxu0 0.0
        %2181 = vmatprep.mubr.f32.mxu0 0.0
        %2182 = vmatmul.mubr.f32.gmra.mrb[0].mxu0 %v2115
        %v2183 = vpop.f32.mrb[0].mxu0
        %v2184 = vadd.f32 0.0, %v2183
        %v2185 = vpop.f32.mrb[0].mxu0
        %2186 = vdwg.mxu0
        %v2187 = vld [vmem:[%s2012 + $0x40] sm:$0xff]
        %v2188 = vld [vmem:[%s2012 + $0x48] sm:$0xff]
        %v2189 = vld [vmem:[%s2012 + $0x50] sm:$0xff]
        %v2190 = vld [vmem:[%s2012 + $0x58] sm:$0xff]
        %v2191 = vld [vmem:[%s2012 + $0x60] sm:$0xff]
        %v2192 = vld [vmem:[%s2012 + $0x68] sm:$0xff]
        %v2193 = vld [vmem:[%s2012 + $0x70] sm:$0xff]
        %v2194 = vld [vmem:[%s2012 + $0x78] sm:$0xff]
        %v2196 = vsel %vm899, %v2184, 0
        %2198 = vmatprep.subr.mxu0 0.0
        %2199 = vmatpush1.msra.mxu0 %v2187
        %2200 = vmatprep.subr.mxu0 0.0
        %2201 = vmatpush1.msra.mxu0 %v2188
        %2202 = vmatprep.subr.mxu0 0.0
        %2203 = vmatpush1.msra.mxu0 %v2189
        %2204 = vmatprep.subr.mxu0 0.0
        %2205 = vmatpush1.msra.mxu0 %v2190
        %2206 = vmatprep.subr.mxu0 0.0
        %2207 = vmatpush1.msra.mxu0 %v2191
        %2208 = vmatprep.subr.mxu0 0.0
        %2209 = vmatpush1.msra.mxu0 %v2192
        %2210 = vmatprep.subr.mxu0 0.0
        %2211 = vmatpush1.msra.mxu0 %v2193
        %2212 = vmatprep.subr.mxu0 0.0
        %2213 = vmatpush1.msra.mxu0 %v2194
        %2214 = vmatprep.subr.mxu0 0.0
        %2215 = vmatpush1.msra.mxu0 0.0
        %2216 = vmatprep.subr.mxu0 0.0
        %2217 = vmatpush1.msra.mxu0 0.0
        %2218 = vmatprep.subr.mxu0 0.0
        %2219 = vmatpush1.msra.mxu0 0.0
        %2220 = vmatprep.subr.mxu0 0.0
        %2221 = vmatpush1.msra.mxu0 0.0
        %2222 = vmatprep.subr.mxu0 0.0
        %2223 = vmatpush1.msra.mxu0 0.0
        %2224 = vmatprep.subr.mxu0 0.0
        %2225 = vmatpush1.msra.mxu0 0.0
        %2226 = vmatprep.subr.mxu0 0.0
        %2227 = vmatpush1.msra.mxu0 0.0
        %2228 = vmatprep.subr.mxu0 0.0
        %2229 = vmatpush1.msra.mxu0 0.0
        %2230 = vmatprep.subr.mxu0 0.0
        %2231 = vmatpush1.msra.mxu0 0.0
        %2232 = vmatprep.subr.mxu0 0.0
        %2233 = vmatpush1.msra.mxu0 0.0
        %2234 = vmatprep.subr.mxu0 0.0
        %2235 = vmatpush1.msra.mxu0 0.0
        %2236 = vmatprep.subr.mxu0 0.0
        %2237 = vmatpush1.msra.mxu0 0.0
        %2238 = vmatprep.subr.mxu0 0.0
        %2239 = vmatpush1.msra.mxu0 0.0
        %2240 = vmatprep.subr.mxu0 0.0
        %2241 = vmatpush1.msra.mxu0 0.0
        %2242 = vmatprep.subr.mxu0 0.0
        %2243 = vmatpush1.msra.mxu0 0.0
        %2244 = vmatprep.subr.mxu0 0.0
        %2245 = vmatpush1.msra.mxu0 0.0
        %2246 = vmatprep.subr.mxu0 0.0
        %2247 = vmatpush1.msra.mxu0 0.0
        %2248 = vmatprep.subr.mxu0 0.0
        %2249 = vmatpush1.msra.mxu0 0.0
        %2250 = vmatprep.subr.mxu0 0.0
        %2251 = vmatpush1.msra.mxu0 0.0
        %2252 = vmatprep.subr.mxu0 0.0
        %2253 = vmatpush1.msra.mxu0 0.0
        %2254 = vmatprep.subr.mxu0 0.0
        %2255 = vmatpush1.msra.mxu0 0.0
        %2256 = vmatprep.subr.mxu0 0.0
        %2257 = vmatpush1.msra.mxu0 0.0
        %2258 = vmatprep.subr.mxu0 0.0
        %2259 = vmatpush1.msra.mxu0 0.0
        %2260 = vmatprep.subr.mxu0 0.0
        %2261 = vmatpush1.msra.mxu0 0.0
        %2262 = vmatprep.mubr.f32.mxu0 0.0
        %2263 = vmatmul.mubr.f32.gmra.mrb[0].mxu0 %v2196
        %v2264 = vpop.f32.mrb[0].mxu0
        %v2265 = vadd.f32 0.0, %v2264
        %v2266 = vpop.f32.mrb[0].mxu0
        %2267 = vdwg.mxu0
        %v2269 = vsel %vm899, %v2009, 0
        %2271 = vmatprep.subr.mxu0 0.0
        %2272 = vmatpush1.msra.mxu0 %v2013
        %2273 = vmatprep.subr.mxu0 0.0
        %2274 = vmatpush1.msra.mxu0 %v2014
        %2275 = vmatprep.subr.mxu0 0.0
        %2276 = vmatpush1.msra.mxu0 %v2015
        %2277 = vmatprep.subr.mxu0 0.0
        %2278 = vmatpush1.msra.mxu0 %v2016
        %2279 = vmatprep.subr.mxu0 0.0
        %2280 = vmatpush1.msra.mxu0 %v2017
        %2281 = vmatprep.subr.mxu0 0.0
        %2282 = vmatpush1.msra.mxu0 %v2018
        %2283 = vmatprep.subr.mxu0 0.0
        %2284 = vmatpush1.msra.mxu0 %v2019
        %2285 = vmatprep.subr.mxu0 0.0
        %2286 = vmatpush1.msra.mxu0 %v2020
        %2287 = vmatprep.subr.mxu0 0.0
        %2288 = vmatpush1.msra.mxu0 0.0
        %2289 = vmatprep.subr.mxu0 0.0
        %2290 = vmatpush1.msra.mxu0 0.0
        %2291 = vmatprep.subr.mxu0 0.0
        %2292 = vmatpush1.msra.mxu0 0.0
        %2293 = vmatprep.subr.mxu0 0.0
        %2294 = vmatpush1.msra.mxu0 0.0
        %2295 = vmatprep.subr.mxu0 0.0
        %2296 = vmatpush1.msra.mxu0 0.0
        %2297 = vmatprep.subr.mxu0 0.0
        %2298 = vmatpush1.msra.mxu0 0.0
        %2299 = vmatprep.subr.mxu0 0.0
        %2300 = vmatpush1.msra.mxu0 0.0
        %2301 = vmatprep.subr.mxu0 0.0
        %2302 = vmatpush1.msra.mxu0 0.0
        %2303 = vmatprep.subr.mxu0 0.0
        %2304 = vmatpush1.msra.mxu0 0.0
        %2305 = vmatprep.subr.mxu0 0.0
        %2306 = vmatpush1.msra.mxu0 0.0
        %2307 = vmatprep.subr.mxu0 0.0
        %2308 = vmatpush1.msra.mxu0 0.0
        %2309 = vmatprep.subr.mxu0 0.0
        %2310 = vmatpush1.msra.mxu0 0.0
        %2311 = vmatprep.subr.mxu0 0.0
        %2312 = vmatpush1.msra.mxu0 0.0
        %2313 = vmatprep.subr.mxu0 0.0
        %2314 = vmatpush1.msra.mxu0 0.0
        %2315 = vmatprep.subr.mxu0 0.0
        %2316 = vmatpush1.msra.mxu0 0.0
        %2317 = vmatprep.subr.mxu0 0.0
        %2318 = vmatpush1.msra.mxu0 0.0
        %2319 = vmatprep.subr.mxu0 0.0
        %2320 = vmatpush1.msra.mxu0 0.0
        %2321 = vmatprep.subr.mxu0 0.0
        %2322 = vmatpush1.msra.mxu0 0.0
        %2323 = vmatprep.subr.mxu0 0.0
        %2324 = vmatpush1.msra.mxu0 0.0
        %2325 = vmatprep.subr.mxu0 0.0
        %2326 = vmatpush1.msra.mxu0 0.0
        %2327 = vmatprep.subr.mxu0 0.0
        %2328 = vmatpush1.msra.mxu0 0.0
        %2329 = vmatprep.subr.mxu0 0.0
        %2330 = vmatpush1.msra.mxu0 0.0
        %2331 = vmatprep.subr.mxu0 0.0
        %2332 = vmatpush1.msra.mxu0 0.0
        %2333 = vmatprep.subr.mxu0 0.0
        %2334 = vmatpush1.msra.mxu0 0.0
        %2335 = vmatprep.mubr.f32.mxu0 0.0
        %2336 = vmatmul.mubr.f32.gmra.mrb[0].mxu0 %v2269
        %v2337 = vpop.f32.mrb[0].mxu0
        %v2338 = vadd.f32 %v2265, %v2337
        %v2339 = vpop.f32.mrb[0].mxu0
        %2340 = vdwg.mxu0
        %s2341 = scalar_lea.vmem [#allocation7], 1
        %v2342 = vld [vmem:[%s2341] sm:$0x1]
        %v2344 = vlaneseq
        %v2345 = vshrl.u32 %v2344, 7
        %v2346 = vsub.s32 0, %v2345
        %v2347 = vrot.slane %v2342, %v2346
        %v2349 = vadd.f32 %v2338, %v2347
        %v2350 = vadd.f32 %v1643, %v2349
        %s2351 = scalar_lea.vmem [#allocation9], 1
        %v2352 = vld [vmem:[%s2351] sm:$0x1]
        %s2353 = scalar_lea.vmem [#allocation10], 1
        %v2354 = vld [vmem:[%s2353] sm:$0x1]
        %2355 = vadd.xlane.f32.xlu0 %v2350
        %v2356 = vpop.xlane.xlu0 %2355
        %v2357 = vmul.f32 %v2356, 0.02
        %v2358 = vmul.f32 %v2350, %v2350
        %2359 = vadd.xlane.f32.xlu0 %v2358
        %v2360 = vpop.xlane.xlu0 %2359
        %v2361 = vmul.f32 %v2360, 0.02
        %v2362 = vmul.f32 %v2357, %v2357
        %v2363 = vsub.f32 %v2361, %v2362
        %v2364 = vsub.f32 %v2350, %v2357
        %v2365 = vadd.f32 %v2363, 1e-05
        %v2366 = vrsqrt.pop %v2365
        %v2367 = vmul.f32 %v2364, %v2366
        %v2369 = vlaneseq
        %v2370 = vshrl.u32 %v2369, 7
        %v2371 = vsub.s32 0, %v2370
        %v2372 = vrot.slane %v2352, %v2371
        %v2374 = vmul.f32 %v2367, %v2372
        %v2376 = vlaneseq
        %v2377 = vshrl.u32 %v2376, 7
        %v2378 = vsub.s32 0, %v2377
        %v2379 = vrot.slane %v2354, %v2378
        %v2381 = vadd.f32 %v2374, %v2379
        %s2382 = scalar_lea.vmem [#allocation12], 128
        %v2383 = vld [vmem:[%s2382] sm:$0xff]
        %v2384 = vld [vmem:[%s2382 + $0x8] sm:$0xff]
        %v2385 = vld [vmem:[%s2382 + $0x10] sm:$0xff]
        %v2386 = vld [vmem:[%s2382 + $0x18] sm:$0xff]
        %v2387 = vld [vmem:[%s2382 + $0x20] sm:$0xff]
        %v2388 = vld [vmem:[%s2382 + $0x28] sm:$0xff]
        %v2389 = vld [vmem:[%s2382 + $0x30] sm:$0xff]
        %v2390 = vld [vmem:[%s2382 + $0x38] sm:$0xff]
        %v2391 = vld [vmem:[%s2382 + $0x40] sm:$0xff]
        %v2392 = vld [vmem:[%s2382 + $0x48] sm:$0xff]
        %v2393 = vld [vmem:[%s2382 + $0x50] sm:$0xff]
        %v2394 = vld [vmem:[%s2382 + $0x58] sm:$0xff]
        %v2395 = vld [vmem:[%s2382 + $0x60] sm:$0xff]
        %v2396 = vld [vmem:[%s2382 + $0x68] sm:$0xff]
        %v2397 = vld [vmem:[%s2382 + $0x70] sm:$0xff]
        %v2398 = vld [vmem:[%s2382 + $0x78] sm:$0xff]
        %s2399 = scalar_lea.vmem [#allocation13], 1
        %v2400 = vld [vmem:[%s2399] sm:$0x1]
        %v2402 = vlaneseq
        %v2403 = vshrl.u32 %v2402, 7
        %v2404 = vsub.s32 0, %v2403
        %v2405 = vrot.slane %v2400, %v2404
        %2407 = vmatprep.subr.mxu0 0.0
        %2408 = vmatpush1.msra.mxu0 %v2383
        %2409 = vmatprep.subr.mxu0 0.0
        %2410 = vmatpush1.msra.mxu0 %v2384
        %2411 = vmatprep.subr.mxu0 0.0
        %2412 = vmatpush1.msra.mxu0 %v2385
        %2413 = vmatprep.subr.mxu0 0.0
        %2414 = vmatpush1.msra.mxu0 %v2386
        %2415 = vmatprep.subr.mxu0 0.0
        %2416 = vmatpush1.msra.mxu0 %v2387
        %2417 = vmatprep.subr.mxu0 0.0
        %2418 = vmatpush1.msra.mxu0 %v2388
        %2419 = vmatprep.subr.mxu0 0.0
        %2420 = vmatpush1.msra.mxu0 %v2389
        %2421 = vmatprep.subr.mxu0 0.0
        %2422 = vmatpush1.msra.mxu0 %v2390
        %2423 = vmatprep.subr.mxu0 0.0
        %2424 = vmatpush1.msra.mxu0 %v2391
        %2425 = vmatprep.subr.mxu0 0.0
        %2426 = vmatpush1.msra.mxu0 %v2392
        %2427 = vmatprep.subr.mxu0 0.0
        %2428 = vmatpush1.msra.mxu0 %v2393
        %2429 = vmatprep.subr.mxu0 0.0
        %2430 = vmatpush1.msra.mxu0 %v2394
        %2431 = vmatprep.subr.mxu0 0.0
        %2432 = vmatpush1.msra.mxu0 %v2395
        %2433 = vmatprep.subr.mxu0 0.0
        %2434 = vmatpush1.msra.mxu0 %v2396
        %2435 = vmatprep.subr.mxu0 0.0
        %2436 = vmatpush1.msra.mxu0 %v2397
        %2437 = vmatprep.subr.mxu0 0.0
        %2438 = vmatpush1.msra.mxu0 %v2398
        %2439 = vmatprep.subr.mxu0 0.0
        %2440 = vmatpush1.msra.mxu0 0.0
        %2441 = vmatprep.subr.mxu0 0.0
        %2442 = vmatpush1.msra.mxu0 0.0
        %2443 = vmatprep.subr.mxu0 0.0
        %2444 = vmatpush1.msra.mxu0 0.0
        %2445 = vmatprep.subr.mxu0 0.0
        %2446 = vmatpush1.msra.mxu0 0.0
        %2447 = vmatprep.subr.mxu0 0.0
        %2448 = vmatpush1.msra.mxu0 0.0
        %2449 = vmatprep.subr.mxu0 0.0
        %2450 = vmatpush1.msra.mxu0 0.0
        %2451 = vmatprep.subr.mxu0 0.0
        %2452 = vmatpush1.msra.mxu0 0.0
        %2453 = vmatprep.subr.mxu0 0.0
        %2454 = vmatpush1.msra.mxu0 0.0
        %2455 = vmatprep.subr.mxu0 0.0
        %2456 = vmatpush1.msra.mxu0 0.0
        %2457 = vmatprep.subr.mxu0 0.0
        %2458 = vmatpush1.msra.mxu0 0.0
        %2459 = vmatprep.subr.mxu0 0.0
        %2460 = vmatpush1.msra.mxu0 0.0
        %2461 = vmatprep.subr.mxu0 0.0
        %2462 = vmatpush1.msra.mxu0 0.0
        %2463 = vmatprep.subr.mxu0 0.0
        %2464 = vmatpush1.msra.mxu0 0.0
        %2465 = vmatprep.subr.mxu0 0.0
        %2466 = vmatpush1.msra.mxu0 0.0
        %2467 = vmatprep.subr.mxu0 0.0
        %2468 = vmatpush1.msra.mxu0 0.0
        %2469 = vmatprep.subr.mxu0 0.0
        %2470 = vmatpush1.msra.mxu0 0.0
        %2471 = vmatprep.mubr.f32.mxu0 0.0
        %2472 = vmatmul.mubr.f32.gmra.mrb[0].mxu0 %v2381
        %v2473 = vpop.f32.mrb[0].mxu0
        %v2474 = vadd.f32 %v2405, %v2473
        %v2475 = vpop.f32.mrb[0].mxu0
        %2476 = vdwg.mxu0
        %v2477 = vmax.f32 %v2474, 0.0
        %s2478 = scalar_lea.vmem [#allocation15], 128
        %v2479 = vld [vmem:[%s2478] sm:$0xff]
        %v2480 = vld [vmem:[%s2478 + $0x8] sm:$0xff]
        %v2481 = vld [vmem:[%s2478 + $0x10] sm:$0xff]
        %v2482 = vld [vmem:[%s2478 + $0x18] sm:$0xff]
        %v2483 = vld [vmem:[%s2478 + $0x20] sm:$0xff]
        %v2484 = vld [vmem:[%s2478 + $0x28] sm:$0xff]
        %v2485 = vld [vmem:[%s2478 + $0x30] sm:$0xff]
        %v2486 = vld [vmem:[%s2478 + $0x38] sm:$0xff]
        %v2487 = vld [vmem:[%s2478 + $0x40] sm:$0xff]
        %v2488 = vld [vmem:[%s2478 + $0x48] sm:$0xff]
        %v2489 = vld [vmem:[%s2478 + $0x50] sm:$0xff]
        %v2490 = vld [vmem:[%s2478 + $0x58] sm:$0xff]
        %v2491 = vld [vmem:[%s2478 + $0x60] sm:$0xff]
        %v2492 = vld [vmem:[%s2478 + $0x68] sm:$0xff]
        %v2493 = vld [vmem:[%s2478 + $0x70] sm:$0xff]
        %v2494 = vld [vmem:[%s2478 + $0x78] sm:$0xff]
        %s2495 = scalar_lea.vmem [#allocation16], 1
        %v2496 = vld [vmem:[%s2495] sm:$0x1]
        %v2498 = vlaneseq
        %v2499 = vshrl.u32 %v2498, 7
        %v2500 = vsub.s32 0, %v2499
        %v2501 = vrot.slane %v2496, %v2500
        %2503 = vmatprep.subr.mxu0 0.0
        %2504 = vmatpush1.msra.mxu0 %v2479
        %2505 = vmatprep.subr.mxu0 0.0
        %2506 = vmatpush1.msra.mxu0 %v2480
        %2507 = vmatprep.subr.mxu0 0.0
        %2508 = vmatpush1.msra.mxu0 %v2481
        %2509 = vmatprep.subr.mxu0 0.0
        %2510 = vmatpush1.msra.mxu0 %v2482
        %2511 = vmatprep.subr.mxu0 0.0
        %2512 = vmatpush1.msra.mxu0 %v2483
        %2513 = vmatprep.subr.mxu0 0.0
        %2514 = vmatpush1.msra.mxu0 %v2484
        %2515 = vmatprep.subr.mxu0 0.0
        %2516 = vmatpush1.msra.mxu0 %v2485
        %2517 = vmatprep.subr.mxu0 0.0
        %2518 = vmatpush1.msra.mxu0 %v2486
        %2519 = vmatprep.subr.mxu0 0.0
        %2520 = vmatpush1.msra.mxu0 %v2487
        %2521 = vmatprep.subr.mxu0 0.0
        %2522 = vmatpush1.msra.mxu0 %v2488
        %2523 = vmatprep.subr.mxu0 0.0
        %2524 = vmatpush1.msra.mxu0 %v2489
        %2525 = vmatprep.subr.mxu0 0.0
        %2526 = vmatpush1.msra.mxu0 %v2490
        %2527 = vmatprep.subr.mxu0 0.0
        %2528 = vmatpush1.msra.mxu0 %v2491
        %2529 = vmatprep.subr.mxu0 0.0
        %2530 = vmatpush1.msra.mxu0 %v2492
        %2531 = vmatprep.subr.mxu0 0.0
        %2532 = vmatpush1.msra.mxu0 %v2493
        %2533 = vmatprep.subr.mxu0 0.0
        %2534 = vmatpush1.msra.mxu0 %v2494
        %2535 = vmatprep.subr.mxu0 0.0
        %2536 = vmatpush1.msra.mxu0 0.0
        %2537 = vmatprep.subr.mxu0 0.0
        %2538 = vmatpush1.msra.mxu0 0.0
        %2539 = vmatprep.subr.mxu0 0.0
        %2540 = vmatpush1.msra.mxu0 0.0
        %2541 = vmatprep.subr.mxu0 0.0
        %2542 = vmatpush1.msra.mxu0 0.0
        %2543 = vmatprep.subr.mxu0 0.0
        %2544 = vmatpush1.msra.mxu0 0.0
        %2545 = vmatprep.subr.mxu0 0.0
        %2546 = vmatpush1.msra.mxu0 0.0
        %2547 = vmatprep.subr.mxu0 0.0
        %2548 = vmatpush1.msra.mxu0 0.0
        %2549 = vmatprep.subr.mxu0 0.0
        %2550 = vmatpush1.msra.mxu0 0.0
        %2551 = vmatprep.subr.mxu0 0.0
        %2552 = vmatpush1.msra.mxu0 0.0
        %2553 = vmatprep.subr.mxu0 0.0
        %2554 = vmatpush1.msra.mxu0 0.0
        %2555 = vmatprep.subr.mxu0 0.0
        %2556 = vmatpush1.msra.mxu0 0.0
        %2557 = vmatprep.subr.mxu0 0.0
        %2558 = vmatpush1.msra.mxu0 0.0
        %2559 = vmatprep.subr.mxu0 0.0
        %2560 = vmatpush1.msra.mxu0 0.0
        %2561 = vmatprep.subr.mxu0 0.0
        %2562 = vmatpush1.msra.mxu0 0.0
        %2563 = vmatprep.subr.mxu0 0.0
        %2564 = vmatpush1.msra.mxu0 0.0
        %2565 = vmatprep.subr.mxu0 0.0
        %2566 = vmatpush1.msra.mxu0 0.0
        %2567 = vmatprep.mubr.f32.mxu0 0.0
        %2568 = vmatmul.mubr.f32.gmra.mrb[0].mxu0 %v2477
        %v2569 = vpop.f32.mrb[0].mxu0
        %v2570 = vadd.f32 %v2501, %v2569
        %v2571 = vpop.f32.mrb[0].mxu0
        %2572 = vdwg.mxu0
        %v2573 = vadd.f32 %v2381, %v2570
        %s2574 = scalar_lea.vmem [#allocation18], 1
        %v2575 = vld [vmem:[%s2574] sm:$0x1]
        %s2576 = scalar_lea.vmem [#allocation19], 1
        %v2577 = vld [vmem:[%s2576] sm:$0x1]
        %2578 = vadd.xlane.f32.xlu0 %v2573
        %v2579 = vpop.xlane.xlu0 %2578
        %v2580 = vmul.f32 %v2579, 0.02
        %v2581 = vmul.f32 %v2573, %v2573
        %2582 = vadd.xlane.f32.xlu0 %v2581
        %v2583 = vpop.xlane.xlu0 %2582
        %v2584 = vmul.f32 %v2583, 0.02
        %v2585 = vmul.f32 %v2580, %v2580
        %v2586 = vsub.f32 %v2584, %v2585
        %v2587 = vsub.f32 %v2573, %v2580
        %v2588 = vadd.f32 %v2586, 1e-05
        %v2589 = vrsqrt.pop %v2588
        %v2590 = vmul.f32 %v2587, %v2589
        %v2592 = vlaneseq
        %v2593 = vshrl.u32 %v2592, 7
        %v2594 = vsub.s32 0, %v2593
        %v2595 = vrot.slane %v2575, %v2594
        %v2597 = vmul.f32 %v2590, %v2595
        %v2599 = vlaneseq
        %v2600 = vshrl.u32 %v2599, 7
        %v2601 = vsub.s32 0, %v2600
        %v2602 = vrot.slane %v2577, %v2601
        %v2604 = vadd.f32 %v2597, %v2602
        %v2605 = vld [vmem:[#allocation21] sm:$0xff]
        %v2606 = vld [vmem:[#allocation21 + $0x8] sm:$0xff]
        %v2607 = vld [vmem:[#allocation21 + $0x10] sm:$0xff]
        %v2608 = vld [vmem:[#allocation21 + $0x18] sm:$0xff]
        %v2609 = vld [vmem:[#allocation21 + $0x20] sm:$0xff]
        %v2610 = vld [vmem:[#allocation21 + $0x28] sm:$0xff]
        %v2611 = vld [vmem:[#allocation21 + $0x30] sm:$0xff]
        %v2612 = vld [vmem:[#allocation21 + $0x38] sm:$0xff]
        %v2613 = vld [vmem:[#allocation21 + $0x40] sm:$0xff]
        %v2614 = vld [vmem:[#allocation21 + $0x48] sm:$0xff]
        %v2615 = vld [vmem:[#allocation21 + $0x50] sm:$0xff]
        %v2616 = vld [vmem:[#allocation21 + $0x58] sm:$0xff]
        %v2617 = vld [vmem:[#allocation21 + $0x60] sm:$0xff]
        %v2618 = vld [vmem:[#allocation21 + $0x68] sm:$0xff]
        %v2619 = vld [vmem:[#allocation21 + $0x70] sm:$0xff]
        %v2620 = vld [vmem:[#allocation21 + $0x78] sm:$0xff]
        %v2621 = vld [vmem:[#allocation22] sm:$0x1]
        %v2623 = vlaneseq
        %v2624 = vshrl.u32 %v2623, 7
        %v2625 = vsub.s32 0, %v2624
        %v2626 = vrot.slane %v2621, %v2625
        %2628 = vmatprep.subr.mxu0 0.0
        %2629 = vmatpush1.msra.mxu0 %v2605
        %2630 = vmatprep.subr.mxu0 0.0
        %2631 = vmatpush1.msra.mxu0 %v2606
        %2632 = vmatprep.subr.mxu0 0.0
        %2633 = vmatpush1.msra.mxu0 %v2607
        %2634 = vmatprep.subr.mxu0 0.0
        %2635 = vmatpush1.msra.mxu0 %v2608
        %2636 = vmatprep.subr.mxu0 0.0
        %2637 = vmatpush1.msra.mxu0 %v2609
        %2638 = vmatprep.subr.mxu0 0.0
        %2639 = vmatpush1.msra.mxu0 %v2610
        %2640 = vmatprep.subr.mxu0 0.0
        %2641 = vmatpush1.msra.mxu0 %v2611
        %2642 = vmatprep.subr.mxu0 0.0
        %2643 = vmatpush1.msra.mxu0 %v2612
        %2644 = vmatprep.subr.mxu0 0.0
        %2645 = vmatpush1.msra.mxu0 %v2613
        %2646 = vmatprep.subr.mxu0 0.0
        %2647 = vmatpush1.msra.mxu0 %v2614
        %2648 = vmatprep.subr.mxu0 0.0
        %2649 = vmatpush1.msra.mxu0 %v2615
        %2650 = vmatprep.subr.mxu0 0.0
        %2651 = vmatpush1.msra.mxu0 %v2616
        %2652 = vmatprep.subr.mxu0 0.0
        %2653 = vmatpush1.msra.mxu0 %v2617
        %2654 = vmatprep.subr.mxu0 0.0
        %2655 = vmatpush1.msra.mxu0 %v2618
        %2656 = vmatprep.subr.mxu0 0.0
        %2657 = vmatpush1.msra.mxu0 %v2619
        %2658 = vmatprep.subr.mxu0 0.0
        %2659 = vmatpush1.msra.mxu0 %v2620
        %2660 = vmatprep.subr.mxu0 0.0
        %2661 = vmatpush1.msra.mxu0 0.0
        %2662 = vmatprep.subr.mxu0 0.0
        %2663 = vmatpush1.msra.mxu0 0.0
        %2664 = vmatprep.subr.mxu0 0.0
        %2665 = vmatpush1.msra.mxu0 0.0
        %2666 = vmatprep.subr.mxu0 0.0
        %2667 = vmatpush1.msra.mxu0 0.0
        %2668 = vmatprep.subr.mxu0 0.0
        %2669 = vmatpush1.msra.mxu0 0.0
        %2670 = vmatprep.subr.mxu0 0.0
        %2671 = vmatpush1.msra.mxu0 0.0
        %2672 = vmatprep.subr.mxu0 0.0
        %2673 = vmatpush1.msra.mxu0 0.0
        %2674 = vmatprep.subr.mxu0 0.0
        %2675 = vmatpush1.msra.mxu0 0.0
        %2676 = vmatprep.subr.mxu0 0.0
        %2677 = vmatpush1.msra.mxu0 0.0
        %2678 = vmatprep.subr.mxu0 0.0
        %2679 = vmatpush1.msra.mxu0 0.0
        %2680 = vmatprep.subr.mxu0 0.0
        %2681 = vmatpush1.msra.mxu0 0.0
        %2682 = vmatprep.subr.mxu0 0.0
        %2683 = vmatpush1.msra.mxu0 0.0
        %2684 = vmatprep.subr.mxu0 0.0
        %2685 = vmatpush1.msra.mxu0 0.0
        %2686 = vmatprep.subr.mxu0 0.0
        %2687 = vmatpush1.msra.mxu0 0.0
        %2688 = vmatprep.subr.mxu0 0.0
        %2689 = vmatpush1.msra.mxu0 0.0
        %2690 = vmatprep.subr.mxu0 0.0
        %2691 = vmatpush1.msra.mxu0 0.0
        %2692 = vmatprep.mubr.f32.mxu0 0.0
        %2693 = vmatmul.mubr.f32.gmra.mrb[0].mxu0 %v2604
        %v2694 = vpop.f32.mrb[0].mxu0
        %v2695 = vadd.f32 %v2626, %v2694
        %v2696 = vpop.f32.mrb[0].mxu0
        %2697 = vdwg.mxu0
        %2698 = vst [vmem:[%s691] sm:$0xff] %v2695
        %p2699 = scmp.lt.s32.totalorder %s34, 1
        %s2700 = scalar_select %p2699, %s34, 1
        %s2701 = smul.addr %s2700, 8
        %s2702 = scalar_lea.vmem %s15, %s2701
        // Predicated region
        $region137: #{transformer_forward.1} parent=79 // pred_check
          %p2703 = pneg %p372
        $region138: #{transformer_forward.1} parent=79 // pred_check_branch
          %2705 = sbr.rel (%p2703) target = $region140
        $region139: #{transformer_forward.1} parent=79 // pred_region
          _
        $region140: #{transformer_forward.1} parent=79 // pred_fallthru
          _
      $region80: #{transformer_forward.1} parent=5 // pred_fallthru
        _
      %p2706 = scmp.le.s32.totalorder 2, %s29
      // Predicated region
      $region141: #{transformer_forward.1} parent=5 // pred_check
        %p2707 = pneg %p2706
      $region142: #{transformer_forward.1} parent=5 // pred_check_branch
        %2709 = sbr.rel (%p2707) target = $region144
      $region143: #{transformer_forward.1} parent=5 // pred_region
        %s2710 = ssub.s32 %s29, 2
        // Predicated region
        $region145: #{transformer_forward.1} parent=143 // pred_check
          %p2711 = pneg %p378
        $region146: #{transformer_forward.1} parent=143 // pred_check_branch
          %2713 = sbr.rel (%p2711) target = $region148
        $region147: #{transformer_forward.1} parent=143 // pred_region
          %p2714 = scmp.lt.s32.totalorder %s35, 1
          %s2715 = scalar_select %p2714, %s35, 1
          %s2716 = smul.addr %s2715, 8
          %s2717 = scalar_lea.vmem %s15, %s2716
        $region148: #{transformer_forward.1} parent=143 // pred_fallthru
          _
      $region144: #{transformer_forward.1} parent=5 // pred_fallthru
        _
    $region6: #{transformer_forward.1} parent=1 // loop_footer
      %s33 = sadd.s32 1, %s29
    $region7: #{transformer_forward.1} parent=1 // loop_footer_branch
      %28 = sbr.rel target = $region3
    $region8: #{transformer_forward.1} parent=1 // loop_exit
      _
    %2718 = vsyncpa [#allocation3], 1
    %s2719 = scalar_lea.sflag [#allocation3], 1
    %2720 = vsyncpa %s2719, 1
    %2721 = vsyncpa [#allocation5], 1
    %2722 = vsyncpa [#allocation8], 1
    %2723 = vsyncpa [#allocation11], 1
    %2724 = vsyncpa [#allocation14], 1
    %2725 = vsyncpa [#allocation17], 1
    %2726 = vsyncpa [#allocation20], 1
    %2727 = vsyncpa [#allocation23], 1

</llo_original>
